<compile_context>
chip_gen: v7x
topology: tpu7x:2x2x1
jax: 0.10.0
libtpu: 0.0.40
codegen_flags: <defaults>
</compile_context>

<pallas_src>
import functools

import jax
import jax.numpy as jnp
from jax import lax
from jax.experimental import pallas as pl
from jax.experimental.pallas import tpu as pltpu


_LEAKY_SLOPE = 0.2
_BN_EPS = 1e-5
_BLOCK_M = 512      # M tile for the conv matmuls; clamped to M for small inputs.


def _vmem_limit_bytes():
    """Generation-aware scoped-VMEM limit (~3/4 of physical, capped at 96 MiB):
    96 MiB on v5e/v6e (128 MiB physical), 48 MiB on v7x (64 MiB physical)."""
    phys = 128 * 1024 * 1024
    try:
        phys = int(getattr(pltpu.get_tpu_info(), "vmem_capacity_bytes", phys))
    except Exception:
        pass
    return max(32 * 1024 * 1024, min((phys * 3) // 4, 96 * 1024 * 1024))


_VMEM_LIMIT = _vmem_limit_bytes()


def _params():
    return pltpu.CompilerParams(
        dimension_semantics=("parallel",),       # megacore sharding on v7x
        vmem_limit_bytes=_VMEM_LIMIT)


def _leaky(x):
    return jnp.where(x >= 0, x, _LEAKY_SLOPE * x)


# ----------------------------- Pallas kernels ------------------------------

def _conv_bias_act_kernel(a_ref, w_ref, b_ref, o_ref, *, act):
    """One (TM, K) x (K, Cout) tile of the im2col matmul + bias (+ LeakyReLU)."""
    acc = jnp.dot(a_ref[...], w_ref[...], preferred_element_type=jnp.float32)
    acc = acc + b_ref[...]
    if act == "leaky":
        acc = _leaky(acc)
    o_ref[...] = acc.astype(o_ref.dtype)           # bf16 writeback


def _conv_bias_stats_kernel(a_ref, w_ref, b_ref, y_ref, s_ref, *, tm, m_total):
    """BN pass 1: conv matmul + bias for one M tile; emit the tile's per-channel
    partial (sum, sum-of-squares) so BN never needs the whole output resident."""
    y = jnp.dot(a_ref[...], w_ref[...], preferred_element_type=jnp.float32)
    y = y + b_ref[...]
    y_ref[...] = y.astype(y_ref.dtype)             # bf16 writeback
    # Mask rows that exist only because of M padding so stats stay exact.
    row = lax.broadcasted_iota(jnp.int32, (tm, 1), 0) + pl.program_id(0) * tm
    yv = jnp.where(row < m_total, y, 0.0)
    s_ref[:, 0:1, :] = jnp.sum(yv, axis=0, keepdims=True)[None]
    s_ref[:, 1:2, :] = jnp.sum(yv * yv, axis=0, keepdims=True)[None]


def _bn_leaky_kernel(y_ref, s_ref, g_ref, be_ref, o_ref, *, inv_m):
    """BN pass 2: combine the tiny per-tile partials, normalize + affine + leaky."""
    stats = jnp.sum(s_ref[...], axis=0)                            # (2, cout)
    mean = stats[0:1, :] * inv_m
    # Guard E[x^2]-E[x]^2 cancellation (can go slightly negative in f32/bf16).
    var = jnp.maximum(stats[1:2, :] * inv_m - mean * mean, 0.0)
    y = y_ref[...].astype(jnp.float32)
    xhat = (y - mean) * lax.rsqrt(var + _BN_EPS)
    o_ref[...] = _leaky(xhat * g_ref[...] + be_ref[...]).astype(o_ref.dtype)


def _conv_sigmoid_kernel(a_ref, w_ref, b_ref, o_ref):
    """Final projection on the MXU (Cout zero-padded to a lane-dense 128) with an
    exact sigmoid (EUP exp + exact reciprocal). Column 0 holds the real logit."""
    acc = jnp.dot(a_ref[...], w_ref[...], preferred_element_type=jnp.float32)
    acc = acc + b_ref[...]
    o_ref[...] = 1.0 / (1.0 + jnp.exp(-acc))


# ------------------------------ JAX wrappers --------------------------------

def _im2col(x_nhwc, k, stride, pad, dtype):
    """Patch matrix (N*Ho*Wo, k*k*C), column order (kh, kw, cin)."""
    N, H, W, C = x_nhwc.shape
    xp = jnp.pad(x_nhwc, ((0, 0), (pad, pad), (pad, pad), (0, 0)))
    Ho = (H + 2 * pad - k) // stride + 1
    Wo = (W + 2 * pad - k) // stride + 1
    cols = []
    for i in range(k):
        for j in range(k):
            cols.append(xp[:, i:i + stride * Ho:stride, j:j + stride * Wo:stride, :])
    cols = jnp.stack(cols, axis=3)                        # (N, Ho, Wo, k*k, C)
    return cols.reshape(N * Ho * Wo, k * k * C).astype(dtype), (N, Ho, Wo)


def _weight_matrix(w, dtype):
    """(Cout, Cin, kh, kw) -> (kh*kw*Cin, Cout), matching _im2col column order."""
    cout, cin, k, _ = w.shape
    return jnp.transpose(w, (2, 3, 1, 0)).reshape(k * k * cin, cout).astype(dtype)


def _tile_m(M, block_m):
    tm = min(block_m, M)
    grid_m = pl.cdiv(M, tm)
    return tm, grid_m, grid_m * tm


def _pad_rows(a, m_pad):
    return a if a.shape[0] == m_pad else jnp.pad(a, ((0, m_pad - a.shape[0]), (0, 0)))


def conv2d_bias_act_pallas(x_nhwc, w, b, stride, pad, act="none", block_m=_BLOCK_M):
    """conv1: tiled im2col matmul, bf16 MXU operands, f32 accumulation, bf16 out."""
    cout, cin, k, _ = w.shape
    K = k * k * cin
    a, (N, Ho, Wo) = _im2col(x_nhwc, k, stride, pad, jnp.bfloat16)
    wm = _weight_matrix(w, jnp.bfloat16)
    bvec = b.reshape(1, cout).astype(jnp.float32)

    M = a.shape[0]
    tm, grid_m, m_pad = _tile_m(M, block_m)
    a = _pad_rows(a, m_pad)

    out = pl.pallas_call(
        functools.partial(_conv_bias_act_kernel, act=act),
        out_shape=jax.ShapeDtypeStruct((m_pad, cout), jnp.bfloat16),
        grid=(grid_m,),
        in_specs=[
            # TODO(synk): if the A-stream DMA is exposed at production M, bump
            # this spec to pipeline_mode=pl.Buffered(3).
            pl.BlockSpec((tm, K), lambda i: (i, 0)),
            pl.BlockSpec((K, cout), lambda i: (0, 0)),     # weights stay resident
            pl.BlockSpec((1, cout), lambda i: (0, 0)),
        ],
        # NOTE: at production ndf=64 conv1's Cout(=64) output tiles are half-lane
        # masked stores; pad Cout to 128 only if profiling shows the store slot binds.
        out_specs=pl.BlockSpec((tm, cout), lambda i: (i, 0)),
        compiler_params=_params(),
    )(a, wm, bvec)
    return out[:M].reshape(N, Ho, Wo, cout)


def conv2d_bn_leaky_pallas(x_nhwc, w, b, gamma, beta, stride, pad, block_m=_BLOCK_M):
    """conv + bias + BatchNorm(batch stats) + LeakyReLU as a gridded two-pass
    Pallas pipeline (per-tile partial sum/sumsq, then normalize)."""
    cout, cin, k, _ = w.shape
    K = k * k * cin
    a, (N, Ho, Wo) = _im2col(x_nhwc, k, stride, pad, jnp.bfloat16)
    wm = _weight_matrix(w, jnp.bfloat16)
    bvec = b.reshape(1, cout).astype(jnp.float32)
    g = gamma.reshape(1, cout).astype(jnp.float32)
    be = beta.reshape(1, cout).astype(jnp.float32)

    M = a.shape[0]
    tm, grid_m, m_pad = _tile_m(M, block_m)
    a = _pad_rows(a, m_pad)

    # Pass 1: conv + bias, tiled over M; bf16 conv output + f32 partial stats.
    y, part = pl.pallas_call(
        functools.partial(_conv_bias_stats_kernel, tm=tm, m_total=M),
        out_shape=(jax.ShapeDtypeStruct((m_pad, cout), jnp.bfloat16),
                   jax.ShapeDtypeStruct((grid_m, 2, cout), jnp.float32)),
        grid=(grid_m,),
        in_specs=[
            pl.BlockSpec((tm, K), lambda i: (i, 0)),
            pl.BlockSpec((K, cout), lambda i: (0, 0)),
            pl.BlockSpec((1, cout), lambda i: (0, 0)),
        ],
        out_specs=(pl.BlockSpec((tm, cout), lambda i: (i, 0)),
                   pl.BlockSpec((1, 2, cout), lambda i: (i, 0, 0))),
        compiler_params=_params(),
    )(a, wm, bvec)

    # Pass 2: combine partials (tiny, recomputed per tile), normalize + leaky.
    out = pl.pallas_call(
        functools.partial(_bn_leaky_kernel, inv_m=1.0 / M),
        out_shape=jax.ShapeDtypeStruct((m_pad, cout), jnp.bfloat16),
        grid=(grid_m,),
        in_specs=[
            pl.BlockSpec((tm, cout), lambda i: (i, 0)),
            pl.BlockSpec((grid_m, 2, cout), lambda i: (0, 0, 0)),  # stats stay resident
            pl.BlockSpec((1, cout), lambda i: (0, 0)),
            pl.BlockSpec((1, cout), lambda i: (0, 0)),
        ],
        out_specs=pl.BlockSpec((tm, cout), lambda i: (i, 0)),
        compiler_params=_params(),
    )(y, part, g, be)
    return out[:M].reshape(N, Ho, Wo, cout)


def conv2d_cout1_sigmoid_pallas(x_nhwc, w, b, stride, pad, block_m=_BLOCK_M):
    """Final 1-channel conv + sigmoid, on the MXU with lane-dense (128) output."""
    cout, cin, k, _ = w.shape
    assert cout == 1
    K = k * k * cin
    a, (N, Ho, Wo) = _im2col(x_nhwc, k, stride, pad, jnp.bfloat16)
    CP = 128                                               # lane-dense padded Cout
    wm = jnp.pad(_weight_matrix(w, jnp.bfloat16), ((0, 0), (0, CP - 1)))
    bvec = jnp.pad(b.reshape(1, 1).astype(jnp.float32), ((0, 0), (0, CP - 1)))

    M = a.shape[0]
    tm, grid_m, m_pad = _tile_m(M, block_m)
    a = _pad_rows(a, m_pad)

    out = pl.pallas_call(
        _conv_sigmoid_kernel,
        out_shape=jax.ShapeDtypeStruct((m_pad, CP), jnp.float32),
        grid=(grid_m,),
        in_specs=[
            pl.BlockSpec((tm, K), lambda i: (i, 0)),
            pl.BlockSpec((K, CP), lambda i: (0, 0)),
            pl.BlockSpec((1, CP), lambda i: (0, 0)),
        ],
        out_specs=pl.BlockSpec((tm, CP), lambda i: (i, 0)),
        compiler_params=_params(),
    )(a, wm, bvec)
    return out[:M, 0:1].reshape(N, Ho, Wo, 1)


def discriminator_forward(x_nchw, p):
    x = jnp.transpose(x_nchw, (0, 2, 3, 1))                              # NCHW -> NHWC
    h = conv2d_bias_act_pallas(x, p["w1"], p["b1"], 2, 1, act="leaky")   # conv1 + leaky
    h = conv2d_bn_leaky_pallas(h, p["w2"], p["b2"], p["g2"], p["be2"], 2, 1)
    h = conv2d_bn_leaky_pallas(h, p["w3"], p["b3"], p["g3"], p["be3"], 2, 1)
    h = conv2d_bn_leaky_pallas(h, p["w4"], p["b4"], p["g4"], p["be4"], 1, 1)
    h = conv2d_cout1_sigmoid_pallas(h, p["w5"], p["b5"], 1, 1)           # conv5 + sigmoid
    return jnp.transpose(h, (0, 3, 1, 2))                                # NHWC -> NCHW


# --------------------------- pure-JAX reference -----------------------------

def _ref_conv(x, w, b, stride, pad):
    y = lax.conv_general_dilated(
        x, w, (stride, stride), ((pad, pad), (pad, pad)),
        dimension_numbers=("NCHW", "OIHW", "NCHW"))
    return y + b.reshape(1, -1, 1, 1)


def _ref_bn(y, g, be):
    m = jnp.mean(y, axis=(0, 2, 3), keepdims=True)
    v = jnp.mean((y - m) ** 2, axis=(0, 2, 3), keepdims=True)
    return (y - m) * lax.rsqrt(v + _BN_EPS) * g.reshape(1, -1, 1, 1) + be.reshape(1, -1, 1, 1)


def reference_forward(x, p):
    h1 = _ref_conv(x, p["w1"], p["b1"], 2, 1)
    h2 = _ref_bn(_ref_conv(_leaky(h1), p["w2"], p["b2"], 2, 1), p["g2"], p["be2"])
    h3 = _ref_bn(_ref_conv(_leaky(h2), p["w3"], p["b3"], 2, 1), p["g3"], p["be3"])
    h4 = _ref_bn(_ref_conv(_leaky(h3), p["w4"], p["b4"], 1, 1), p["g4"], p["be4"])
    h5 = _ref_conv(_leaky(h4), p["w5"], p["b5"], 1, 1)
    return jax.nn.sigmoid(h5)


# ---------------------------------- main ------------------------------------

def _init_params(key, input_nc, output_nc, ndf):
    cins = [input_nc + output_nc, ndf, ndf * 2, ndf * 4, ndf * 8]
    couts = [ndf, ndf * 2, ndf * 4, ndf * 8, 1]
    p = {}
    for idx, (ci, co) in enumerate(zip(cins, couts), start=1):
        key, kw, kb = jax.random.split(key, 3)
        p[f"w{idx}"] = 0.05 * jax.random.normal(kw, (co, ci, 4, 4), jnp.float32)
        p[f"b{idx}"] = 0.05 * jax.random.normal(kb, (co,), jnp.float32)
    for idx, c in zip((2, 3, 4), (ndf * 2, ndf * 4, ndf * 8)):
        key, kg, kb = jax.random.split(key, 3)
        p[f"g{idx}"] = 1.0 + 0.1 * jax.random.normal(kg, (c,), jnp.float32)
        p[f"be{idx}"] = 0.1 * jax.random.normal(kb, (c,), jnp.float32)
    return p


if __name__ == "__main__":
    input_nc, output_nc, ndf = 2, 2, 8
    N, H, W = 2, 32, 32                      # 32 -> 16 -> 8 -> 4 -> 3 -> 2

    key = jax.random.PRNGKey(0)
    key, kx = jax.random.split(key)
    x = jax.random.normal(kx, (N, input_nc + output_nc, H, W), jnp.float32)  # NCHW
    params = _init_params(key, input_nc, output_nc, ndf)

    out = jax.jit(discriminator_forward)(x, params)
    out = jax.block_until_ready(out)

    ref = jax.block_until_ready(reference_forward(x, params))
    assert out.shape == ref.shape == (N, 1, 2, 2), out.shape
    assert bool(jnp.all(jnp.isfinite(out)))
    # bf16 MXU operands AND bf16 inter-layer activations (f32 accumulation / BN /
    # activations) through five layers: a few-percent discrepancy on the sigmoid
    # output is expected; 5e-2 is well above that and well below signal.
    assert bool(jnp.allclose(out, ref, atol=5e-2, rtol=5e-2))

    print("KERNEL_OK")
</pallas_src>

<mosaic_0001>
module attributes {stable_mosaic.version = 11 : i64} {
  func.func @_conv_bias_act_kernel(%arg0: i32, %arg1: memref<512x64xbf16, #tpu.memory_space<vmem>>, %arg2: memref<64x8xbf16, #tpu.memory_space<vmem>>, %arg3: memref<1x8xf32, #tpu.memory_space<vmem>>, %arg4: memref<512x8xbf16, #tpu.memory_space<vmem>>) attributes {dimension_semantics = [#tpu.dimension_semantics<parallel>], iteration_bounds = array<i64: 1>, scalar_prefetch = 0 : i64, scratch_operands = 0 : i64, tpu.core_type = #tpu.core_type<tc>, window_params = [{transform_indices = @transform_0, window_bounds = array<i64: 512, 64>}, {pipeline_mode = #tpu.pipeline_mode<synchronous>, transform_indices = @transform_1, window_bounds = array<i64: 64, 8>}, {pipeline_mode = #tpu.pipeline_mode<synchronous>, transform_indices = @transform_2, window_bounds = array<i64: 1, 8>}, {transform_indices = @transform_3, window_bounds = array<i64: 512, 8>}]} {
    %c0 = arith.constant 0 : index
    %c0_0 = arith.constant 0 : index
    %0 = vector.load %arg1[%c0, %c0_0] : memref<512x64xbf16, #tpu.memory_space<vmem>>, vector<512x64xbf16>
    %c0_1 = arith.constant 0 : index
    %c0_2 = arith.constant 0 : index
    %1 = vector.load %arg2[%c0_1, %c0_2] : memref<64x8xbf16, #tpu.memory_space<vmem>>, vector<64x8xbf16>
    %cst = arith.constant dense<0.000000e+00> : vector<512x8xf32>
    %2 = tpu.matmul %0, %1, %cst {dimension_numbers = #tpu.dot_dimension_numbers<[1], [0], [0], [1], [0, 0, 1, 1], [], []>} : vector<512x64xbf16>, vector<64x8xbf16>, vector<512x8xf32> -> vector<512x8xf32>
    %c0_3 = arith.constant 0 : index
    %c0_4 = arith.constant 0 : index
    %3 = vector.load %arg3[%c0_3, %c0_4] : memref<1x8xf32, #tpu.memory_space<vmem>>, vector<1x8xf32>
    %4 = vector.broadcast %3 : vector<1x8xf32> to vector<512x8xf32>
    %5 = arith.addf %2, %4 : vector<512x8xf32>
    %cst_5 = arith.constant 0.000000e+00 : f32
    %6 = vector.broadcast %cst_5 : f32 to vector<512x8xf32>
    %7 = arith.cmpf oge, %5, %6 : vector<512x8xf32>
    %cst_6 = arith.constant 2.000000e-01 : f32
    %8 = vector.broadcast %cst_6 : f32 to vector<512x8xf32>
    %9 = arith.mulf %8, %5 : vector<512x8xf32>
    %10 = arith.select %7, %5, %9 : vector<512x8xi1>, vector<512x8xf32>
    %11 = arith.truncf %10 : vector<512x8xf32> to vector<512x8xbf16>
    %c0_7 = arith.constant 0 : index
    %c0_8 = arith.constant 0 : index
    %12 = vector.load %arg4[%c0_7, %c0_8] : memref<512x8xbf16, #tpu.memory_space<vmem>>, vector<512x8xbf16>
    tpu.vector_store %arg4[%c0_7, %c0_8], %11 {strides = array<i32>} : memref<512x8xbf16, #tpu.memory_space<vmem>>, vector<512x8xbf16>,
    return
  }
  func.func @transform_0(%arg0: i32) -> (i32, i32) {
    %c0_i32 = arith.constant 0 : i32
    %c0_i32_0 = arith.constant 0 : i32
    return %arg0, %c0_i32 : i32, i32
  }
  func.func @transform_1(%arg0: i32) -> (i32, i32) {
    %c0_i32 = arith.constant 0 : i32
    %c0_i32_0 = arith.constant 0 : i32
    %c0_i32_1 = arith.constant 0 : i32
    return %c0_i32, %c0_i32_0 : i32, i32
  }
  func.func @transform_2(%arg0: i32) -> (i32, i32) {
    %c0_i32 = arith.constant 0 : i32
    %c0_i32_0 = arith.constant 0 : i32
    %c0_i32_1 = arith.constant 0 : i32
    return %c0_i32, %c0_i32_0 : i32, i32
  }
  func.func @transform_3(%arg0: i32) -> (i32, i32) {
    %c0_i32 = arith.constant 0 : i32
    %c0_i32_0 = arith.constant 0 : i32
    return %arg0, %c0_i32 : i32, i32
  }
}

module attributes {stable_mosaic.version = 11 : i64} {
  func.func @_conv_bias_stats_kernel(%arg0: i32, %arg1: memref<128x128xbf16, #tpu.memory_space<vmem>>, %arg2: memref<128x16xbf16, #tpu.memory_space<vmem>>, %arg3: memref<1x16xf32, #tpu.memory_space<vmem>>, %arg4: memref<128x16xbf16, #tpu.memory_space<vmem>>, %arg5: memref<1x2x16xf32, #tpu.memory_space<vmem>>) attributes {dimension_semantics = [#tpu.dimension_semantics<parallel>], iteration_bounds = array<i64: 1>, scalar_prefetch = 0 : i64, scratch_operands = 0 : i64, tpu.core_type = #tpu.core_type<tc>, window_params = [{transform_indices = @transform_0, window_bounds = array<i64: 128, 128>}, {pipeline_mode = #tpu.pipeline_mode<synchronous>, transform_indices = @transform_1, window_bounds = array<i64: 128, 16>}, {pipeline_mode = #tpu.pipeline_mode<synchronous>, transform_indices = @transform_2, window_bounds = array<i64: 1, 16>}, {transform_indices = @transform_3, window_bounds = array<i64: 128, 16>}, {transform_indices = @transform_4, window_bounds = array<i64: 1, 2, 16>}]} {
    %c0 = arith.constant 0 : index
    %c0_0 = arith.constant 0 : index
    %0 = vector.load %arg1[%c0, %c0_0] : memref<128x128xbf16, #tpu.memory_space<vmem>>, vector<128x128xbf16>
    %c0_1 = arith.constant 0 : index
    %c0_2 = arith.constant 0 : index
    %1 = vector.load %arg2[%c0_1, %c0_2] : memref<128x16xbf16, #tpu.memory_space<vmem>>, vector<128x16xbf16>
    %cst = arith.constant dense<0.000000e+00> : vector<128x16xf32>
    %2 = tpu.matmul %0, %1, %cst {dimension_numbers = #tpu.dot_dimension_numbers<[1], [0], [0], [1], [0, 0, 1, 1], [], []>} : vector<128x128xbf16>, vector<128x16xbf16>, vector<128x16xf32> -> vector<128x16xf32>
    %c0_3 = arith.constant 0 : index
    %c0_4 = arith.constant 0 : index
    %3 = vector.load %arg3[%c0_3, %c0_4] : memref<1x16xf32, #tpu.memory_space<vmem>>, vector<1x16xf32>
    %4 = vector.broadcast %3 : vector<1x16xf32> to vector<128x16xf32>
    %5 = arith.addf %2, %4 : vector<128x16xf32>
    %6 = arith.truncf %5 : vector<128x16xf32> to vector<128x16xbf16>
    %c0_5 = arith.constant 0 : index
    %c0_6 = arith.constant 0 : index
    %7 = vector.load %arg4[%c0_5, %c0_6] : memref<128x16xbf16, #tpu.memory_space<vmem>>, vector<128x16xbf16>
    tpu.vector_store %arg4[%c0_5, %c0_6], %6 {strides = array<i32>} : memref<128x16xbf16, #tpu.memory_space<vmem>>, vector<128x16xbf16>,
    %8 = tpu.iota {dimensions = array<i32: 0>} : vector<128x1xi32>
    %c128_i32 = arith.constant 128 : i32
    %9 = arith.muli %arg0, %c128_i32 : i32
    %10 = vector.broadcast %9 : i32 to vector<128x1xi32>
    %11 = arith.addi %8, %10 : vector<128x1xi32>
    %c128_i32_7 = arith.constant 128 : i32
    %12 = vector.broadcast %c128_i32_7 : i32 to vector<128x1xi32>
    %13 = arith.cmpi slt, %11, %12 : vector<128x1xi32>
    %cst_8 = arith.constant 0.000000e+00 : f32
    %14 = vector.shape_cast %13 : vector<128x1xi1> to vector<128x1xi1>
    %15 = vector.broadcast %14 : vector<128x1xi1> to vector<128x16xi1>
    %16 = vector.broadcast %cst_8 : f32 to vector<128x16xf32>
    %17 = arith.select %15, %5, %16 : vector<128x16xi1>, vector<128x16xf32>
    %cst_9 = arith.constant dense<0.000000e+00> : vector<16xf32>
    %18 = vector.multi_reduction <add>, %17, %cst_9 [0] : vector<128x16xf32> to vector<16xf32>
    %19 = vector.shape_cast %18 : vector<16xf32> to vector<1x16xf32>
    %20 = vector.shape_cast %19 : vector<1x16xf32> to vector<1x1x16xf32>
    %c0_10 = arith.constant 0 : index
    %c0_11 = arith.constant 0 : index
    %c0_12 = arith.constant 0 : index
    %21 = vector.load %arg5[%c0_10, %c0_11, %c0_12] : memref<1x2x16xf32, #tpu.memory_space<vmem>>, vector<1x1x16xf32>
    tpu.vector_store %arg5[%c0_10, %c0_11, %c0_12], %20 {strides = array<i32>} : memref<1x2x16xf32, #tpu.memory_space<vmem>>, vector<1x1x16xf32>,
    %22 = arith.mulf %17, %17 : vector<128x16xf32>
    %cst_13 = arith.constant dense<0.000000e+00> : vector<16xf32>
    %23 = vector.multi_reduction <add>, %22, %cst_13 [0] : vector<128x16xf32> to vector<16xf32>
    %24 = vector.shape_cast %23 : vector<16xf32> to vector<1x16xf32>
    %25 = vector.shape_cast %24 : vector<1x16xf32> to vector<1x1x16xf32>
    %c0_14 = arith.constant 0 : index
    %c1 = arith.constant 1 : index
    %c0_15 = arith.constant 0 : index
    %26 = vector.load %arg5[%c0_14, %c1, %c0_15] : memref<1x2x16xf32, #tpu.memory_space<vmem>>, vector<1x1x16xf32>
    tpu.vector_store %arg5[%c0_14, %c1, %c0_15], %25 {strides = array<i32>} : memref<1x2x16xf32, #tpu.memory_space<vmem>>, vector<1x1x16xf32>,
    return
  }
  func.func @transform_0(%arg0: i32) -> (i32, i32) {
    %c0_i32 = arith.constant 0 : i32
    %c0_i32_0 = arith.constant 0 : i32
    return %arg0, %c0_i32 : i32, i32
  }
  func.func @transform_1(%arg0: i32) -> (i32, i32) {
    %c0_i32 = arith.constant 0 : i32
    %c0_i32_0 = arith.constant 0 : i32
    %c0_i32_1 = arith.constant 0 : i32
    return %c0_i32, %c0_i32_0 : i32, i32
  }
  func.func @transform_2(%arg0: i32) -> (i32, i32) {
    %c0_i32 = arith.constant 0 : i32
    %c0_i32_0 = arith.constant 0 : i32
    %c0_i32_1 = arith.constant 0 : i32
    return %c0_i32, %c0_i32_0 : i32, i32
  }
  func.func @transform_3(%arg0: i32) -> (i32, i32) {
    %c0_i32 = arith.constant 0 : i32
    %c0_i32_0 = arith.constant 0 : i32
    return %arg0, %c0_i32 : i32, i32
  }
  func.func @transform_4(%arg0: i32) -> (i32, i32, i32) {
    %c0_i32 = arith.constant 0 : i32
    %c0_i32_0 = arith.constant 0 : i32
    %c0_i32_1 = arith.constant 0 : i32
    return %arg0, %c0_i32, %c0_i32_0 : i32, i32, i32
  }
}

module attributes {stable_mosaic.version = 11 : i64} {
  func.func @_bn_leaky_kernel(%arg0: i32, %arg1: memref<128x16xbf16, #tpu.memory_space<vmem>>, %arg2: memref<1x2x16xf32, #tpu.memory_space<vmem>>, %arg3: memref<1x16xf32, #tpu.memory_space<vmem>>, %arg4: memref<1x16xf32, #tpu.memory_space<vmem>>, %arg5: memref<128x16xbf16, #tpu.memory_space<vmem>>) attributes {dimension_semantics = [#tpu.dimension_semantics<parallel>], iteration_bounds = array<i64: 1>, scalar_prefetch = 0 : i64, scratch_operands = 0 : i64, tpu.core_type = #tpu.core_type<tc>, window_params = [{transform_indices = @transform_0, window_bounds = array<i64: 128, 16>}, {pipeline_mode = #tpu.pipeline_mode<synchronous>, transform_indices = @transform_1, window_bounds = array<i64: 1, 2, 16>}, {pipeline_mode = #tpu.pipeline_mode<synchronous>, transform_indices = @transform_2, window_bounds = array<i64: 1, 16>}, {pipeline_mode = #tpu.pipeline_mode<synchronous>, transform_indices = @transform_3, window_bounds = array<i64: 1, 16>}, {transform_indices = @transform_4, window_bounds = array<i64: 128, 16>}]} {
    %c0 = arith.constant 0 : index
    %c0_0 = arith.constant 0 : index
    %c0_1 = arith.constant 0 : index
    %0 = vector.load %arg2[%c0, %c0_0, %c0_1] : memref<1x2x16xf32, #tpu.memory_space<vmem>>, vector<1x2x16xf32>
    %cst = arith.constant dense<0.000000e+00> : vector<2x16xf32>
    %1 = vector.multi_reduction <add>, %0, %cst [0] : vector<1x2x16xf32> to vector<2x16xf32>
    %2 = vector.extract_strided_slice %1 {offsets = [0, 0], sizes = [1, 16], strides = [1, 1]} : vector<2x16xf32> to vector<1x16xf32>
    %cst_2 = arith.constant 7.812500e-03 : f32
    %3 = vector.broadcast %cst_2 : f32 to vector<1x16xf32>
    %4 = arith.mulf %2, %3 : vector<1x16xf32>
    %5 = vector.extract_strided_slice %1 {offsets = [1, 0], sizes = [1, 16], strides = [1, 1]} : vector<2x16xf32> to vector<1x16xf32>
    %cst_3 = arith.constant 7.812500e-03 : f32
    %6 = vector.broadcast %cst_3 : f32 to vector<1x16xf32>
    %7 = arith.mulf %5, %6 : vector<1x16xf32>
    %8 = arith.mulf %4, %4 : vector<1x16xf32>
    %9 = arith.subf %7, %8 : vector<1x16xf32>
    %cst_4 = arith.constant 0.000000e+00 : f32
    %10 = vector.broadcast %cst_4 : f32 to vector<1x16xf32>
    %11 = arith.maximumf %9, %10 : vector<1x16xf32>
    %c0_5 = arith.constant 0 : index
    %c0_6 = arith.constant 0 : index
    %12 = vector.load %arg1[%c0_5, %c0_6] : memref<128x16xbf16, #tpu.memory_space<vmem>>, vector<128x16xbf16>
    %13 = arith.extf %12 : vector<128x16xbf16> to vector<128x16xf32>
    %14 = vector.broadcast %4 : vector<1x16xf32> to vector<128x16xf32>
    %15 = arith.subf %13, %14 : vector<128x16xf32>
    %cst_7 = arith.constant 9.99999974E-6 : f32
    %16 = vector.broadcast %cst_7 : f32 to vector<1x16xf32>
    %17 = arith.addf %11, %16 : vector<1x16xf32>
    %18 = math.rsqrt %17 : vector<1x16xf32>
    %19 = vector.broadcast %18 : vector<1x16xf32> to vector<128x16xf32>
    %20 = arith.mulf %15, %19 : vector<128x16xf32>
    %c0_8 = arith.constant 0 : index
    %c0_9 = arith.constant 0 : index
    %21 = vector.load %arg3[%c0_8, %c0_9] : memref<1x16xf32, #tpu.memory_space<vmem>>, vector<1x16xf32>
    %22 = vector.broadcast %21 : vector<1x16xf32> to vector<128x16xf32>
    %23 = arith.mulf %20, %22 : vector<128x16xf32>
    %c0_10 = arith.constant 0 : index
    %c0_11 = arith.constant 0 : index
    %24 = vector.load %arg4[%c0_10, %c0_11] : memref<1x16xf32, #tpu.memory_space<vmem>>, vector<1x16xf32>
    %25 = vector.broadcast %24 : vector<1x16xf32> to vector<128x16xf32>
    %26 = arith.addf %23, %25 : vector<128x16xf32>
    %cst_12 = arith.constant 0.000000e+00 : f32
    %27 = vector.broadcast %cst_12 : f32 to vector<128x16xf32>
    %28 = arith.cmpf oge, %26, %27 : vector<128x16xf32>
    %cst_13 = arith.constant 2.000000e-01 : f32
    %29 = vector.broadcast %cst_13 : f32 to vector<128x16xf32>
    %30 = arith.mulf %29, %26 : vector<128x16xf32>
    %31 = arith.select %28, %26, %30 : vector<128x16xi1>, vector<128x16xf32>
    %32 = arith.truncf %31 : vector<128x16xf32> to vector<128x16xbf16>
    %c0_14 = arith.constant 0 : index
    %c0_15 = arith.constant 0 : index
    %33 = vector.load %arg5[%c0_14, %c0_15] : memref<128x16xbf16, #tpu.memory_space<vmem>>, vector<128x16xbf16>
    tpu.vector_store %arg5[%c0_14, %c0_15], %32 {strides = array<i32>} : memref<128x16xbf16, #tpu.memory_space<vmem>>, vector<128x16xbf16>,
    return
  }
  func.func @transform_0(%arg0: i32) -> (i32, i32) {
    %c0_i32 = arith.constant 0 : i32
    %c0_i32_0 = arith.constant 0 : i32
    return %arg0, %c0_i32 : i32, i32
  }
  func.func @transform_1(%arg0: i32) -> (i32, i32, i32) {
    %c0_i32 = arith.constant 0 : i32
    %c0_i32_0 = arith.constant 0 : i32
    %c0_i32_1 = arith.constant 0 : i32
    %c0_i32_2 = arith.constant 0 : i32
    return %c0_i32, %c0_i32_0, %c0_i32_1 : i32, i32, i32
  }
  func.func @transform_2(%arg0: i32) -> (i32, i32) {
    %c0_i32 = arith.constant 0 : i32
    %c0_i32_0 = arith.constant 0 : i32
    %c0_i32_1 = arith.constant 0 : i32
    return %c0_i32, %c0_i32_0 : i32, i32
  }
  func.func @transform_3(%arg0: i32) -> (i32, i32) {
    %c0_i32 = arith.constant 0 : i32
    %c0_i32_0 = arith.constant 0 : i32
    %c0_i32_1 = arith.constant 0 : i32
    return %c0_i32, %c0_i32_0 : i32, i32
  }
  func.func @transform_4(%arg0: i32) -> (i32, i32) {
    %c0_i32 = arith.constant 0 : i32
    %c0_i32_0 = arith.constant 0 : i32
    return %arg0, %c0_i32 : i32, i32
  }
}

module attributes {stable_mosaic.version = 11 : i64} {
  func.func @_conv_bias_stats_kernel(%arg0: i32, %arg1: memref<32x256xbf16, #tpu.memory_space<vmem>>, %arg2: memref<256x32xbf16, #tpu.memory_space<vmem>>, %arg3: memref<1x32xf32, #tpu.memory_space<vmem>>, %arg4: memref<32x32xbf16, #tpu.memory_space<vmem>>, %arg5: memref<1x2x32xf32, #tpu.memory_space<vmem>>) attributes {dimension_semantics = [#tpu.dimension_semantics<parallel>], iteration_bounds = array<i64: 1>, scalar_prefetch = 0 : i64, scratch_operands = 0 : i64, tpu.core_type = #tpu.core_type<tc>, window_params = [{transform_indices = @transform_0, window_bounds = array<i64: 32, 256>}, {pipeline_mode = #tpu.pipeline_mode<synchronous>, transform_indices = @transform_1, window_bounds = array<i64: 256, 32>}, {pipeline_mode = #tpu.pipeline_mode<synchronous>, transform_indices = @transform_2, window_bounds = array<i64: 1, 32>}, {transform_indices = @transform_3, window_bounds = array<i64: 32, 32>}, {transform_indices = @transform_4, window_bounds = array<i64: 1, 2, 32>}]} {
    %c0 = arith.constant 0 : index
    %c0_0 = arith.constant 0 : index
    %0 = vector.load %arg1[%c0, %c0_0] : memref<32x256xbf16, #tpu.memory_space<vmem>>, vector<32x256xbf16>
    %c0_1 = arith.constant 0 : index
    %c0_2 = arith.constant 0 : index
    %1 = vector.load %arg2[%c0_1, %c0_2] : memref<256x32xbf16, #tpu.memory_space<vmem>>, vector<256x32xbf16>
    %cst = arith.constant dense<0.000000e+00> : vector<32x32xf32>
    %2 = tpu.matmul %0, %1, %cst {dimension_numbers = #tpu.dot_dimension_numbers<[1], [0], [0], [1], [0, 0, 1, 1], [], []>} : vector<32x256xbf16>, vector<256x32xbf16>, vector<32x32xf32> -> vector<32x32xf32>
    %c0_3 = arith.constant 0 : index
    %c0_4 = arith.constant 0 : index
    %3 = vector.load %arg3[%c0_3, %c0_4] : memref<1x32xf32, #tpu.memory_space<vmem>>, vector<1x32xf32>
    %4 = vector.broadcast %3 : vector<1x32xf32> to vector<32x32xf32>
    %5 = arith.addf %2, %4 : vector<32x32xf32>
    %6 = arith.truncf %5 : vector<32x32xf32> to vector<32x32xbf16>
    %c0_5 = arith.constant 0 : index
    %c0_6 = arith.constant 0 : index
    %7 = vector.load %arg4[%c0_5, %c0_6] : memref<32x32xbf16, #tpu.memory_space<vmem>>, vector<32x32xbf16>
    tpu.vector_store %arg4[%c0_5, %c0_6], %6 {strides = array<i32>} : memref<32x32xbf16, #tpu.memory_space<vmem>>, vector<32x32xbf16>,
    %8 = tpu.iota {dimensions = array<i32: 0>} : vector<32x1xi32>
    %c32_i32 = arith.constant 32 : i32
    %9 = arith.muli %arg0, %c32_i32 : i32
    %10 = vector.broadcast %9 : i32 to vector<32x1xi32>
    %11 = arith.addi %8, %10 : vector<32x1xi32>
    %c32_i32_7 = arith.constant 32 : i32
    %12 = vector.broadcast %c32_i32_7 : i32 to vector<32x1xi32>
    %13 = arith.cmpi slt, %11, %12 : vector<32x1xi32>
    %cst_8 = arith.constant 0.000000e+00 : f32
    %14 = vector.shape_cast %13 : vector<32x1xi1> to vector<32x1xi1>
    %15 = vector.broadcast %14 : vector<32x1xi1> to vector<32x32xi1>
    %16 = vector.broadcast %cst_8 : f32 to vector<32x32xf32>
    %17 = arith.select %15, %5, %16 : vector<32x32xi1>, vector<32x32xf32>
    %cst_9 = arith.constant dense<0.000000e+00> : vector<32xf32>
    %18 = vector.multi_reduction <add>, %17, %cst_9 [0] : vector<32x32xf32> to vector<32xf32>
    %19 = vector.shape_cast %18 : vector<32xf32> to vector<1x32xf32>
    %20 = vector.shape_cast %19 : vector<1x32xf32> to vector<1x1x32xf32>
    %c0_10 = arith.constant 0 : index
    %c0_11 = arith.constant 0 : index
    %c0_12 = arith.constant 0 : index
    %21 = vector.load %arg5[%c0_10, %c0_11, %c0_12] : memref<1x2x32xf32, #tpu.memory_space<vmem>>, vector<1x1x32xf32>
    tpu.vector_store %arg5[%c0_10, %c0_11, %c0_12], %20 {strides = array<i32>} : memref<1x2x32xf32, #tpu.memory_space<vmem>>, vector<1x1x32xf32>,
    %22 = arith.mulf %17, %17 : vector<32x32xf32>
    %cst_13 = arith.constant dense<0.000000e+00> : vector<32xf32>
    %23 = vector.multi_reduction <add>, %22, %cst_13 [0] : vector<32x32xf32> to vector<32xf32>
    %24 = vector.shape_cast %23 : vector<32xf32> to vector<1x32xf32>
    %25 = vector.shape_cast %24 : vector<1x32xf32> to vector<1x1x32xf32>
    %c0_14 = arith.constant 0 : index
    %c1 = arith.constant 1 : index
    %c0_15 = arith.constant 0 : index
    %26 = vector.load %arg5[%c0_14, %c1, %c0_15] : memref<1x2x32xf32, #tpu.memory_space<vmem>>, vector<1x1x32xf32>
    tpu.vector_store %arg5[%c0_14, %c1, %c0_15], %25 {strides = array<i32>} : memref<1x2x32xf32, #tpu.memory_space<vmem>>, vector<1x1x32xf32>,
    return
  }
  func.func @transform_0(%arg0: i32) -> (i32, i32) {
    %c0_i32 = arith.constant 0 : i32
    %c0_i32_0 = arith.constant 0 : i32
    return %arg0, %c0_i32 : i32, i32
  }
  func.func @transform_1(%arg0: i32) -> (i32, i32) {
    %c0_i32 = arith.constant 0 : i32
    %c0_i32_0 = arith.constant 0 : i32
    %c0_i32_1 = arith.constant 0 : i32
    return %c0_i32, %c0_i32_0 : i32, i32
  }
  func.func @transform_2(%arg0: i32) -> (i32, i32) {
    %c0_i32 = arith.constant 0 : i32
    %c0_i32_0 = arith.constant 0 : i32
    %c0_i32_1 = arith.constant 0 : i32
    return %c0_i32, %c0_i32_0 : i32, i32
  }
  func.func @transform_3(%arg0: i32) -> (i32, i32) {
    %c0_i32 = arith.constant 0 : i32
    %c0_i32_0 = arith.constant 0 : i32
    return %arg0, %c0_i32 : i32, i32
  }
  func.func @transform_4(%arg0: i32) -> (i32, i32, i32) {
    %c0_i32 = arith.constant 0 : i32
    %c0_i32_0 = arith.constant 0 : i32
    %c0_i32_1 = arith.constant 0 : i32
    return %arg0, %c0_i32, %c0_i32_0 : i32, i32, i32
  }
}

module attributes {stable_mosaic.version = 11 : i64} {
  func.func @_bn_leaky_kernel(%arg0: i32, %arg1: memref<32x32xbf16, #tpu.memory_space<vmem>>, %arg2: memref<1x2x32xf32, #tpu.memory_space<vmem>>, %arg3: memref<1x32xf32, #tpu.memory_space<vmem>>, %arg4: memref<1x32xf32, #tpu.memory_space<vmem>>, %arg5: memref<32x32xbf16, #tpu.memory_space<vmem>>) attributes {dimension_semantics = [#tpu.dimension_semantics<parallel>], iteration_bounds = array<i64: 1>, scalar_prefetch = 0 : i64, scratch_operands = 0 : i64, tpu.core_type = #tpu.core_type<tc>, window_params = [{transform_indices = @transform_0, window_bounds = array<i64: 32, 32>}, {pipeline_mode = #tpu.pipeline_mode<synchronous>, transform_indices = @transform_1, window_bounds = array<i64: 1, 2, 32>}, {pipeline_mode = #tpu.pipeline_mode<synchronous>, transform_indices = @transform_2, window_bounds = array<i64: 1, 32>}, {pipeline_mode = #tpu.pipeline_mode<synchronous>, transform_indices = @transform_3, window_bounds = array<i64: 1, 32>}, {transform_indices = @transform_4, window_bounds = array<i64: 32, 32>}]} {
    %c0 = arith.constant 0 : index
    %c0_0 = arith.constant 0 : index
    %c0_1 = arith.constant 0 : index
    %0 = vector.load %arg2[%c0, %c0_0, %c0_1] : memref<1x2x32xf32, #tpu.memory_space<vmem>>, vector<1x2x32xf32>
    %cst = arith.constant dense<0.000000e+00> : vector<2x32xf32>
    %1 = vector.multi_reduction <add>, %0, %cst [0] : vector<1x2x32xf32> to vector<2x32xf32>
    %2 = vector.extract_strided_slice %1 {offsets = [0, 0], sizes = [1, 32], strides = [1, 1]} : vector<2x32xf32> to vector<1x32xf32>
    %cst_2 = arith.constant 3.125000e-02 : f32
    %3 = vector.broadcast %cst_2 : f32 to vector<1x32xf32>
    %4 = arith.mulf %2, %3 : vector<1x32xf32>
    %5 = vector.extract_strided_slice %1 {offsets = [1, 0], sizes = [1, 32], strides = [1, 1]} : vector<2x32xf32> to vector<1x32xf32>
    %cst_3 = arith.constant 3.125000e-02 : f32
    %6 = vector.broadcast %cst_3 : f32 to vector<1x32xf32>
    %7 = arith.mulf %5, %6 : vector<1x32xf32>
    %8 = arith.mulf %4, %4 : vector<1x32xf32>
    %9 = arith.subf %7, %8 : vector<1x32xf32>
    %cst_4 = arith.constant 0.000000e+00 : f32
    %10 = vector.broadcast %cst_4 : f32 to vector<1x32xf32>
    %11 = arith.maximumf %9, %10 : vector<1x32xf32>
    %c0_5 = arith.constant 0 : index
    %c0_6 = arith.constant 0 : index
    %12 = vector.load %arg1[%c0_5, %c0_6] : memref<32x32xbf16, #tpu.memory_space<vmem>>, vector<32x32xbf16>
    %13 = arith.extf %12 : vector<32x32xbf16> to vector<32x32xf32>
    %14 = vector.broadcast %4 : vector<1x32xf32> to vector<32x32xf32>
    %15 = arith.subf %13, %14 : vector<32x32xf32>
    %cst_7 = arith.constant 9.99999974E-6 : f32
    %16 = vector.broadcast %cst_7 : f32 to vector<1x32xf32>
    %17 = arith.addf %11, %16 : vector<1x32xf32>
    %18 = math.rsqrt %17 : vector<1x32xf32>
    %19 = vector.broadcast %18 : vector<1x32xf32> to vector<32x32xf32>
    %20 = arith.mulf %15, %19 : vector<32x32xf32>
    %c0_8 = arith.constant 0 : index
    %c0_9 = arith.constant 0 : index
    %21 = vector.load %arg3[%c0_8, %c0_9] : memref<1x32xf32, #tpu.memory_space<vmem>>, vector<1x32xf32>
    %22 = vector.broadcast %21 : vector<1x32xf32> to vector<32x32xf32>
    %23 = arith.mulf %20, %22 : vector<32x32xf32>
    %c0_10 = arith.constant 0 : index
    %c0_11 = arith.constant 0 : index
    %24 = vector.load %arg4[%c0_10, %c0_11] : memref<1x32xf32, #tpu.memory_space<vmem>>, vector<1x32xf32>
    %25 = vector.broadcast %24 : vector<1x32xf32> to vector<32x32xf32>
    %26 = arith.addf %23, %25 : vector<32x32xf32>
    %cst_12 = arith.constant 0.000000e+00 : f32
    %27 = vector.broadcast %cst_12 : f32 to vector<32x32xf32>
    %28 = arith.cmpf oge, %26, %27 : vector<32x32xf32>
    %cst_13 = arith.constant 2.000000e-01 : f32
    %29 = vector.broadcast %cst_13 : f32 to vector<32x32xf32>
    %30 = arith.mulf %29, %26 : vector<32x32xf32>
    %31 = arith.select %28, %26, %30 : vector<32x32xi1>, vector<32x32xf32>
    %32 = arith.truncf %31 : vector<32x32xf32> to vector<32x32xbf16>
    %c0_14 = arith.constant 0 : index
    %c0_15 = arith.constant 0 : index
    %33 = vector.load %arg5[%c0_14, %c0_15] : memref<32x32xbf16, #tpu.memory_space<vmem>>, vector<32x32xbf16>
    tpu.vector_store %arg5[%c0_14, %c0_15], %32 {strides = array<i32>} : memref<32x32xbf16, #tpu.memory_space<vmem>>, vector<32x32xbf16>,
    return
  }
  func.func @transform_0(%arg0: i32) -> (i32, i32) {
    %c0_i32 = arith.constant 0 : i32
    %c0_i32_0 = arith.constant 0 : i32
    return %arg0, %c0_i32 : i32, i32
  }
  func.func @transform_1(%arg0: i32) -> (i32, i32, i32) {
    %c0_i32 = arith.constant 0 : i32
    %c0_i32_0 = arith.constant 0 : i32
    %c0_i32_1 = arith.constant 0 : i32
    %c0_i32_2 = arith.constant 0 : i32
    return %c0_i32, %c0_i32_0, %c0_i32_1 : i32, i32, i32
  }
  func.func @transform_2(%arg0: i32) -> (i32, i32) {
    %c0_i32 = arith.constant 0 : i32
    %c0_i32_0 = arith.constant 0 : i32
    %c0_i32_1 = arith.constant 0 : i32
    return %c0_i32, %c0_i32_0 : i32, i32
  }
  func.func @transform_3(%arg0: i32) -> (i32, i32) {
    %c0_i32 = arith.constant 0 : i32
    %c0_i32_0 = arith.constant 0 : i32
    %c0_i32_1 = arith.constant 0 : i32
    return %c0_i32, %c0_i32_0 : i32, i32
  }
  func.func @transform_4(%arg0: i32) -> (i32, i32) {
    %c0_i32 = arith.constant 0 : i32
    %c0_i32_0 = arith.constant 0 : i32
    return %arg0, %c0_i32 : i32, i32
  }
}

module attributes {stable_mosaic.version = 11 : i64} {
  func.func @_conv_bias_stats_kernel(%arg0: i32, %arg1: memref<18x512xbf16, #tpu.memory_space<vmem>>, %arg2: memref<512x64xbf16, #tpu.memory_space<vmem>>, %arg3: memref<1x64xf32, #tpu.memory_space<vmem>>, %arg4: memref<18x64xbf16, #tpu.memory_space<vmem>>, %arg5: memref<1x2x64xf32, #tpu.memory_space<vmem>>) attributes {dimension_semantics = [#tpu.dimension_semantics<parallel>], iteration_bounds = array<i64: 1>, scalar_prefetch = 0 : i64, scratch_operands = 0 : i64, tpu.core_type = #tpu.core_type<tc>, window_params = [{transform_indices = @transform_0, window_bounds = array<i64: 18, 512>}, {pipeline_mode = #tpu.pipeline_mode<synchronous>, transform_indices = @transform_1, window_bounds = array<i64: 512, 64>}, {pipeline_mode = #tpu.pipeline_mode<synchronous>, transform_indices = @transform_2, window_bounds = array<i64: 1, 64>}, {transform_indices = @transform_3, window_bounds = array<i64: 18, 64>}, {transform_indices = @transform_4, window_bounds = array<i64: 1, 2, 64>}]} {
    %c0 = arith.constant 0 : index
    %c0_0 = arith.constant 0 : index
    %0 = vector.load %arg1[%c0, %c0_0] : memref<18x512xbf16, #tpu.memory_space<vmem>>, vector<18x512xbf16>
    %c0_1 = arith.constant 0 : index
    %c0_2 = arith.constant 0 : index
    %1 = vector.load %arg2[%c0_1, %c0_2] : memref<512x64xbf16, #tpu.memory_space<vmem>>, vector<512x64xbf16>
    %cst = arith.constant dense<0.000000e+00> : vector<18x64xf32>
    %2 = tpu.matmul %0, %1, %cst {dimension_numbers = #tpu.dot_dimension_numbers<[1], [0], [0], [1], [0, 0, 1, 1], [], []>} : vector<18x512xbf16>, vector<512x64xbf16>, vector<18x64xf32> -> vector<18x64xf32>
    %c0_3 = arith.constant 0 : index
    %c0_4 = arith.constant 0 : index
    %3 = vector.load %arg3[%c0_3, %c0_4] : memref<1x64xf32, #tpu.memory_space<vmem>>, vector<1x64xf32>
    %4 = vector.broadcast %3 : vector<1x64xf32> to vector<18x64xf32>
    %5 = arith.addf %2, %4 : vector<18x64xf32>
    %6 = arith.truncf %5 : vector<18x64xf32> to vector<18x64xbf16>
    %c0_5 = arith.constant 0 : index
    %c0_6 = arith.constant 0 : index
    %7 = vector.load %arg4[%c0_5, %c0_6] : memref<18x64xbf16, #tpu.memory_space<vmem>>, vector<18x64xbf16>
    tpu.vector_store %arg4[%c0_5, %c0_6], %6 {strides = array<i32>} : memref<18x64xbf16, #tpu.memory_space<vmem>>, vector<18x64xbf16>,
    %8 = tpu.iota {dimensions = array<i32: 0>} : vector<18x1xi32>
    %c18_i32 = arith.constant 18 : i32
    %9 = arith.muli %arg0, %c18_i32 : i32
    %10 = vector.broadcast %9 : i32 to vector<18x1xi32>
    %11 = arith.addi %8, %10 : vector<18x1xi32>
    %c18_i32_7 = arith.constant 18 : i32
    %12 = vector.broadcast %c18_i32_7 : i32 to vector<18x1xi32>
    %13 = arith.cmpi slt, %11, %12 : vector<18x1xi32>
    %cst_8 = arith.constant 0.000000e+00 : f32
    %14 = vector.shape_cast %13 : vector<18x1xi1> to vector<18x1xi1>
    %15 = vector.broadcast %14 : vector<18x1xi1> to vector<18x64xi1>
    %16 = vector.broadcast %cst_8 : f32 to vector<18x64xf32>
    %17 = arith.select %15, %5, %16 : vector<18x64xi1>, vector<18x64xf32>
    %cst_9 = arith.constant dense<0.000000e+00> : vector<64xf32>
    %18 = vector.multi_reduction <add>, %17, %cst_9 [0] : vector<18x64xf32> to vector<64xf32>
    %19 = vector.shape_cast %18 : vector<64xf32> to vector<1x64xf32>
    %20 = vector.shape_cast %19 : vector<1x64xf32> to vector<1x1x64xf32>
    %c0_10 = arith.constant 0 : index
    %c0_11 = arith.constant 0 : index
    %c0_12 = arith.constant 0 : index
    %21 = vector.load %arg5[%c0_10, %c0_11, %c0_12] : memref<1x2x64xf32, #tpu.memory_space<vmem>>, vector<1x1x64xf32>
    tpu.vector_store %arg5[%c0_10, %c0_11, %c0_12], %20 {strides = array<i32>} : memref<1x2x64xf32, #tpu.memory_space<vmem>>, vector<1x1x64xf32>,
    %22 = arith.mulf %17, %17 : vector<18x64xf32>
    %cst_13 = arith.constant dense<0.000000e+00> : vector<64xf32>
    %23 = vector.multi_reduction <add>, %22, %cst_13 [0] : vector<18x64xf32> to vector<64xf32>
    %24 = vector.shape_cast %23 : vector<64xf32> to vector<1x64xf32>
    %25 = vector.shape_cast %24 : vector<1x64xf32> to vector<1x1x64xf32>
    %c0_14 = arith.constant 0 : index
    %c1 = arith.constant 1 : index
    %c0_15 = arith.constant 0 : index
    %26 = vector.load %arg5[%c0_14, %c1, %c0_15] : memref<1x2x64xf32, #tpu.memory_space<vmem>>, vector<1x1x64xf32>
    tpu.vector_store %arg5[%c0_14, %c1, %c0_15], %25 {strides = array<i32>} : memref<1x2x64xf32, #tpu.memory_space<vmem>>, vector<1x1x64xf32>,
    return
  }
  func.func @transform_0(%arg0: i32) -> (i32, i32) {
    %c0_i32 = arith.constant 0 : i32
    %c0_i32_0 = arith.constant 0 : i32
    return %arg0, %c0_i32 : i32, i32
  }
  func.func @transform_1(%arg0: i32) -> (i32, i32) {
    %c0_i32 = arith.constant 0 : i32
    %c0_i32_0 = arith.constant 0 : i32
    %c0_i32_1 = arith.constant 0 : i32
    return %c0_i32, %c0_i32_0 : i32, i32
  }
  func.func @transform_2(%arg0: i32) -> (i32, i32) {
    %c0_i32 = arith.constant 0 : i32
    %c0_i32_0 = arith.constant 0 : i32
    %c0_i32_1 = arith.constant 0 : i32
    return %c0_i32, %c0_i32_0 : i32, i32
  }
  func.func @transform_3(%arg0: i32) -> (i32, i32) {
    %c0_i32 = arith.constant 0 : i32
    %c0_i32_0 = arith.constant 0 : i32
    return %arg0, %c0_i32 : i32, i32
  }
  func.func @transform_4(%arg0: i32) -> (i32, i32, i32) {
    %c0_i32 = arith.constant 0 : i32
    %c0_i32_0 = arith.constant 0 : i32
    %c0_i32_1 = arith.constant 0 : i32
    return %arg0, %c0_i32, %c0_i32_0 : i32, i32, i32
  }
}

module attributes {stable_mosaic.version = 11 : i64} {
  func.func @_bn_leaky_kernel(%arg0: i32, %arg1: memref<18x64xbf16, #tpu.memory_space<vmem>>, %arg2: memref<1x2x64xf32, #tpu.memory_space<vmem>>, %arg3: memref<1x64xf32, #tpu.memory_space<vmem>>, %arg4: memref<1x64xf32, #tpu.memory_space<vmem>>, %arg5: memref<18x64xbf16, #tpu.memory_space<vmem>>) attributes {dimension_semantics = [#tpu.dimension_semantics<parallel>], iteration_bounds = array<i64: 1>, scalar_prefetch = 0 : i64, scratch_operands = 0 : i64, tpu.core_type = #tpu.core_type<tc>, window_params = [{transform_indices = @transform_0, window_bounds = array<i64: 18, 64>}, {pipeline_mode = #tpu.pipeline_mode<synchronous>, transform_indices = @transform_1, window_bounds = array<i64: 1, 2, 64>}, {pipeline_mode = #tpu.pipeline_mode<synchronous>, transform_indices = @transform_2, window_bounds = array<i64: 1, 64>}, {pipeline_mode = #tpu.pipeline_mode<synchronous>, transform_indices = @transform_3, window_bounds = array<i64: 1, 64>}, {transform_indices = @transform_4, window_bounds = array<i64: 18, 64>}]} {
    %c0 = arith.constant 0 : index
    %c0_0 = arith.constant 0 : index
    %c0_1 = arith.constant 0 : index
    %0 = vector.load %arg2[%c0, %c0_0, %c0_1] : memref<1x2x64xf32, #tpu.memory_space<vmem>>, vector<1x2x64xf32>
    %cst = arith.constant dense<0.000000e+00> : vector<2x64xf32>
    %1 = vector.multi_reduction <add>, %0, %cst [0] : vector<1x2x64xf32> to vector<2x64xf32>
    %2 = vector.extract_strided_slice %1 {offsets = [0, 0], sizes = [1, 64], strides = [1, 1]} : vector<2x64xf32> to vector<1x64xf32>
    %cst_2 = arith.constant 0.055555556 : f32
    %3 = vector.broadcast %cst_2 : f32 to vector<1x64xf32>
    %4 = arith.mulf %2, %3 : vector<1x64xf32>
    %5 = vector.extract_strided_slice %1 {offsets = [1, 0], sizes = [1, 64], strides = [1, 1]} : vector<2x64xf32> to vector<1x64xf32>
    %cst_3 = arith.constant 0.055555556 : f32
    %6 = vector.broadcast %cst_3 : f32 to vector<1x64xf32>
    %7 = arith.mulf %5, %6 : vector<1x64xf32>
    %8 = arith.mulf %4, %4 : vector<1x64xf32>
    %9 = arith.subf %7, %8 : vector<1x64xf32>
    %cst_4 = arith.constant 0.000000e+00 : f32
    %10 = vector.broadcast %cst_4 : f32 to vector<1x64xf32>
    %11 = arith.maximumf %9, %10 : vector<1x64xf32>
    %c0_5 = arith.constant 0 : index
    %c0_6 = arith.constant 0 : index
    %12 = vector.load %arg1[%c0_5, %c0_6] : memref<18x64xbf16, #tpu.memory_space<vmem>>, vector<18x64xbf16>
    %13 = arith.extf %12 : vector<18x64xbf16> to vector<18x64xf32>
    %14 = vector.broadcast %4 : vector<1x64xf32> to vector<18x64xf32>
    %15 = arith.subf %13, %14 : vector<18x64xf32>
    %cst_7 = arith.constant 9.99999974E-6 : f32
    %16 = vector.broadcast %cst_7 : f32 to vector<1x64xf32>
    %17 = arith.addf %11, %16 : vector<1x64xf32>
    %18 = math.rsqrt %17 : vector<1x64xf32>
    %19 = vector.broadcast %18 : vector<1x64xf32> to vector<18x64xf32>
    %20 = arith.mulf %15, %19 : vector<18x64xf32>
    %c0_8 = arith.constant 0 : index
    %c0_9 = arith.constant 0 : index
    %21 = vector.load %arg3[%c0_8, %c0_9] : memref<1x64xf32, #tpu.memory_space<vmem>>, vector<1x64xf32>
    %22 = vector.broadcast %21 : vector<1x64xf32> to vector<18x64xf32>
    %23 = arith.mulf %20, %22 : vector<18x64xf32>
    %c0_10 = arith.constant 0 : index
    %c0_11 = arith.constant 0 : index
    %24 = vector.load %arg4[%c0_10, %c0_11] : memref<1x64xf32, #tpu.memory_space<vmem>>, vector<1x64xf32>
    %25 = vector.broadcast %24 : vector<1x64xf32> to vector<18x64xf32>
    %26 = arith.addf %23, %25 : vector<18x64xf32>
    %cst_12 = arith.constant 0.000000e+00 : f32
    %27 = vector.broadcast %cst_12 : f32 to vector<18x64xf32>
    %28 = arith.cmpf oge, %26, %27 : vector<18x64xf32>
    %cst_13 = arith.constant 2.000000e-01 : f32
    %29 = vector.broadcast %cst_13 : f32 to vector<18x64xf32>
    %30 = arith.mulf %29, %26 : vector<18x64xf32>
    %31 = arith.select %28, %26, %30 : vector<18x64xi1>, vector<18x64xf32>
    %32 = arith.truncf %31 : vector<18x64xf32> to vector<18x64xbf16>
    %c0_14 = arith.constant 0 : index
    %c0_15 = arith.constant 0 : index
    %33 = vector.load %arg5[%c0_14, %c0_15] : memref<18x64xbf16, #tpu.memory_space<vmem>>, vector<18x64xbf16>
    tpu.vector_store %arg5[%c0_14, %c0_15], %32 {strides = array<i32>} : memref<18x64xbf16, #tpu.memory_space<vmem>>, vector<18x64xbf16>,
    return
  }
  func.func @transform_0(%arg0: i32) -> (i32, i32) {
    %c0_i32 = arith.constant 0 : i32
    %c0_i32_0 = arith.constant 0 : i32
    return %arg0, %c0_i32 : i32, i32
  }
  func.func @transform_1(%arg0: i32) -> (i32, i32, i32) {
    %c0_i32 = arith.constant 0 : i32
    %c0_i32_0 = arith.constant 0 : i32
    %c0_i32_1 = arith.constant 0 : i32
    %c0_i32_2 = arith.constant 0 : i32
    return %c0_i32, %c0_i32_0, %c0_i32_1 : i32, i32, i32
  }
  func.func @transform_2(%arg0: i32) -> (i32, i32) {
    %c0_i32 = arith.constant 0 : i32
    %c0_i32_0 = arith.constant 0 : i32
    %c0_i32_1 = arith.constant 0 : i32
    return %c0_i32, %c0_i32_0 : i32, i32
  }
  func.func @transform_3(%arg0: i32) -> (i32, i32) {
    %c0_i32 = arith.constant 0 : i32
    %c0_i32_0 = arith.constant 0 : i32
    %c0_i32_1 = arith.constant 0 : i32
    return %c0_i32, %c0_i32_0 : i32, i32
  }
  func.func @transform_4(%arg0: i32) -> (i32, i32) {
    %c0_i32 = arith.constant 0 : i32
    %c0_i32_0 = arith.constant 0 : i32
    return %arg0, %c0_i32 : i32, i32
  }
}

module attributes {stable_mosaic.version = 11 : i64} {
  func.func @_conv_sigmoid_kernel(%arg0: i32, %arg1: memref<8x1024xbf16, #tpu.memory_space<vmem>>, %arg2: memref<1024x128xbf16, #tpu.memory_space<vmem>>, %arg3: memref<1x128xf32, #tpu.memory_space<vmem>>, %arg4: memref<8x128xf32, #tpu.memory_space<vmem>>) attributes {dimension_semantics = [#tpu.dimension_semantics<parallel>], iteration_bounds = array<i64: 1>, scalar_prefetch = 0 : i64, scratch_operands = 0 : i64, tpu.core_type = #tpu.core_type<tc>, window_params = [{transform_indices = @transform_0, window_bounds = array<i64: 8, 1024>}, {pipeline_mode = #tpu.pipeline_mode<synchronous>, transform_indices = @transform_1, window_bounds = array<i64: 1024, 128>}, {pipeline_mode = #tpu.pipeline_mode<synchronous>, transform_indices = @transform_2, window_bounds = array<i64: 1, 128>}, {transform_indices = @transform_3, window_bounds = array<i64: 8, 128>}]} {
    %c0 = arith.constant 0 : index
    %c0_0 = arith.constant 0 : index
    %0 = vector.load %arg1[%c0, %c0_0] : memref<8x1024xbf16, #tpu.memory_space<vmem>>, vector<8x1024xbf16>
    %c0_1 = arith.constant 0 : index
    %c0_2 = arith.constant 0 : index
    %1 = vector.load %arg2[%c0_1, %c0_2] : memref<1024x128xbf16, #tpu.memory_space<vmem>>, vector<1024x128xbf16>
    %cst = arith.constant dense<0.000000e+00> : vector<8x128xf32>
    %2 = tpu.matmul %0, %1, %cst {dimension_numbers = #tpu.dot_dimension_numbers<[1], [0], [0], [1], [0, 0, 1, 1], [], []>} : vector<8x1024xbf16>, vector<1024x128xbf16>, vector<8x128xf32> -> vector<8x128xf32>
    %c0_3 = arith.constant 0 : index
    %c0_4 = arith.constant 0 : index
    %3 = vector.load %arg3[%c0_3, %c0_4] : memref<1x128xf32, #tpu.memory_space<vmem>>, vector<1x128xf32>
    %4 = vector.broadcast %3 : vector<1x128xf32> to vector<8x128xf32>
    %5 = arith.addf %2, %4 : vector<8x128xf32>
    %cst_5 = arith.constant 0.000000e+00 : f32
    %6 = vector.broadcast %cst_5 : f32 to vector<8x128xf32>
    %7 = arith.subf %6, %5 : vector<8x128xf32>
    %8 = math.exp %7 : vector<8x128xf32>
    %cst_6 = arith.constant 1.000000e+00 : f32
    %9 = vector.broadcast %cst_6 : f32 to vector<8x128xf32>
    %10 = arith.addf %9, %8 : vector<8x128xf32>
    %cst_7 = arith.constant 1.000000e+00 : f32
    %11 = vector.broadcast %cst_7 : f32 to vector<8x128xf32>
    %12 = arith.divf %11, %10 : vector<8x128xf32>
    %c0_8 = arith.constant 0 : index
    %c0_9 = arith.constant 0 : index
    %13 = vector.load %arg4[%c0_8, %c0_9] : memref<8x128xf32, #tpu.memory_space<vmem>>, vector<8x128xf32>
    tpu.vector_store %arg4[%c0_8, %c0_9], %12 {strides = array<i32>} : memref<8x128xf32, #tpu.memory_space<vmem>>, vector<8x128xf32>,
    return
  }
  func.func @transform_0(%arg0: i32) -> (i32, i32) {
    %c0_i32 = arith.constant 0 : i32
    %c0_i32_0 = arith.constant 0 : i32
    return %arg0, %c0_i32 : i32, i32
  }
  func.func @transform_1(%arg0: i32) -> (i32, i32) {
    %c0_i32 = arith.constant 0 : i32
    %c0_i32_0 = arith.constant 0 : i32
    %c0_i32_1 = arith.constant 0 : i32
    return %c0_i32, %c0_i32_0 : i32, i32
  }
  func.func @transform_2(%arg0: i32) -> (i32, i32) {
    %c0_i32 = arith.constant 0 : i32
    %c0_i32_0 = arith.constant 0 : i32
    %c0_i32_1 = arith.constant 0 : i32
    return %c0_i32, %c0_i32_0 : i32, i32
  }
  func.func @transform_3(%arg0: i32) -> (i32, i32) {
    %c0_i32 = arith.constant 0 : i32
    %c0_i32_0 = arith.constant 0 : i32
    return %arg0, %c0_i32 : i32, i32
  }
}

</mosaic_0001>

<llo_original>
// kernel: discriminator_forward.8
$region0: #{discriminator_forward.8}
  #allocation0 [shape = 'u32[]', space=smem, size = 0x4, offset = 0x4, fixed_abs, tag = 'smem constant byte address 0x4 - core index']
  #allocation1 [shape = 'u32[144,128]{1,0:T(1,128)}', space=vmem, size = 0x12000, scoped, tag = 'internal scratch']
  %s0 = inlined_call_operand.hbm [shape: bf16[512,64], index: 0, kind: input, shape index: {}]
  %s1 = inlined_call_operand.hbm [shape: bf16[64,8], index: 1, kind: input, shape index: {}]
  %s2 = inlined_call_operand.hbm [shape: f32[1,8], index: 2, kind: input, shape index: {}]
  %s3 = inlined_call_operand.hbm [shape: bf16[512,8], index: 3, kind: output, shape index: {}]
  %s4 = sld [smem:[#allocation0]]
  $region34: #{discriminator_forward.8} parent=0
    _
  %s6 = ssub.s32 1, %s4
  %s7 = scalar_select 0, %s6, %s4
  $region1: #{discriminator_forward.8} parent=0
    #allocation2 [shape = 'u8[131072]{0}', space=vmem, size = 0x20000, scoped, tag = 'input window, operand 0, single buffered']
    #allocation3 [shape = 's32[1]{0}', space=sflag, size = 0x4, scoped, tag = 'scoped memory for discriminator_forward.8']
    #allocation4 [shape = 's32[1]{0}', space=sflag, size = 0x4, scoped, tag = 'scoped memory for discriminator_forward.8']
    #allocation5 [shape = 'u8[16384]{0}', space=vmem, size = 0x4000, scoped, tag = 'input window, operand 1, single buffered']
    #allocation6 [shape = 's32[1]{0}', space=sflag, size = 0x4, scoped, tag = 'scoped memory for discriminator_forward.8']
    #allocation7 [shape = 'u8[512]{0}', space=vmem, size = 0x400, scoped, tag = 'input window, operand 2, single buffered']
    #allocation8 [shape = 'u8[131072]{0}', space=vmem, size = 0x20000, scoped, tag = 'output window, operand 0, single buffered']
    %8 = vsyncpa [#allocation3], 0
    %9 = vsyncpa [#allocation6], 0
    %10 = vsyncpa [#allocation4], 0
    // Predicated region
    $region2: #{discriminator_forward.8} parent=1 // pred_check
      _
    $region3: #{discriminator_forward.8} parent=1 // pred_check_branch
      %12 = sbr.rel (0) target = $region5
    $region4: #{discriminator_forward.8} parent=1 // pred_region
      %s14 = ssub.s32 4096, 4096
      %15 = vsyncadd [#allocation3], %s14
      %s16 = sshll.u32 [#allocation2], 4
      %s17 = int_to_ptr.vmem [resolvable:$true] %s16
      %22 = dma.hbm_to_vmem [thread:$0]  %s0, 4096, %s17, [#allocation3], 64, 64, 4
    $region5: #{discriminator_forward.8} parent=1 // pred_fallthru
      _
    // Predicated region
    $region6: #{discriminator_forward.8} parent=1 // pred_check
      _
    $region7: #{discriminator_forward.8} parent=1 // pred_check_branch
      %24 = sbr.rel (0) target = $region9
    $region8: #{discriminator_forward.8} parent=1 // pred_region
      %s26 = ssub.s32 512, 512
      %27 = vsyncadd [#allocation6], %s26
      %s28 = sshll.u32 [#allocation5], 4
      %s29 = int_to_ptr.vmem [resolvable:$true] %s28
      %34 = dma.hbm_to_vmem [thread:$0]  %s1, 512, %s29, [#allocation6], 64, 64, 4
    $region9: #{discriminator_forward.8} parent=1 // pred_fallthru
      _
    // Predicated region
    $region10: #{discriminator_forward.8} parent=1 // pred_check
      _
    $region11: #{discriminator_forward.8} parent=1 // pred_check_branch
      %36 = sbr.rel (0) target = $region13
    $region12: #{discriminator_forward.8} parent=1 // pred_region
      %s38 = ssub.s32 16, 16
      %39 = vsyncadd [#allocation6], %s38
      %s41 = sshll.u32 [#allocation7], 4
      %s42 = int_to_ptr.vmem [resolvable:$true] %s41
      %44 = dma.hbm_to_vmem [thread:$0]  %s2, 16, %s42, [#allocation6]
    $region13: #{discriminator_forward.8} parent=1 // pred_fallthru
      _
    // Predicated region
    $region14: #{discriminator_forward.8} parent=1 // pred_check
      _
    $region15: #{discriminator_forward.8} parent=1 // pred_check_branch
      %46 = sbr.rel (0) target = $region17
    $region16: #{discriminator_forward.8} parent=1 // pred_region
      %47 = dma.done [#allocation3], 4096
    $region17: #{discriminator_forward.8} parent=1 // pred_fallthru
      _
    // Predicated region
    $region18: #{discriminator_forward.8} parent=1 // pred_check
      _
    $region19: #{discriminator_forward.8} parent=1 // pred_check_branch
      %49 = sbr.rel (0) target = $region21
    $region20: #{discriminator_forward.8} parent=1 // pred_region
      %50 = dma.done [#allocation6], 512
    $region21: #{discriminator_forward.8} parent=1 // pred_fallthru
      _
    // Predicated region
    $region22: #{discriminator_forward.8} parent=1 // pred_check
      _
    $region23: #{discriminator_forward.8} parent=1 // pred_check_branch
      %52 = sbr.rel (0) target = $region25
    $region24: #{discriminator_forward.8} parent=1 // pred_region
      %53 = dma.done [#allocation6], 16
    $region25: #{discriminator_forward.8} parent=1 // pred_fallthru
      _
    %v55 = vld [vmem:[#allocation2] sm:$0xf]
    %v56 = vld [vmem:[#allocation2 + $0x4] sm:$0xf]
    %v57 = vld [vmem:[#allocation2 + $0x8] sm:$0xf]
    %v58 = vld [vmem:[#allocation2 + $0xc] sm:$0xf]
    %v59 = vld [vmem:[#allocation2 + $0x10] sm:$0xf]
    %v60 = vld [vmem:[#allocation2 + $0x14] sm:$0xf]
    %v61 = vld [vmem:[#allocation2 + $0x18] sm:$0xf]
    %v62 = vld [vmem:[#allocation2 + $0x1c] sm:$0xf]
    %v63 = vld [vmem:[#allocation2 + $0x20] sm:$0xf]
    %v64 = vld [vmem:[#allocation2 + $0x24] sm:$0xf]
    %v65 = vld [vmem:[#allocation2 + $0x28] sm:$0xf]
    %v66 = vld [vmem:[#allocation2 + $0x2c] sm:$0xf]
    %v67 = vld [vmem:[#allocation2 + $0x30] sm:$0xf]
    %v68 = vld [vmem:[#allocation2 + $0x34] sm:$0xf]
    %v69 = vld [vmem:[#allocation2 + $0x38] sm:$0xf]
    %v70 = vld [vmem:[#allocation2 + $0x3c] sm:$0xf]
    %v71 = vld [vmem:[#allocation2 + $0x40] sm:$0xf]
    %v72 = vld [vmem:[#allocation2 + $0x44] sm:$0xf]
    %v73 = vld [vmem:[#allocation2 + $0x48] sm:$0xf]
    %v74 = vld [vmem:[#allocation2 + $0x4c] sm:$0xf]
    %v75 = vld [vmem:[#allocation2 + $0x50] sm:$0xf]
    %v76 = vld [vmem:[#allocation2 + $0x54] sm:$0xf]
    %v77 = vld [vmem:[#allocation2 + $0x58] sm:$0xf]
    %v78 = vld [vmem:[#allocation2 + $0x5c] sm:$0xf]
    %v79 = vld [vmem:[#allocation2 + $0x60] sm:$0xf]
    %v80 = vld [vmem:[#allocation2 + $0x64] sm:$0xf]
    %v81 = vld [vmem:[#allocation2 + $0x68] sm:$0xf]
    %v82 = vld [vmem:[#allocation2 + $0x6c] sm:$0xf]
    %v83 = vld [vmem:[#allocation2 + $0x70] sm:$0xf]
    %v84 = vld [vmem:[#allocation2 + $0x74] sm:$0xf]
    %v85 = vld [vmem:[#allocation2 + $0x78] sm:$0xf]
    %v86 = vld [vmem:[#allocation2 + $0x7c] sm:$0xf]
    %v87 = vld [vmem:[#allocation2 + $0x80] sm:$0xf]
    %v88 = vld [vmem:[#allocation2 + $0x84] sm:$0xf]
    %v89 = vld [vmem:[#allocation2 + $0x88] sm:$0xf]
    %v90 = vld [vmem:[#allocation2 + $0x8c] sm:$0xf]
    %v91 = vld [vmem:[#allocation2 + $0x90] sm:$0xf]
    %v92 = vld [vmem:[#allocation2 + $0x94] sm:$0xf]
    %v93 = vld [vmem:[#allocation2 + $0x98] sm:$0xf]
    %v94 = vld [vmem:[#allocation2 + $0x9c] sm:$0xf]
    %v95 = vld [vmem:[#allocation2 + $0xa0] sm:$0xf]
    %v96 = vld [vmem:[#allocation2 + $0xa4] sm:$0xf]
    %v97 = vld [vmem:[#allocation2 + $0xa8] sm:$0xf]
    %v98 = vld [vmem:[#allocation2 + $0xac] sm:$0xf]
    %v99 = vld [vmem:[#allocation2 + $0xb0] sm:$0xf]
    %v100 = vld [vmem:[#allocation2 + $0xb4] sm:$0xf]
    %v101 = vld [vmem:[#allocation2 + $0xb8] sm:$0xf]
    %v102 = vld [vmem:[#allocation2 + $0xbc] sm:$0xf]
    %v103 = vld [vmem:[#allocation2 + $0xc0] sm:$0xf]
    %v104 = vld [vmem:[#allocation2 + $0xc4] sm:$0xf]
    %v105 = vld [vmem:[#allocation2 + $0xc8] sm:$0xf]
    %v106 = vld [vmem:[#allocation2 + $0xcc] sm:$0xf]
    %v107 = vld [vmem:[#allocation2 + $0xd0] sm:$0xf]
    %v108 = vld [vmem:[#allocation2 + $0xd4] sm:$0xf]
    %v109 = vld [vmem:[#allocation2 + $0xd8] sm:$0xf]
    %v110 = vld [vmem:[#allocation2 + $0xdc] sm:$0xf]
    %v111 = vld [vmem:[#allocation2 + $0xe0] sm:$0xf]
    %v112 = vld [vmem:[#allocation2 + $0xe4] sm:$0xf]
    %v113 = vld [vmem:[#allocation2 + $0xe8] sm:$0xf]
    %v114 = vld [vmem:[#allocation2 + $0xec] sm:$0xf]
    %v115 = vld [vmem:[#allocation2 + $0xf0] sm:$0xf]
    %v116 = vld [vmem:[#allocation2 + $0xf4] sm:$0xf]
    %v117 = vld [vmem:[#allocation2 + $0xf8] sm:$0xf]
    %v118 = vld [vmem:[#allocation2 + $0xfc] sm:$0xf]
    %v119 = vld [vmem:[#allocation5] sm:$0xf]
    %v120 = vld [vmem:[#allocation5 + $0x4] sm:$0xf]
    %v121 = vld [vmem:[#allocation5 + $0x8] sm:$0xf]
    %v122 = vld [vmem:[#allocation5 + $0xc] sm:$0xf]
    %v123 = vld [vmem:[#allocation5 + $0x10] sm:$0xf]
    %v124 = vld [vmem:[#allocation5 + $0x14] sm:$0xf]
    %v125 = vld [vmem:[#allocation5 + $0x18] sm:$0xf]
    %v126 = vld [vmem:[#allocation5 + $0x1c] sm:$0xf]
    %v127 = vld [vmem:[#allocation7] sm:$0x1]
    %v129 = vlaneseq
    %v130 = vshrl.u32 %v129, 7
    %v131 = vsub.s32 0, %v130
    %v132 = vrot.slane %v127, %v131
    %v198 = vunpack.c.l.b16 %v55
    %v199 = vunpack.c.l.b16 %v56
    %v200 = vunpack.c.l.b16 %v57
    %v201 = vunpack.c.l.b16 %v58
    %v202 = vunpack.c.l.b16 %v59
    %v203 = vunpack.c.l.b16 %v60
    %v204 = vunpack.c.l.b16 %v61
    %v205 = vunpack.c.l.b16 %v62
    %v206 = vunpack.c.l.b16 %v63
    %v207 = vunpack.c.l.b16 %v64
    %v208 = vunpack.c.l.b16 %v65
    %v209 = vunpack.c.l.b16 %v66
    %v210 = vunpack.c.l.b16 %v67
    %v211 = vunpack.c.l.b16 %v68
    %v212 = vunpack.c.l.b16 %v69
    %v213 = vunpack.c.l.b16 %v70
    %v214 = vunpack.c.l.b16 %v71
    %v215 = vunpack.c.l.b16 %v72
    %v216 = vunpack.c.l.b16 %v73
    %v217 = vunpack.c.l.b16 %v74
    %v218 = vunpack.c.l.b16 %v75
    %v219 = vunpack.c.l.b16 %v76
    %v220 = vunpack.c.l.b16 %v77
    %v221 = vunpack.c.l.b16 %v78
    %v222 = vunpack.c.l.b16 %v79
    %v223 = vunpack.c.l.b16 %v80
    %v224 = vunpack.c.l.b16 %v81
    %v225 = vunpack.c.l.b16 %v82
    %v226 = vunpack.c.l.b16 %v83
    %v227 = vunpack.c.l.b16 %v84
    %v228 = vunpack.c.l.b16 %v85
    %v229 = vunpack.c.l.b16 %v86
    %v230 = vunpack.c.l.b16 %v87
    %v231 = vunpack.c.l.b16 %v88
    %v232 = vunpack.c.l.b16 %v89
    %v233 = vunpack.c.l.b16 %v90
    %v234 = vunpack.c.l.b16 %v91
    %v235 = vunpack.c.l.b16 %v92
    %v236 = vunpack.c.l.b16 %v93
    %v237 = vunpack.c.l.b16 %v94
    %v238 = vunpack.c.l.b16 %v95
    %v239 = vunpack.c.l.b16 %v96
    %v240 = vunpack.c.l.b16 %v97
    %v241 = vunpack.c.l.b16 %v98
    %v242 = vunpack.c.l.b16 %v99
    %v243 = vunpack.c.l.b16 %v100
    %v244 = vunpack.c.l.b16 %v101
    %v245 = vunpack.c.l.b16 %v102
    %v246 = vunpack.c.l.b16 %v103
    %v247 = vunpack.c.l.b16 %v104
    %v248 = vunpack.c.l.b16 %v105
    %v249 = vunpack.c.l.b16 %v106
    %v250 = vunpack.c.l.b16 %v107
    %v251 = vunpack.c.l.b16 %v108
    %v252 = vunpack.c.l.b16 %v109
    %v253 = vunpack.c.l.b16 %v110
    %v254 = vunpack.c.l.b16 %v111
    %v255 = vunpack.c.l.b16 %v112
    %v256 = vunpack.c.l.b16 %v113
    %v257 = vunpack.c.l.b16 %v114
    %v258 = vunpack.c.l.b16 %v115
    %v259 = vunpack.c.l.b16 %v116
    %v260 = vunpack.c.l.b16 %v117
    %v261 = vunpack.c.l.b16 %v118
    %v262 = vpack.c.b16 %v199, %v198
    %v263 = vpack.c.b16 %v201, %v200
    %v264 = vpack.c.b16 %v203, %v202
    %v265 = vpack.c.b16 %v205, %v204
    %v266 = vpack.c.b16 %v207, %v206
    %v267 = vpack.c.b16 %v209, %v208
    %v268 = vpack.c.b16 %v211, %v210
    %v269 = vpack.c.b16 %v213, %v212
    %v270 = vpack.c.b16 %v215, %v214
    %v271 = vpack.c.b16 %v217, %v216
    %v272 = vpack.c.b16 %v219, %v218
    %v273 = vpack.c.b16 %v221, %v220
    %v274 = vpack.c.b16 %v223, %v222
    %v275 = vpack.c.b16 %v225, %v224
    %v276 = vpack.c.b16 %v227, %v226
    %v277 = vpack.c.b16 %v229, %v228
    %v278 = vpack.c.b16 %v231, %v230
    %v279 = vpack.c.b16 %v233, %v232
    %v280 = vpack.c.b16 %v235, %v234
    %v281 = vpack.c.b16 %v237, %v236
    %v282 = vpack.c.b16 %v239, %v238
    %v283 = vpack.c.b16 %v241, %v240
    %v284 = vpack.c.b16 %v243, %v242
    %v285 = vpack.c.b16 %v245, %v244
    %v286 = vpack.c.b16 %v247, %v246
    %v287 = vpack.c.b16 %v249, %v248
    %v288 = vpack.c.b16 %v251, %v250
    %v289 = vpack.c.b16 %v253, %v252
    %v290 = vpack.c.b16 %v255, %v254
    %v291 = vpack.c.b16 %v257, %v256
    %v292 = vpack.c.b16 %v259, %v258
    %v293 = vpack.c.b16 %v261, %v260
    %v302 = vunpack.c.l.b16 %v119
    %v303 = vunpack.c.l.b16 %v120
    %v304 = vunpack.c.l.b16 %v121
    %v305 = vunpack.c.l.b16 %v122
    %v306 = vunpack.c.l.b16 %v123
    %v307 = vunpack.c.l.b16 %v124
    %v308 = vunpack.c.l.b16 %v125
    %v309 = vunpack.c.l.b16 %v126
    %v310 = vpack.c.b16 %v303, %v302
    %v311 = vpack.c.b16 %v305, %v304
    %v312 = vpack.c.b16 %v307, %v306
    %v313 = vpack.c.b16 %v309, %v308
    %vm318 = vcmask 523264
    %v320 = vsel %vm318, %v262, 0
    %v323 = vsel %vm318, %v263, 0
    %v326 = vsel %vm318, %v264, 0
    %v329 = vsel %vm318, %v265, 0
    %v332 = vsel %vm318, %v266, 0
    %v335 = vsel %vm318, %v267, 0
    %v338 = vsel %vm318, %v268, 0
    %v341 = vsel %vm318, %v269, 0
    %v344 = vsel %vm318, %v270, 0
    %v347 = vsel %vm318, %v271, 0
    %v350 = vsel %vm318, %v272, 0
    %v353 = vsel %vm318, %v273, 0
    %v356 = vsel %vm318, %v274, 0
    %v359 = vsel %vm318, %v275, 0
    %v362 = vsel %vm318, %v276, 0
    %v365 = vsel %vm318, %v277, 0
    %v368 = vsel %vm318, %v278, 0
    %v371 = vsel %vm318, %v279, 0
    %v374 = vsel %vm318, %v280, 0
    %v377 = vsel %vm318, %v281, 0
    %v380 = vsel %vm318, %v282, 0
    %v383 = vsel %vm318, %v283, 0
    %v386 = vsel %vm318, %v284, 0
    %v389 = vsel %vm318, %v285, 0
    %v392 = vsel %vm318, %v286, 0
    %v395 = vsel %vm318, %v287, 0
    %v398 = vsel %vm318, %v288, 0
    %v401 = vsel %vm318, %v289, 0
    %v404 = vsel %vm318, %v290, 0
    %v407 = vsel %vm318, %v291, 0
    %v410 = vsel %vm318, %v292, 0
    %v413 = vsel %vm318, %v293, 0
    %415 = vmatprep.subr.bf16.mxu0 0
    %416 = vmatpush1.bf16.msra.mxu0 %v310
    %417 = vmatprep.subr.bf16.mxu0 0
    %418 = vmatpush1.bf16.msra.mxu0 %v311
    %419 = vmatprep.subr.bf16.mxu0 0
    %420 = vmatpush1.bf16.msra.mxu0 %v312
    %421 = vmatprep.subr.bf16.mxu0 0
    %422 = vmatpush1.bf16.msra.mxu0 %v313
    %423 = vmatprep.subr.bf16.mxu0 0
    %424 = vmatpush1.bf16.msra.mxu0 0
    %425 = vmatprep.subr.bf16.mxu0 0
    %426 = vmatpush1.bf16.msra.mxu0 0
    %427 = vmatprep.subr.bf16.mxu0 0
    %428 = vmatpush1.bf16.msra.mxu0 0
    %429 = vmatprep.subr.bf16.mxu0 0
    %430 = vmatpush1.bf16.msra.mxu0 0
    %431 = vmatprep.subr.bf16.mxu0 0
    %432 = vmatpush1.bf16.msra.mxu0 0
    %433 = vmatprep.subr.bf16.mxu0 0
    %434 = vmatpush1.bf16.msra.mxu0 0
    %435 = vmatprep.subr.bf16.mxu0 0
    %436 = vmatpush1.bf16.msra.mxu0 0
    %437 = vmatprep.subr.bf16.mxu0 0
    %438 = vmatpush1.bf16.msra.mxu0 0
    %439 = vmatprep.subr.bf16.mxu0 0
    %440 = vmatpush1.bf16.msra.mxu0 0
    %441 = vmatprep.subr.bf16.mxu0 0
    %442 = vmatpush1.bf16.msra.mxu0 0
    %443 = vmatprep.subr.bf16.mxu0 0
    %444 = vmatpush1.bf16.msra.mxu0 0
    %445 = vmatprep.subr.bf16.mxu0 0
    %446 = vmatpush1.bf16.msra.mxu0 0
    %447 = vmatprep.mubr.bf16.mxu0 0
    %448 = vmatmul.mubr.bf16.gmra.mrb[0].mxu0 %v320
    %v449 = vpop.f32.mrb[0].mxu0
    %v450 = vadd.f32 %v132, %v449
    %v451 = vpop.f32.mrb[0].mxu0
    %v452 = vpop.f32.mrb[0].mxu0
    %v453 = vadd.f32 %v132, %v452
    %v454 = vpop.f32.mrb[0].mxu0
    %455 = vmatprep.mubr.bf16.mxu0 0
    %456 = vmatmul.mubr.bf16.gmra.mrb[0].mxu0 %v323
    %v457 = vpop.f32.mrb[0].mxu0
    %v458 = vadd.f32 %v132, %v457
    %v459 = vpop.f32.mrb[0].mxu0
    %v460 = vpop.f32.mrb[0].mxu0
    %v461 = vadd.f32 %v132, %v460
    %v462 = vpop.f32.mrb[0].mxu0
    %463 = vmatprep.mubr.bf16.mxu0 0
    %464 = vmatmul.mubr.bf16.gmra.mrb[0].mxu0 %v326
    %v465 = vpop.f32.mrb[0].mxu0
    %v466 = vadd.f32 %v132, %v465
    %v467 = vpop.f32.mrb[0].mxu0
    %v468 = vpop.f32.mrb[0].mxu0
    %v469 = vadd.f32 %v132, %v468
    %v470 = vpop.f32.mrb[0].mxu0
    %471 = vmatprep.mubr.bf16.mxu0 0
    %472 = vmatmul.mubr.bf16.gmra.mrb[0].mxu0 %v329
    %v473 = vpop.f32.mrb[0].mxu0
    %v474 = vadd.f32 %v132, %v473
    %v475 = vpop.f32.mrb[0].mxu0
    %v476 = vpop.f32.mrb[0].mxu0
    %v477 = vadd.f32 %v132, %v476
    %v478 = vpop.f32.mrb[0].mxu0
    %479 = vmatprep.mubr.bf16.mxu0 0
    %480 = vmatmul.mubr.bf16.gmra.mrb[0].mxu0 %v332
    %v481 = vpop.f32.mrb[0].mxu0
    %v482 = vadd.f32 %v132, %v481
    %v483 = vpop.f32.mrb[0].mxu0
    %v484 = vpop.f32.mrb[0].mxu0
    %v485 = vadd.f32 %v132, %v484
    %v486 = vpop.f32.mrb[0].mxu0
    %487 = vmatprep.mubr.bf16.mxu0 0
    %488 = vmatmul.mubr.bf16.gmra.mrb[0].mxu0 %v335
    %v489 = vpop.f32.mrb[0].mxu0
    %v490 = vadd.f32 %v132, %v489
    %v491 = vpop.f32.mrb[0].mxu0
    %v492 = vpop.f32.mrb[0].mxu0
    %v493 = vadd.f32 %v132, %v492
    %v494 = vpop.f32.mrb[0].mxu0
    %495 = vmatprep.mubr.bf16.mxu0 0
    %496 = vmatmul.mubr.bf16.gmra.mrb[0].mxu0 %v338
    %v497 = vpop.f32.mrb[0].mxu0
    %v498 = vadd.f32 %v132, %v497
    %v499 = vpop.f32.mrb[0].mxu0
    %v500 = vpop.f32.mrb[0].mxu0
    %v501 = vadd.f32 %v132, %v500
    %v502 = vpop.f32.mrb[0].mxu0
    %503 = vmatprep.mubr.bf16.mxu0 0
    %504 = vmatmul.mubr.bf16.gmra.mrb[0].mxu0 %v341
    %v505 = vpop.f32.mrb[0].mxu0
    %v506 = vadd.f32 %v132, %v505
    %v507 = vpop.f32.mrb[0].mxu0
    %v508 = vpop.f32.mrb[0].mxu0
    %v509 = vadd.f32 %v132, %v508
    %v510 = vpop.f32.mrb[0].mxu0
    %511 = vmatprep.mubr.bf16.mxu0 0
    %512 = vmatmul.mubr.bf16.gmra.mrb[0].mxu0 %v344
    %v513 = vpop.f32.mrb[0].mxu0
    %v514 = vadd.f32 %v132, %v513
    %v515 = vpop.f32.mrb[0].mxu0
    %v516 = vpop.f32.mrb[0].mxu0
    %v517 = vadd.f32 %v132, %v516
    %v518 = vpop.f32.mrb[0].mxu0
    %519 = vmatprep.mubr.bf16.mxu0 0
    %520 = vmatmul.mubr.bf16.gmra.mrb[0].mxu0 %v347
    %v521 = vpop.f32.mrb[0].mxu0
    %v522 = vadd.f32 %v132, %v521
    %v523 = vpop.f32.mrb[0].mxu0
    %v524 = vpop.f32.mrb[0].mxu0
    %v525 = vadd.f32 %v132, %v524
    %v526 = vpop.f32.mrb[0].mxu0
    %527 = vmatprep.mubr.bf16.mxu0 0
    %528 = vmatmul.mubr.bf16.gmra.mrb[0].mxu0 %v350
    %v529 = vpop.f32.mrb[0].mxu0
    %v530 = vadd.f32 %v132, %v529
    %v531 = vpop.f32.mrb[0].mxu0
    %v532 = vpop.f32.mrb[0].mxu0
    %v533 = vadd.f32 %v132, %v532
    %v534 = vpop.f32.mrb[0].mxu0
    %535 = vmatprep.mubr.bf16.mxu0 0
    %536 = vmatmul.mubr.bf16.gmra.mrb[0].mxu0 %v353
    %v537 = vpop.f32.mrb[0].mxu0
    %v538 = vadd.f32 %v132, %v537
    %v539 = vpop.f32.mrb[0].mxu0
    %v540 = vpop.f32.mrb[0].mxu0
    %v541 = vadd.f32 %v132, %v540
    %v542 = vpop.f32.mrb[0].mxu0
    %543 = vmatprep.mubr.bf16.mxu0 0
    %544 = vmatmul.mubr.bf16.gmra.mrb[0].mxu0 %v356
    %v545 = vpop.f32.mrb[0].mxu0
    %v546 = vadd.f32 %v132, %v545
    %v547 = vpop.f32.mrb[0].mxu0
    %v548 = vpop.f32.mrb[0].mxu0
    %v549 = vadd.f32 %v132, %v548
    %v550 = vpop.f32.mrb[0].mxu0
    %551 = vmatprep.mubr.bf16.mxu0 0
    %552 = vmatmul.mubr.bf16.gmra.mrb[0].mxu0 %v359
    %v553 = vpop.f32.mrb[0].mxu0
    %v554 = vadd.f32 %v132, %v553
    %v555 = vpop.f32.mrb[0].mxu0
    %v556 = vpop.f32.mrb[0].mxu0
    %v557 = vadd.f32 %v132, %v556
    %v558 = vpop.f32.mrb[0].mxu0
    %559 = vmatprep.mubr.bf16.mxu0 0
    %560 = vmatmul.mubr.bf16.gmra.mrb[0].mxu0 %v362
    %v561 = vpop.f32.mrb[0].mxu0
    %v562 = vadd.f32 %v132, %v561
    %v563 = vpop.f32.mrb[0].mxu0
    %v564 = vpop.f32.mrb[0].mxu0
    %v565 = vadd.f32 %v132, %v564
    %v566 = vpop.f32.mrb[0].mxu0
    %567 = vmatprep.mubr.bf16.mxu0 0
    %568 = vmatmul.mubr.bf16.gmra.mrb[0].mxu0 %v365
    %v569 = vpop.f32.mrb[0].mxu0
    %v570 = vadd.f32 %v132, %v569
    %v571 = vpop.f32.mrb[0].mxu0
    %v572 = vpop.f32.mrb[0].mxu0
    %v573 = vadd.f32 %v132, %v572
    %v574 = vpop.f32.mrb[0].mxu0
    %575 = vmatprep.mubr.bf16.mxu0 0
    %576 = vmatmul.mubr.bf16.gmra.mrb[0].mxu0 %v368
    %v577 = vpop.f32.mrb[0].mxu0
    %v578 = vadd.f32 %v132, %v577
    %v579 = vpop.f32.mrb[0].mxu0
    %v580 = vpop.f32.mrb[0].mxu0
    %v581 = vadd.f32 %v132, %v580
    %v582 = vpop.f32.mrb[0].mxu0
    %583 = vmatprep.mubr.bf16.mxu0 0
    %584 = vmatmul.mubr.bf16.gmra.mrb[0].mxu0 %v371
    %v585 = vpop.f32.mrb[0].mxu0
    %v586 = vadd.f32 %v132, %v585
    %v587 = vpop.f32.mrb[0].mxu0
    %v588 = vpop.f32.mrb[0].mxu0
    %v589 = vadd.f32 %v132, %v588
    %v590 = vpop.f32.mrb[0].mxu0
    %591 = vmatprep.mubr.bf16.mxu0 0
    %592 = vmatmul.mubr.bf16.gmra.mrb[0].mxu0 %v374
    %v593 = vpop.f32.mrb[0].mxu0
    %v594 = vadd.f32 %v132, %v593
    %v595 = vpop.f32.mrb[0].mxu0
    %v596 = vpop.f32.mrb[0].mxu0
    %v597 = vadd.f32 %v132, %v596
    %v598 = vpop.f32.mrb[0].mxu0
    %599 = vmatprep.mubr.bf16.mxu0 0
    %600 = vmatmul.mubr.bf16.gmra.mrb[0].mxu0 %v377
    %v601 = vpop.f32.mrb[0].mxu0
    %v602 = vadd.f32 %v132, %v601
    %v603 = vpop.f32.mrb[0].mxu0
    %v604 = vpop.f32.mrb[0].mxu0
    %v605 = vadd.f32 %v132, %v604
    %v606 = vpop.f32.mrb[0].mxu0
    %607 = vmatprep.mubr.bf16.mxu0 0
    %608 = vmatmul.mubr.bf16.gmra.mrb[0].mxu0 %v380
    %v609 = vpop.f32.mrb[0].mxu0
    %v610 = vadd.f32 %v132, %v609
    %v611 = vpop.f32.mrb[0].mxu0
    %v612 = vpop.f32.mrb[0].mxu0
    %v613 = vadd.f32 %v132, %v612
    %v614 = vpop.f32.mrb[0].mxu0
    %615 = vmatprep.mubr.bf16.mxu0 0
    %616 = vmatmul.mubr.bf16.gmra.mrb[0].mxu0 %v383
    %v617 = vpop.f32.mrb[0].mxu0
    %v618 = vadd.f32 %v132, %v617
    %v619 = vpop.f32.mrb[0].mxu0
    %v620 = vpop.f32.mrb[0].mxu0
    %v621 = vadd.f32 %v132, %v620
    %v622 = vpop.f32.mrb[0].mxu0
    %623 = vmatprep.mubr.bf16.mxu0 0
    %624 = vmatmul.mubr.bf16.gmra.mrb[0].mxu0 %v386
    %v625 = vpop.f32.mrb[0].mxu0
    %v626 = vadd.f32 %v132, %v625
    %v627 = vpop.f32.mrb[0].mxu0
    %v628 = vpop.f32.mrb[0].mxu0
    %v629 = vadd.f32 %v132, %v628
    %v630 = vpop.f32.mrb[0].mxu0
    %631 = vmatprep.mubr.bf16.mxu0 0
    %632 = vmatmul.mubr.bf16.gmra.mrb[0].mxu0 %v389
    %v633 = vpop.f32.mrb[0].mxu0
    %v634 = vadd.f32 %v132, %v633
    %v635 = vpop.f32.mrb[0].mxu0
    %v636 = vpop.f32.mrb[0].mxu0
    %v637 = vadd.f32 %v132, %v636
    %v638 = vpop.f32.mrb[0].mxu0
    %639 = vmatprep.mubr.bf16.mxu0 0
    %640 = vmatmul.mubr.bf16.gmra.mrb[0].mxu0 %v392
    %v641 = vpop.f32.mrb[0].mxu0
    %v642 = vadd.f32 %v132, %v641
    %v643 = vpop.f32.mrb[0].mxu0
    %v644 = vpop.f32.mrb[0].mxu0
    %v645 = vadd.f32 %v132, %v644
    %v646 = vpop.f32.mrb[0].mxu0
    %647 = vmatprep.mubr.bf16.mxu0 0
    %648 = vmatmul.mubr.bf16.gmra.mrb[0].mxu0 %v395
    %v649 = vpop.f32.mrb[0].mxu0
    %v650 = vadd.f32 %v132, %v649
    %v651 = vpop.f32.mrb[0].mxu0
    %v652 = vpop.f32.mrb[0].mxu0
    %v653 = vadd.f32 %v132, %v652
    %v654 = vpop.f32.mrb[0].mxu0
    %655 = vmatprep.mubr.bf16.mxu0 0
    %656 = vmatmul.mubr.bf16.gmra.mrb[0].mxu0 %v398
    %v657 = vpop.f32.mrb[0].mxu0
    %v658 = vadd.f32 %v132, %v657
    %v659 = vpop.f32.mrb[0].mxu0
    %v660 = vpop.f32.mrb[0].mxu0
    %v661 = vadd.f32 %v132, %v660
    %v662 = vpop.f32.mrb[0].mxu0
    %663 = vmatprep.mubr.bf16.mxu0 0
    %664 = vmatmul.mubr.bf16.gmra.mrb[0].mxu0 %v401
    %v665 = vpop.f32.mrb[0].mxu0
    %v666 = vadd.f32 %v132, %v665
    %v667 = vpop.f32.mrb[0].mxu0
    %v668 = vpop.f32.mrb[0].mxu0
    %v669 = vadd.f32 %v132, %v668
    %v670 = vpop.f32.mrb[0].mxu0
    %671 = vmatprep.mubr.bf16.mxu0 0
    %672 = vmatmul.mubr.bf16.gmra.mrb[0].mxu0 %v404
    %v673 = vpop.f32.mrb[0].mxu0
    %v674 = vadd.f32 %v132, %v673
    %v675 = vpop.f32.mrb[0].mxu0
    %v676 = vpop.f32.mrb[0].mxu0
    %v677 = vadd.f32 %v132, %v676
    %v678 = vpop.f32.mrb[0].mxu0
    %679 = vmatprep.mubr.bf16.mxu0 0
    %680 = vmatmul.mubr.bf16.gmra.mrb[0].mxu0 %v407
    %v681 = vpop.f32.mrb[0].mxu0
    %v682 = vadd.f32 %v132, %v681
    %v683 = vpop.f32.mrb[0].mxu0
    %v684 = vpop.f32.mrb[0].mxu0
    %v685 = vadd.f32 %v132, %v684
    %v686 = vpop.f32.mrb[0].mxu0
    %687 = vmatprep.mubr.bf16.mxu0 0
    %688 = vmatmul.mubr.bf16.gmra.mrb[0].mxu0 %v410
    %v689 = vpop.f32.mrb[0].mxu0
    %v690 = vadd.f32 %v132, %v689
    %v691 = vpop.f32.mrb[0].mxu0
    %v692 = vpop.f32.mrb[0].mxu0
    %v693 = vadd.f32 %v132, %v692
    %v694 = vpop.f32.mrb[0].mxu0
    %695 = vmatprep.mubr.bf16.mxu0 0
    %696 = vmatmul.mubr.bf16.gmra.mrb[0].mxu0 %v413
    %v697 = vpop.f32.mrb[0].mxu0
    %v698 = vadd.f32 %v132, %v697
    %v699 = vpop.f32.mrb[0].mxu0
    %v700 = vpop.f32.mrb[0].mxu0
    %v701 = vadd.f32 %v132, %v700
    %v702 = vpop.f32.mrb[0].mxu0
    %703 = vdwg.mxu0
    %vm704 = vcmp.ge.f32.partialorder %v450, 0.0
    %vm705 = vcmp.ge.f32.partialorder %v453, 0.0
    %vm706 = vcmp.ge.f32.partialorder %v458, 0.0
    %vm707 = vcmp.ge.f32.partialorder %v461, 0.0
    %vm708 = vcmp.ge.f32.partialorder %v466, 0.0
    %vm709 = vcmp.ge.f32.partialorder %v469, 0.0
    %vm710 = vcmp.ge.f32.partialorder %v474, 0.0
    %vm711 = vcmp.ge.f32.partialorder %v477, 0.0
    %vm712 = vcmp.ge.f32.partialorder %v482, 0.0
    %vm713 = vcmp.ge.f32.partialorder %v485, 0.0
    %vm714 = vcmp.ge.f32.partialorder %v490, 0.0
    %vm715 = vcmp.ge.f32.partialorder %v493, 0.0
    %vm716 = vcmp.ge.f32.partialorder %v498, 0.0
    %vm717 = vcmp.ge.f32.partialorder %v501, 0.0
    %vm718 = vcmp.ge.f32.partialorder %v506, 0.0
    %vm719 = vcmp.ge.f32.partialorder %v509, 0.0
    %vm720 = vcmp.ge.f32.partialorder %v514, 0.0
    %vm721 = vcmp.ge.f32.partialorder %v517, 0.0
    %vm722 = vcmp.ge.f32.partialorder %v522, 0.0
    %vm723 = vcmp.ge.f32.partialorder %v525, 0.0
    %vm724 = vcmp.ge.f32.partialorder %v530, 0.0
    %vm725 = vcmp.ge.f32.partialorder %v533, 0.0
    %vm726 = vcmp.ge.f32.partialorder %v538, 0.0
    %vm727 = vcmp.ge.f32.partialorder %v541, 0.0
    %vm728 = vcmp.ge.f32.partialorder %v546, 0.0
    %vm729 = vcmp.ge.f32.partialorder %v549, 0.0
    %vm730 = vcmp.ge.f32.partialorder %v554, 0.0
    %vm731 = vcmp.ge.f32.partialorder %v557, 0.0
    %vm732 = vcmp.ge.f32.partialorder %v562, 0.0
    %vm733 = vcmp.ge.f32.partialorder %v565, 0.0
    %vm734 = vcmp.ge.f32.partialorder %v570, 0.0
    %vm735 = vcmp.ge.f32.partialorder %v573, 0.0
    %vm736 = vcmp.ge.f32.partialorder %v578, 0.0
    %vm737 = vcmp.ge.f32.partialorder %v581, 0.0
    %vm738 = vcmp.ge.f32.partialorder %v586, 0.0
    %vm739 = vcmp.ge.f32.partialorder %v589, 0.0
    %vm740 = vcmp.ge.f32.partialorder %v594, 0.0
    %vm741 = vcmp.ge.f32.partialorder %v597, 0.0
    %vm742 = vcmp.ge.f32.partialorder %v602, 0.0
    %vm743 = vcmp.ge.f32.partialorder %v605, 0.0
    %vm744 = vcmp.ge.f32.partialorder %v610, 0.0
    %vm745 = vcmp.ge.f32.partialorder %v613, 0.0
    %vm746 = vcmp.ge.f32.partialorder %v618, 0.0
    %vm747 = vcmp.ge.f32.partialorder %v621, 0.0
    %vm748 = vcmp.ge.f32.partialorder %v626, 0.0
    %vm749 = vcmp.ge.f32.partialorder %v629, 0.0
    %vm750 = vcmp.ge.f32.partialorder %v634, 0.0
    %vm751 = vcmp.ge.f32.partialorder %v637, 0.0
    %vm752 = vcmp.ge.f32.partialorder %v642, 0.0
    %vm753 = vcmp.ge.f32.partialorder %v645, 0.0
    %vm754 = vcmp.ge.f32.partialorder %v650, 0.0
    %vm755 = vcmp.ge.f32.partialorder %v653, 0.0
    %vm756 = vcmp.ge.f32.partialorder %v658, 0.0
    %vm757 = vcmp.ge.f32.partialorder %v661, 0.0
    %vm758 = vcmp.ge.f32.partialorder %v666, 0.0
    %vm759 = vcmp.ge.f32.partialorder %v669, 0.0
    %vm760 = vcmp.ge.f32.partialorder %v674, 0.0
    %vm761 = vcmp.ge.f32.partialorder %v677, 0.0
    %vm762 = vcmp.ge.f32.partialorder %v682, 0.0
    %vm763 = vcmp.ge.f32.partialorder %v685, 0.0
    %vm764 = vcmp.ge.f32.partialorder %v690, 0.0
    %vm765 = vcmp.ge.f32.partialorder %v693, 0.0
    %vm766 = vcmp.ge.f32.partialorder %v698, 0.0
    %vm767 = vcmp.ge.f32.partialorder %v701, 0.0
    %v768 = vmul.f32 %v450, 0.2
    %v769 = vmul.f32 %v453, 0.2
    %v770 = vmul.f32 %v458, 0.2
    %v771 = vmul.f32 %v461, 0.2
    %v772 = vmul.f32 %v466, 0.2
    %v773 = vmul.f32 %v469, 0.2
    %v774 = vmul.f32 %v474, 0.2
    %v775 = vmul.f32 %v477, 0.2
    %v776 = vmul.f32 %v482, 0.2
    %v777 = vmul.f32 %v485, 0.2
    %v778 = vmul.f32 %v490, 0.2
    %v779 = vmul.f32 %v493, 0.2
    %v780 = vmul.f32 %v498, 0.2
    %v781 = vmul.f32 %v501, 0.2
    %v782 = vmul.f32 %v506, 0.2
    %v783 = vmul.f32 %v509, 0.2
    %v784 = vmul.f32 %v514, 0.2
    %v785 = vmul.f32 %v517, 0.2
    %v786 = vmul.f32 %v522, 0.2
    %v787 = vmul.f32 %v525, 0.2
    %v788 = vmul.f32 %v530, 0.2
    %v789 = vmul.f32 %v533, 0.2
    %v790 = vmul.f32 %v538, 0.2
    %v791 = vmul.f32 %v541, 0.2
    %v792 = vmul.f32 %v546, 0.2
    %v793 = vmul.f32 %v549, 0.2
    %v794 = vmul.f32 %v554, 0.2
    %v795 = vmul.f32 %v557, 0.2
    %v796 = vmul.f32 %v562, 0.2
    %v797 = vmul.f32 %v565, 0.2
    %v798 = vmul.f32 %v570, 0.2
    %v799 = vmul.f32 %v573, 0.2
    %v800 = vmul.f32 %v578, 0.2
    %v801 = vmul.f32 %v581, 0.2
    %v802 = vmul.f32 %v586, 0.2
    %v803 = vmul.f32 %v589, 0.2
    %v804 = vmul.f32 %v594, 0.2
    %v805 = vmul.f32 %v597, 0.2
    %v806 = vmul.f32 %v602, 0.2
    %v807 = vmul.f32 %v605, 0.2
    %v808 = vmul.f32 %v610, 0.2
    %v809 = vmul.f32 %v613, 0.2
    %v810 = vmul.f32 %v618, 0.2
    %v811 = vmul.f32 %v621, 0.2
    %v812 = vmul.f32 %v626, 0.2
    %v813 = vmul.f32 %v629, 0.2
    %v814 = vmul.f32 %v634, 0.2
    %v815 = vmul.f32 %v637, 0.2
    %v816 = vmul.f32 %v642, 0.2
    %v817 = vmul.f32 %v645, 0.2
    %v818 = vmul.f32 %v650, 0.2
    %v819 = vmul.f32 %v653, 0.2
    %v820 = vmul.f32 %v658, 0.2
    %v821 = vmul.f32 %v661, 0.2
    %v822 = vmul.f32 %v666, 0.2
    %v823 = vmul.f32 %v669, 0.2
    %v824 = vmul.f32 %v674, 0.2
    %v825 = vmul.f32 %v677, 0.2
    %v826 = vmul.f32 %v682, 0.2
    %v827 = vmul.f32 %v685, 0.2
    %v828 = vmul.f32 %v690, 0.2
    %v829 = vmul.f32 %v693, 0.2
    %v830 = vmul.f32 %v698, 0.2
    %v831 = vmul.f32 %v701, 0.2
    %v832 = vsel %vm704, %v450, %v768
    %v833 = vsel %vm705, %v453, %v769
    %v834 = vsel %vm706, %v458, %v770
    %v835 = vsel %vm707, %v461, %v771
    %v836 = vsel %vm708, %v466, %v772
    %v837 = vsel %vm709, %v469, %v773
    %v838 = vsel %vm710, %v474, %v774
    %v839 = vsel %vm711, %v477, %v775
    %v840 = vsel %vm712, %v482, %v776
    %v841 = vsel %vm713, %v485, %v777
    %v842 = vsel %vm714, %v490, %v778
    %v843 = vsel %vm715, %v493, %v779
    %v844 = vsel %vm716, %v498, %v780
    %v845 = vsel %vm717, %v501, %v781
    %v846 = vsel %vm718, %v506, %v782
    %v847 = vsel %vm719, %v509, %v783
    %v848 = vsel %vm720, %v514, %v784
    %v849 = vsel %vm721, %v517, %v785
    %v850 = vsel %vm722, %v522, %v786
    %v851 = vsel %vm723, %v525, %v787
    %v852 = vsel %vm724, %v530, %v788
    %v853 = vsel %vm725, %v533, %v789
    %v854 = vsel %vm726, %v538, %v790
    %v855 = vsel %vm727, %v541, %v791
    %v856 = vsel %vm728, %v546, %v792
    %v857 = vsel %vm729, %v549, %v793
    %v858 = vsel %vm730, %v554, %v794
    %v859 = vsel %vm731, %v557, %v795
    %v860 = vsel %vm732, %v562, %v796
    %v861 = vsel %vm733, %v565, %v797
    %v862 = vsel %vm734, %v570, %v798
    %v863 = vsel %vm735, %v573, %v799
    %v864 = vsel %vm736, %v578, %v800
    %v865 = vsel %vm737, %v581, %v801
    %v866 = vsel %vm738, %v586, %v802
    %v867 = vsel %vm739, %v589, %v803
    %v868 = vsel %vm740, %v594, %v804
    %v869 = vsel %vm741, %v597, %v805
    %v870 = vsel %vm742, %v602, %v806
    %v871 = vsel %vm743, %v605, %v807
    %v872 = vsel %vm744, %v610, %v808
    %v873 = vsel %vm745, %v613, %v809
    %v874 = vsel %vm746, %v618, %v810
    %v875 = vsel %vm747, %v621, %v811
    %v876 = vsel %vm748, %v626, %v812
    %v877 = vsel %vm749, %v629, %v813
    %v878 = vsel %vm750, %v634, %v814
    %v879 = vsel %vm751, %v637, %v815
    %v880 = vsel %vm752, %v642, %v816
    %v881 = vsel %vm753, %v645, %v817
    %v882 = vsel %vm754, %v650, %v818
    %v883 = vsel %vm755, %v653, %v819
    %v884 = vsel %vm756, %v658, %v820
    %v885 = vsel %vm757, %v661, %v821
    %v886 = vsel %vm758, %v666, %v822
    %v887 = vsel %vm759, %v669, %v823
    %v888 = vsel %vm760, %v674, %v824
    %v889 = vsel %vm761, %v677, %v825
    %v890 = vsel %vm762, %v682, %v826
    %v891 = vsel %vm763, %v685, %v827
    %v892 = vsel %vm764, %v690, %v828
    %v893 = vsel %vm765, %v693, %v829
    %v894 = vsel %vm766, %v698, %v830
    %v895 = vsel %vm767, %v701, %v831
    %v896 = vpack.c.bf16 %v833, %v832
    %v897 = vpack.c.bf16 %v835, %v834
    %v898 = vpack.c.bf16 %v837, %v836
    %v899 = vpack.c.bf16 %v839, %v838
    %v900 = vpack.c.bf16 %v841, %v840
    %v901 = vpack.c.bf16 %v843, %v842
    %v902 = vpack.c.bf16 %v845, %v844
    %v903 = vpack.c.bf16 %v847, %v846
    %v904 = vpack.c.bf16 %v849, %v848
    %v905 = vpack.c.bf16 %v851, %v850
    %v906 = vpack.c.bf16 %v853, %v852
    %v907 = vpack.c.bf16 %v855, %v854
    %v908 = vpack.c.bf16 %v857, %v856
    %v909 = vpack.c.bf16 %v859, %v858
    %v910 = vpack.c.bf16 %v861, %v860
    %v911 = vpack.c.bf16 %v863, %v862
    %v912 = vpack.c.bf16 %v865, %v864
    %v913 = vpack.c.bf16 %v867, %v866
    %v914 = vpack.c.bf16 %v869, %v868
    %v915 = vpack.c.bf16 %v871, %v870
    %v916 = vpack.c.bf16 %v873, %v872
    %v917 = vpack.c.bf16 %v875, %v874
    %v918 = vpack.c.bf16 %v877, %v876
    %v919 = vpack.c.bf16 %v879, %v878
    %v920 = vpack.c.bf16 %v881, %v880
    %v921 = vpack.c.bf16 %v883, %v882
    %v922 = vpack.c.bf16 %v885, %v884
    %v923 = vpack.c.bf16 %v887, %v886
    %v924 = vpack.c.bf16 %v889, %v888
    %v925 = vpack.c.bf16 %v891, %v890
    %v926 = vpack.c.bf16 %v893, %v892
    %v927 = vpack.c.bf16 %v895, %v894
    %v960 = vunpack.c.l.b16 %v896
    %v961 = vunpack.c.h.b16 %v896
    %v962 = vunpack.c.l.b16 %v897
    %v963 = vunpack.c.h.b16 %v897
    %v964 = vunpack.c.l.b16 %v898
    %v965 = vunpack.c.h.b16 %v898
    %v966 = vunpack.c.l.b16 %v899
    %v967 = vunpack.c.h.b16 %v899
    %v968 = vunpack.c.l.b16 %v900
    %v969 = vunpack.c.h.b16 %v900
    %v970 = vunpack.c.l.b16 %v901
    %v971 = vunpack.c.h.b16 %v901
    %v972 = vunpack.c.l.b16 %v902
    %v973 = vunpack.c.h.b16 %v902
    %v974 = vunpack.c.l.b16 %v903
    %v975 = vunpack.c.h.b16 %v903
    %v976 = vunpack.c.l.b16 %v904
    %v977 = vunpack.c.h.b16 %v904
    %v978 = vunpack.c.l.b16 %v905
    %v979 = vunpack.c.h.b16 %v905
    %v980 = vunpack.c.l.b16 %v906
    %v981 = vunpack.c.h.b16 %v906
    %v982 = vunpack.c.l.b16 %v907
    %v983 = vunpack.c.h.b16 %v907
    %v984 = vunpack.c.l.b16 %v908
    %v985 = vunpack.c.h.b16 %v908
    %v986 = vunpack.c.l.b16 %v909
    %v987 = vunpack.c.h.b16 %v909
    %v988 = vunpack.c.l.b16 %v910
    %v989 = vunpack.c.h.b16 %v910
    %v990 = vunpack.c.l.b16 %v911
    %v991 = vunpack.c.h.b16 %v911
    %v992 = vunpack.c.l.b16 %v912
    %v993 = vunpack.c.h.b16 %v912
    %v994 = vunpack.c.l.b16 %v913
    %v995 = vunpack.c.h.b16 %v913
    %v996 = vunpack.c.l.b16 %v914
    %v997 = vunpack.c.h.b16 %v914
    %v998 = vunpack.c.l.b16 %v915
    %v999 = vunpack.c.h.b16 %v915
    %v1000 = vunpack.c.l.b16 %v916
    %v1001 = vunpack.c.h.b16 %v916
    %v1002 = vunpack.c.l.b16 %v917
    %v1003 = vunpack.c.h.b16 %v917
    %v1004 = vunpack.c.l.b16 %v918
    %v1005 = vunpack.c.h.b16 %v918
    %v1006 = vunpack.c.l.b16 %v919
    %v1007 = vunpack.c.h.b16 %v919
    %v1008 = vunpack.c.l.b16 %v920
    %v1009 = vunpack.c.h.b16 %v920
    %v1010 = vunpack.c.l.b16 %v921
    %v1011 = vunpack.c.h.b16 %v921
    %v1012 = vunpack.c.l.b16 %v922
    %v1013 = vunpack.c.h.b16 %v922
    %v1014 = vunpack.c.l.b16 %v923
    %v1015 = vunpack.c.h.b16 %v923
    %v1016 = vunpack.c.l.b16 %v924
    %v1017 = vunpack.c.h.b16 %v924
    %v1018 = vunpack.c.l.b16 %v925
    %v1019 = vunpack.c.h.b16 %v925
    %v1020 = vunpack.c.l.b16 %v926
    %v1021 = vunpack.c.h.b16 %v926
    %v1022 = vunpack.c.l.b16 %v927
    %v1023 = vunpack.c.h.b16 %v927
    %v1024 = vpack.c.b16 %v960, %v960
    %v1025 = vpack.c.b16 %v961, %v961
    %v1026 = vpack.c.b16 %v962, %v962
    %v1027 = vpack.c.b16 %v963, %v963
    %v1028 = vpack.c.b16 %v964, %v964
    %v1029 = vpack.c.b16 %v965, %v965
    %v1030 = vpack.c.b16 %v966, %v966
    %v1031 = vpack.c.b16 %v967, %v967
    %v1032 = vpack.c.b16 %v968, %v968
    %v1033 = vpack.c.b16 %v969, %v969
    %v1034 = vpack.c.b16 %v970, %v970
    %v1035 = vpack.c.b16 %v971, %v971
    %v1036 = vpack.c.b16 %v972, %v972
    %v1037 = vpack.c.b16 %v973, %v973
    %v1038 = vpack.c.b16 %v974, %v974
    %v1039 = vpack.c.b16 %v975, %v975
    %v1040 = vpack.c.b16 %v976, %v976
    %v1041 = vpack.c.b16 %v977, %v977
    %v1042 = vpack.c.b16 %v978, %v978
    %v1043 = vpack.c.b16 %v979, %v979
    %v1044 = vpack.c.b16 %v980, %v980
    %v1045 = vpack.c.b16 %v981, %v981
    %v1046 = vpack.c.b16 %v982, %v982
    %v1047 = vpack.c.b16 %v983, %v983
    %v1048 = vpack.c.b16 %v984, %v984
    %v1049 = vpack.c.b16 %v985, %v985
    %v1050 = vpack.c.b16 %v986, %v986
    %v1051 = vpack.c.b16 %v987, %v987
    %v1052 = vpack.c.b16 %v988, %v988
    %v1053 = vpack.c.b16 %v989, %v989
    %v1054 = vpack.c.b16 %v990, %v990
    %v1055 = vpack.c.b16 %v991, %v991
    %v1056 = vpack.c.b16 %v992, %v992
    %v1057 = vpack.c.b16 %v993, %v993
    %v1058 = vpack.c.b16 %v994, %v994
    %v1059 = vpack.c.b16 %v995, %v995
    %v1060 = vpack.c.b16 %v996, %v996
    %v1061 = vpack.c.b16 %v997, %v997
    %v1062 = vpack.c.b16 %v998, %v998
    %v1063 = vpack.c.b16 %v999, %v999
    %v1064 = vpack.c.b16 %v1000, %v1000
    %v1065 = vpack.c.b16 %v1001, %v1001
    %v1066 = vpack.c.b16 %v1002, %v1002
    %v1067 = vpack.c.b16 %v1003, %v1003
    %v1068 = vpack.c.b16 %v1004, %v1004
    %v1069 = vpack.c.b16 %v1005, %v1005
    %v1070 = vpack.c.b16 %v1006, %v1006
    %v1071 = vpack.c.b16 %v1007, %v1007
    %v1072 = vpack.c.b16 %v1008, %v1008
    %v1073 = vpack.c.b16 %v1009, %v1009
    %v1074 = vpack.c.b16 %v1010, %v1010
    %v1075 = vpack.c.b16 %v1011, %v1011
    %v1076 = vpack.c.b16 %v1012, %v1012
    %v1077 = vpack.c.b16 %v1013, %v1013
    %v1078 = vpack.c.b16 %v1014, %v1014
    %v1079 = vpack.c.b16 %v1015, %v1015
    %v1080 = vpack.c.b16 %v1016, %v1016
    %v1081 = vpack.c.b16 %v1017, %v1017
    %v1082 = vpack.c.b16 %v1018, %v1018
    %v1083 = vpack.c.b16 %v1019, %v1019
    %v1084 = vpack.c.b16 %v1020, %v1020
    %v1085 = vpack.c.b16 %v1021, %v1021
    %v1086 = vpack.c.b16 %v1022, %v1022
    %v1087 = vpack.c.b16 %v1023, %v1023
    %vm1152 = vcmask 60416
    %1153 = vst.msk [vmem:[#allocation8] sm:$0xf] %vm1152, %v1024
    %1154 = vst.msk [vmem:[#allocation8 + $0x4] sm:$0xf] %vm1152, %v1025
    %1155 = vst.msk [vmem:[#allocation8 + $0x8] sm:$0xf] %vm1152, %v1026
    %1156 = vst.msk [vmem:[#allocation8 + $0xc] sm:$0xf] %vm1152, %v1027
    %1157 = vst.msk [vmem:[#allocation8 + $0x10] sm:$0xf] %vm1152, %v1028
    %1158 = vst.msk [vmem:[#allocation8 + $0x14] sm:$0xf] %vm1152, %v1029
    %1159 = vst.msk [vmem:[#allocation8 + $0x18] sm:$0xf] %vm1152, %v1030
    %1160 = vst.msk [vmem:[#allocation8 + $0x1c] sm:$0xf] %vm1152, %v1031
    %1161 = vst.msk [vmem:[#allocation8 + $0x20] sm:$0xf] %vm1152, %v1032
    %1162 = vst.msk [vmem:[#allocation8 + $0x24] sm:$0xf] %vm1152, %v1033
    %1163 = vst.msk [vmem:[#allocation8 + $0x28] sm:$0xf] %vm1152, %v1034
    %1164 = vst.msk [vmem:[#allocation8 + $0x2c] sm:$0xf] %vm1152, %v1035
    %1165 = vst.msk [vmem:[#allocation8 + $0x30] sm:$0xf] %vm1152, %v1036
    %1166 = vst.msk [vmem:[#allocation8 + $0x34] sm:$0xf] %vm1152, %v1037
    %1167 = vst.msk [vmem:[#allocation8 + $0x38] sm:$0xf] %vm1152, %v1038
    %1168 = vst.msk [vmem:[#allocation8 + $0x3c] sm:$0xf] %vm1152, %v1039
    %1169 = vst.msk [vmem:[#allocation8 + $0x40] sm:$0xf] %vm1152, %v1040
    %1170 = vst.msk [vmem:[#allocation8 + $0x44] sm:$0xf] %vm1152, %v1041
    %1171 = vst.msk [vmem:[#allocation8 + $0x48] sm:$0xf] %vm1152, %v1042
    %1172 = vst.msk [vmem:[#allocation8 + $0x4c] sm:$0xf] %vm1152, %v1043
    %1173 = vst.msk [vmem:[#allocation8 + $0x50] sm:$0xf] %vm1152, %v1044
    %1174 = vst.msk [vmem:[#allocation8 + $0x54] sm:$0xf] %vm1152, %v1045
    %1175 = vst.msk [vmem:[#allocation8 + $0x58] sm:$0xf] %vm1152, %v1046
    %1176 = vst.msk [vmem:[#allocation8 + $0x5c] sm:$0xf] %vm1152, %v1047
    %1177 = vst.msk [vmem:[#allocation8 + $0x60] sm:$0xf] %vm1152, %v1048
    %1178 = vst.msk [vmem:[#allocation8 + $0x64] sm:$0xf] %vm1152, %v1049
    %1179 = vst.msk [vmem:[#allocation8 + $0x68] sm:$0xf] %vm1152, %v1050
    %1180 = vst.msk [vmem:[#allocation8 + $0x6c] sm:$0xf] %vm1152, %v1051
    %1181 = vst.msk [vmem:[#allocation8 + $0x70] sm:$0xf] %vm1152, %v1052
    %1182 = vst.msk [vmem:[#allocation8 + $0x74] sm:$0xf] %vm1152, %v1053
    %1183 = vst.msk [vmem:[#allocation8 + $0x78] sm:$0xf] %vm1152, %v1054
    %1184 = vst.msk [vmem:[#allocation8 + $0x7c] sm:$0xf] %vm1152, %v1055
    %1185 = vst.msk [vmem:[#allocation8 + $0x80] sm:$0xf] %vm1152, %v1056
    %1186 = vst.msk [vmem:[#allocation8 + $0x84] sm:$0xf] %vm1152, %v1057
    %1187 = vst.msk [vmem:[#allocation8 + $0x88] sm:$0xf] %vm1152, %v1058
    %1188 = vst.msk [vmem:[#allocation8 + $0x8c] sm:$0xf] %vm1152, %v1059
    %1189 = vst.msk [vmem:[#allocation8 + $0x90] sm:$0xf] %vm1152, %v1060
    %1190 = vst.msk [vmem:[#allocation8 + $0x94] sm:$0xf] %vm1152, %v1061
    %1191 = vst.msk [vmem:[#allocation8 + $0x98] sm:$0xf] %vm1152, %v1062
    %1192 = vst.msk [vmem:[#allocation8 + $0x9c] sm:$0xf] %vm1152, %v1063
    %1193 = vst.msk [vmem:[#allocation8 + $0xa0] sm:$0xf] %vm1152, %v1064
    %1194 = vst.msk [vmem:[#allocation8 + $0xa4] sm:$0xf] %vm1152, %v1065
    %1195 = vst.msk [vmem:[#allocation8 + $0xa8] sm:$0xf] %vm1152, %v1066
    %1196 = vst.msk [vmem:[#allocation8 + $0xac] sm:$0xf] %vm1152, %v1067
    %1197 = vst.msk [vmem:[#allocation8 + $0xb0] sm:$0xf] %vm1152, %v1068
    %1198 = vst.msk [vmem:[#allocation8 + $0xb4] sm:$0xf] %vm1152, %v1069
    %1199 = vst.msk [vmem:[#allocation8 + $0xb8] sm:$0xf] %vm1152, %v1070
    %1200 = vst.msk [vmem:[#allocation8 + $0xbc] sm:$0xf] %vm1152, %v1071
    %1201 = vst.msk [vmem:[#allocation8 + $0xc0] sm:$0xf] %vm1152, %v1072
    %1202 = vst.msk [vmem:[#allocation8 + $0xc4] sm:$0xf] %vm1152, %v1073
    %1203 = vst.msk [vmem:[#allocation8 + $0xc8] sm:$0xf] %vm1152, %v1074
    %1204 = vst.msk [vmem:[#allocation8 + $0xcc] sm:$0xf] %vm1152, %v1075
    %1205 = vst.msk [vmem:[#allocation8 + $0xd0] sm:$0xf] %vm1152, %v1076
    %1206 = vst.msk [vmem:[#allocation8 + $0xd4] sm:$0xf] %vm1152, %v1077
    %1207 = vst.msk [vmem:[#allocation8 + $0xd8] sm:$0xf] %vm1152, %v1078
    %1208 = vst.msk [vmem:[#allocation8 + $0xdc] sm:$0xf] %vm1152, %v1079
    %1209 = vst.msk [vmem:[#allocation8 + $0xe0] sm:$0xf] %vm1152, %v1080
    %1210 = vst.msk [vmem:[#allocation8 + $0xe4] sm:$0xf] %vm1152, %v1081
    %1211 = vst.msk [vmem:[#allocation8 + $0xe8] sm:$0xf] %vm1152, %v1082
    %1212 = vst.msk [vmem:[#allocation8 + $0xec] sm:$0xf] %vm1152, %v1083
    %1213 = vst.msk [vmem:[#allocation8 + $0xf0] sm:$0xf] %vm1152, %v1084
    %1214 = vst.msk [vmem:[#allocation8 + $0xf4] sm:$0xf] %vm1152, %v1085
    %1215 = vst.msk [vmem:[#allocation8 + $0xf8] sm:$0xf] %vm1152, %v1086
    %1216 = vst.msk [vmem:[#allocation8 + $0xfc] sm:$0xf] %vm1152, %v1087
    // Predicated region
    $region26: #{discriminator_forward.8} parent=1 // pred_check
      _
    $region27: #{discriminator_forward.8} parent=1 // pred_check_branch
      %1218 = sbr.rel (0) target = $region29
    $region28: #{discriminator_forward.8} parent=1 // pred_region
      %s1220 = ssub.s32 4096, 4096
      %1221 = vsyncadd [#allocation4], %s1220
      %s1222 = sshll.u32 [#allocation8], 4
      %s1223 = int_to_ptr.vmem [resolvable:$true] %s1222
      %1228 = dma.vmem_to_hbm [thread:$0]  %s1223, 4096, %s3, [#allocation4], 64, 64, 4
    $region29: #{discriminator_forward.8} parent=1 // pred_fallthru
      _
    // Predicated region
    $region30: #{discriminator_forward.8} parent=1 // pred_check
      _
    $region31: #{discriminator_forward.8} parent=1 // pred_check_branch
      %1230 = sbr.rel (0) target = $region33
    $region32: #{discriminator_forward.8} parent=1 // pred_region
      %1231 = dma.done [#allocation4], 4096
    $region33: #{discriminator_forward.8} parent=1 // pred_fallthru
      _
    %1232 = vsyncpa [#allocation3], 1
    %1233 = vsyncpa [#allocation6], 1
    %1234 = vsyncpa [#allocation4], 1

// kernel: discriminator_forward.9
$region0: #{discriminator_forward.9}
  #allocation0 [shape = 'u32[]', space=smem, size = 0x4, offset = 0x4, fixed_abs, tag = 'smem constant byte address 0x4 - core index']
  #allocation1 [shape = 'u32[144,128]{1,0:T(1,128)}', space=vmem, size = 0x12000, scoped, tag = 'internal scratch']
  %s0 = inlined_call_operand.hbm [shape: bf16[128,128], index: 0, kind: input, shape index: {}]
  %s1 = inlined_call_operand.hbm [shape: bf16[128,16], index: 1, kind: input, shape index: {}]
  %s2 = inlined_call_operand.hbm [shape: f32[1,16], index: 2, kind: input, shape index: {}]
  %s3 = inlined_call_operand.hbm [shape: bf16[128,16], index: 3, kind: output, shape index: {0}]
  %s4 = inlined_call_operand.hbm [shape: f32[1,2,16], index: 4, kind: output, shape index: {1}]
  %5 = xla_tuple %s3, %s4
  %s6 = sld [smem:[#allocation0]]
  $region42: #{discriminator_forward.9} parent=0
    _
  %s8 = ssub.s32 1, %s6
  %s9 = scalar_select 0, %s8, %s6
  $region1: #{discriminator_forward.9} parent=0
    #allocation2 [shape = 'u8[32768]{0}', space=vmem, size = 0x8000, scoped, tag = 'input window, operand 0, single buffered']
    #allocation3 [shape = 's32[1]{0}', space=sflag, size = 0x4, scoped, tag = 'scoped memory for discriminator_forward.9']
    #allocation4 [shape = 's32[1]{0}', space=sflag, size = 0x4, scoped, tag = 'scoped memory for discriminator_forward.9']
    #allocation5 [shape = 'u8[32768]{0}', space=vmem, size = 0x8000, scoped, tag = 'input window, operand 1, single buffered']
    #allocation6 [shape = 's32[1]{0}', space=sflag, size = 0x4, scoped, tag = 'scoped memory for discriminator_forward.9']
    #allocation7 [shape = 'u8[512]{0}', space=vmem, size = 0x400, scoped, tag = 'input window, operand 2, single buffered']
    #allocation8 [shape = 'u8[32768]{0}', space=vmem, size = 0x8000, scoped, tag = 'output window, operand 0, single buffered']
    #allocation9 [shape = 'u8[1024]{0}', space=vmem, size = 0x400, scoped, tag = 'output window, operand 1, single buffered']
    #allocation10 [shape = 's32[1]{0}', space=sflag, size = 0x4, scoped, tag = 'scoped memory for discriminator_forward.9']
    %10 = vsyncpa [#allocation3], 0
    %11 = vsyncpa [#allocation6], 0
    %12 = vsyncpa [#allocation4], 0
    %13 = vsyncpa [#allocation10], 0
    // Predicated region
    $region2: #{discriminator_forward.9} parent=1 // pred_check
      _
    $region3: #{discriminator_forward.9} parent=1 // pred_check_branch
      %15 = sbr.rel (0) target = $region5
    $region4: #{discriminator_forward.9} parent=1 // pred_region
      %s17 = ssub.s32 1024, 1024
      %18 = vsyncadd [#allocation3], %s17
      %s19 = sshll.u32 [#allocation2], 4
      %s20 = int_to_ptr.vmem [resolvable:$true] %s19
      %25 = dma.hbm_to_vmem [thread:$0]  %s0, 1024, %s20, [#allocation3], 64, 64, 4
    $region5: #{discriminator_forward.9} parent=1 // pred_fallthru
      _
    // Predicated region
    $region6: #{discriminator_forward.9} parent=1 // pred_check
      _
    $region7: #{discriminator_forward.9} parent=1 // pred_check_branch
      %27 = sbr.rel (0) target = $region9
    $region8: #{discriminator_forward.9} parent=1 // pred_region
      %s29 = ssub.s32 1024, 1024
      %30 = vsyncadd [#allocation6], %s29
      %s31 = sshll.u32 [#allocation5], 4
      %s32 = int_to_ptr.vmem [resolvable:$true] %s31
      %37 = dma.hbm_to_vmem [thread:$0]  %s1, 1024, %s32, [#allocation6], 64, 64, 4
    $region9: #{discriminator_forward.9} parent=1 // pred_fallthru
      _
    // Predicated region
    $region10: #{discriminator_forward.9} parent=1 // pred_check
      _
    $region11: #{discriminator_forward.9} parent=1 // pred_check_branch
      %39 = sbr.rel (0) target = $region13
    $region12: #{discriminator_forward.9} parent=1 // pred_region
      %s41 = ssub.s32 16, 16
      %42 = vsyncadd [#allocation6], %s41
      %s44 = sshll.u32 [#allocation7], 4
      %s45 = int_to_ptr.vmem [resolvable:$true] %s44
      %47 = dma.hbm_to_vmem [thread:$0]  %s2, 16, %s45, [#allocation6]
    $region13: #{discriminator_forward.9} parent=1 // pred_fallthru
      _
    // Predicated region
    $region14: #{discriminator_forward.9} parent=1 // pred_check
      _
    $region15: #{discriminator_forward.9} parent=1 // pred_check_branch
      %49 = sbr.rel (0) target = $region17
    $region16: #{discriminator_forward.9} parent=1 // pred_region
      %50 = dma.done [#allocation3], 1024
    $region17: #{discriminator_forward.9} parent=1 // pred_fallthru
      _
    // Predicated region
    $region18: #{discriminator_forward.9} parent=1 // pred_check
      _
    $region19: #{discriminator_forward.9} parent=1 // pred_check_branch
      %52 = sbr.rel (0) target = $region21
    $region20: #{discriminator_forward.9} parent=1 // pred_region
      %53 = dma.done [#allocation6], 1024
    $region21: #{discriminator_forward.9} parent=1 // pred_fallthru
      _
    // Predicated region
    $region22: #{discriminator_forward.9} parent=1 // pred_check
      _
    $region23: #{discriminator_forward.9} parent=1 // pred_check_branch
      %55 = sbr.rel (0) target = $region25
    $region24: #{discriminator_forward.9} parent=1 // pred_region
      %56 = dma.done [#allocation6], 16
    $region25: #{discriminator_forward.9} parent=1 // pred_fallthru
      _
    %v58 = vld [vmem:[#allocation2] sm:$0xf]
    %v59 = vld [vmem:[#allocation2 + $0x4] sm:$0xf]
    %v60 = vld [vmem:[#allocation2 + $0x8] sm:$0xf]
    %v61 = vld [vmem:[#allocation2 + $0xc] sm:$0xf]
    %v62 = vld [vmem:[#allocation2 + $0x10] sm:$0xf]
    %v63 = vld [vmem:[#allocation2 + $0x14] sm:$0xf]
    %v64 = vld [vmem:[#allocation2 + $0x18] sm:$0xf]
    %v65 = vld [vmem:[#allocation2 + $0x1c] sm:$0xf]
    %v66 = vld [vmem:[#allocation2 + $0x20] sm:$0xf]
    %v67 = vld [vmem:[#allocation2 + $0x24] sm:$0xf]
    %v68 = vld [vmem:[#allocation2 + $0x28] sm:$0xf]
    %v69 = vld [vmem:[#allocation2 + $0x2c] sm:$0xf]
    %v70 = vld [vmem:[#allocation2 + $0x30] sm:$0xf]
    %v71 = vld [vmem:[#allocation2 + $0x34] sm:$0xf]
    %v72 = vld [vmem:[#allocation2 + $0x38] sm:$0xf]
    %v73 = vld [vmem:[#allocation2 + $0x3c] sm:$0xf]
    %v74 = vld [vmem:[#allocation5] sm:$0xf]
    %v75 = vld [vmem:[#allocation5 + $0x4] sm:$0xf]
    %v76 = vld [vmem:[#allocation5 + $0x8] sm:$0xf]
    %v77 = vld [vmem:[#allocation5 + $0xc] sm:$0xf]
    %v78 = vld [vmem:[#allocation5 + $0x10] sm:$0xf]
    %v79 = vld [vmem:[#allocation5 + $0x14] sm:$0xf]
    %v80 = vld [vmem:[#allocation5 + $0x18] sm:$0xf]
    %v81 = vld [vmem:[#allocation5 + $0x1c] sm:$0xf]
    %v82 = vld [vmem:[#allocation5 + $0x20] sm:$0xf]
    %v83 = vld [vmem:[#allocation5 + $0x24] sm:$0xf]
    %v84 = vld [vmem:[#allocation5 + $0x28] sm:$0xf]
    %v85 = vld [vmem:[#allocation5 + $0x2c] sm:$0xf]
    %v86 = vld [vmem:[#allocation5 + $0x30] sm:$0xf]
    %v87 = vld [vmem:[#allocation5 + $0x34] sm:$0xf]
    %v88 = vld [vmem:[#allocation5 + $0x38] sm:$0xf]
    %v89 = vld [vmem:[#allocation5 + $0x3c] sm:$0xf]
    %v90 = vld [vmem:[#allocation7] sm:$0x1]
    %v92 = vlaneseq
    %v93 = vshrl.u32 %v92, 7
    %v94 = vsub.s32 0, %v93
    %v95 = vrot.slane %v90, %v94
    %v113 = vunpack.c.l.b16 %v58
    %v114 = vunpack.c.l.b16 %v59
    %v115 = vunpack.c.l.b16 %v60
    %v116 = vunpack.c.l.b16 %v61
    %v117 = vunpack.c.l.b16 %v62
    %v118 = vunpack.c.l.b16 %v63
    %v119 = vunpack.c.l.b16 %v64
    %v120 = vunpack.c.l.b16 %v65
    %v121 = vunpack.c.l.b16 %v66
    %v122 = vunpack.c.l.b16 %v67
    %v123 = vunpack.c.l.b16 %v68
    %v124 = vunpack.c.l.b16 %v69
    %v125 = vunpack.c.l.b16 %v70
    %v126 = vunpack.c.l.b16 %v71
    %v127 = vunpack.c.l.b16 %v72
    %v128 = vunpack.c.l.b16 %v73
    %v129 = vpack.c.b16 %v114, %v113
    %v130 = vpack.c.b16 %v116, %v115
    %v131 = vpack.c.b16 %v118, %v117
    %v132 = vpack.c.b16 %v120, %v119
    %v133 = vpack.c.b16 %v122, %v121
    %v134 = vpack.c.b16 %v124, %v123
    %v135 = vpack.c.b16 %v126, %v125
    %v136 = vpack.c.b16 %v128, %v127
    %v161 = vunpack.c.l.b16 %v74
    %v162 = vunpack.c.l.b16 %v75
    %v163 = vunpack.c.l.b16 %v76
    %v164 = vunpack.c.l.b16 %v77
    %v165 = vunpack.c.l.b16 %v78
    %v166 = vunpack.c.l.b16 %v79
    %v167 = vunpack.c.l.b16 %v80
    %v168 = vunpack.c.l.b16 %v81
    %v169 = vunpack.c.l.b16 %v82
    %v170 = vunpack.c.l.b16 %v83
    %v171 = vunpack.c.l.b16 %v84
    %v172 = vunpack.c.l.b16 %v85
    %v173 = vunpack.c.l.b16 %v86
    %v174 = vunpack.c.l.b16 %v87
    %v175 = vunpack.c.l.b16 %v88
    %v176 = vunpack.c.l.b16 %v89
    %v177 = vpack.c.b16 %v162, %v161
    %v178 = vpack.c.b16 %v164, %v163
    %v179 = vpack.c.b16 %v166, %v165
    %v180 = vpack.c.b16 %v168, %v167
    %v181 = vpack.c.b16 %v170, %v169
    %v182 = vpack.c.b16 %v172, %v171
    %v183 = vpack.c.b16 %v174, %v173
    %v184 = vpack.c.b16 %v176, %v175
    %193 = vmatprep.subr.bf16.mxu0 0
    %194 = vmatpush1.bf16.msra.mxu0 %v177
    %195 = vmatprep.subr.bf16.mxu0 0
    %196 = vmatpush1.bf16.msra.mxu0 %v178
    %197 = vmatprep.subr.bf16.mxu0 0
    %198 = vmatpush1.bf16.msra.mxu0 %v179
    %199 = vmatprep.subr.bf16.mxu0 0
    %200 = vmatpush1.bf16.msra.mxu0 %v180
    %201 = vmatprep.subr.bf16.mxu0 0
    %202 = vmatpush1.bf16.msra.mxu0 %v181
    %203 = vmatprep.subr.bf16.mxu0 0
    %204 = vmatpush1.bf16.msra.mxu0 %v182
    %205 = vmatprep.subr.bf16.mxu0 0
    %206 = vmatpush1.bf16.msra.mxu0 %v183
    %207 = vmatprep.subr.bf16.mxu0 0
    %208 = vmatpush1.bf16.msra.mxu0 %v184
    %209 = vmatprep.subr.bf16.mxu0 0
    %210 = vmatpush1.bf16.msra.mxu0 0
    %211 = vmatprep.subr.bf16.mxu0 0
    %212 = vmatpush1.bf16.msra.mxu0 0
    %213 = vmatprep.subr.bf16.mxu0 0
    %214 = vmatpush1.bf16.msra.mxu0 0
    %215 = vmatprep.subr.bf16.mxu0 0
    %216 = vmatpush1.bf16.msra.mxu0 0
    %217 = vmatprep.subr.bf16.mxu0 0
    %218 = vmatpush1.bf16.msra.mxu0 0
    %219 = vmatprep.subr.bf16.mxu0 0
    %220 = vmatpush1.bf16.msra.mxu0 0
    %221 = vmatprep.subr.bf16.mxu0 0
    %222 = vmatpush1.bf16.msra.mxu0 0
    %223 = vmatprep.subr.bf16.mxu0 0
    %224 = vmatpush1.bf16.msra.mxu0 0
    %225 = vmatprep.mubr.bf16.mxu0 0
    %226 = vmatmul.mubr.bf16.gmra.mrb[0].mxu0 %v129
    %v227 = vpop.f32.mrb[0].mxu0
    %v228 = vadd.f32 %v95, %v227
    %v229 = vpop.f32.mrb[0].mxu0
    %v230 = vpop.f32.mrb[0].mxu0
    %v231 = vadd.f32 %v95, %v230
    %v232 = vpop.f32.mrb[0].mxu0
    %233 = vmatprep.mubr.bf16.mxu0 0
    %234 = vmatmul.mubr.bf16.gmra.mrb[0].mxu0 %v130
    %v235 = vpop.f32.mrb[0].mxu0
    %v236 = vadd.f32 %v95, %v235
    %v237 = vpop.f32.mrb[0].mxu0
    %v238 = vpop.f32.mrb[0].mxu0
    %v239 = vadd.f32 %v95, %v238
    %v240 = vpop.f32.mrb[0].mxu0
    %241 = vmatprep.mubr.bf16.mxu0 0
    %242 = vmatmul.mubr.bf16.gmra.mrb[0].mxu0 %v131
    %v243 = vpop.f32.mrb[0].mxu0
    %v244 = vadd.f32 %v95, %v243
    %v245 = vpop.f32.mrb[0].mxu0
    %v246 = vpop.f32.mrb[0].mxu0
    %v247 = vadd.f32 %v95, %v246
    %v248 = vpop.f32.mrb[0].mxu0
    %249 = vmatprep.mubr.bf16.mxu0 0
    %250 = vmatmul.mubr.bf16.gmra.mrb[0].mxu0 %v132
    %v251 = vpop.f32.mrb[0].mxu0
    %v252 = vadd.f32 %v95, %v251
    %v253 = vpop.f32.mrb[0].mxu0
    %v254 = vpop.f32.mrb[0].mxu0
    %v255 = vadd.f32 %v95, %v254
    %v256 = vpop.f32.mrb[0].mxu0
    %257 = vmatprep.mubr.bf16.mxu0 0
    %258 = vmatmul.mubr.bf16.gmra.mrb[0].mxu0 %v133
    %v259 = vpop.f32.mrb[0].mxu0
    %v260 = vadd.f32 %v95, %v259
    %v261 = vpop.f32.mrb[0].mxu0
    %v262 = vpop.f32.mrb[0].mxu0
    %v263 = vadd.f32 %v95, %v262
    %v264 = vpop.f32.mrb[0].mxu0
    %265 = vmatprep.mubr.bf16.mxu0 0
    %266 = vmatmul.mubr.bf16.gmra.mrb[0].mxu0 %v134
    %v267 = vpop.f32.mrb[0].mxu0
    %v268 = vadd.f32 %v95, %v267
    %v269 = vpop.f32.mrb[0].mxu0
    %v270 = vpop.f32.mrb[0].mxu0
    %v271 = vadd.f32 %v95, %v270
    %v272 = vpop.f32.mrb[0].mxu0
    %273 = vmatprep.mubr.bf16.mxu0 0
    %274 = vmatmul.mubr.bf16.gmra.mrb[0].mxu0 %v135
    %v275 = vpop.f32.mrb[0].mxu0
    %v276 = vadd.f32 %v95, %v275
    %v277 = vpop.f32.mrb[0].mxu0
    %v278 = vpop.f32.mrb[0].mxu0
    %v279 = vadd.f32 %v95, %v278
    %v280 = vpop.f32.mrb[0].mxu0
    %281 = vmatprep.mubr.bf16.mxu0 0
    %282 = vmatmul.mubr.bf16.gmra.mrb[0].mxu0 %v136
    %v283 = vpop.f32.mrb[0].mxu0
    %v284 = vadd.f32 %v95, %v283
    %v285 = vpop.f32.mrb[0].mxu0
    %v286 = vpop.f32.mrb[0].mxu0
    %v287 = vadd.f32 %v95, %v286
    %v288 = vpop.f32.mrb[0].mxu0
    %289 = vdwg.mxu0
    %v290 = vpack.c.bf16 %v231, %v228
    %v291 = vpack.c.bf16 %v239, %v236
    %v292 = vpack.c.bf16 %v247, %v244
    %v293 = vpack.c.bf16 %v255, %v252
    %v294 = vpack.c.bf16 %v263, %v260
    %v295 = vpack.c.bf16 %v271, %v268
    %v296 = vpack.c.bf16 %v279, %v276
    %v297 = vpack.c.bf16 %v287, %v284
    %v306 = vunpack.c.l.b16 %v290
    %v307 = vunpack.c.h.b16 %v290
    %v308 = vunpack.c.l.b16 %v291
    %v309 = vunpack.c.h.b16 %v291
    %v310 = vunpack.c.l.b16 %v292
    %v311 = vunpack.c.h.b16 %v292
    %v312 = vunpack.c.l.b16 %v293
    %v313 = vunpack.c.h.b16 %v293
    %v314 = vunpack.c.l.b16 %v294
    %v315 = vunpack.c.h.b16 %v294
    %v316 = vunpack.c.l.b16 %v295
    %v317 = vunpack.c.h.b16 %v295
    %v318 = vunpack.c.l.b16 %v296
    %v319 = vunpack.c.h.b16 %v296
    %v320 = vunpack.c.l.b16 %v297
    %v321 = vunpack.c.h.b16 %v297
    %v322 = vpack.c.b16 %v306, %v306
    %v323 = vpack.c.b16 %v307, %v307
    %v324 = vpack.c.b16 %v308, %v308
    %v325 = vpack.c.b16 %v309, %v309
    %v326 = vpack.c.b16 %v310, %v310
    %v327 = vpack.c.b16 %v311, %v311
    %v328 = vpack.c.b16 %v312, %v312
    %v329 = vpack.c.b16 %v313, %v313
    %v330 = vpack.c.b16 %v314, %v314
    %v331 = vpack.c.b16 %v315, %v315
    %v332 = vpack.c.b16 %v316, %v316
    %v333 = vpack.c.b16 %v317, %v317
    %v334 = vpack.c.b16 %v318, %v318
    %v335 = vpack.c.b16 %v319, %v319
    %v336 = vpack.c.b16 %v320, %v320
    %v337 = vpack.c.b16 %v321, %v321
    %vm354 = vcmask 125952
    %355 = vst.msk [vmem:[#allocation8] sm:$0xf] %vm354, %v322
    %356 = vst.msk [vmem:[#allocation8 + $0x4] sm:$0xf] %vm354, %v323
    %357 = vst.msk [vmem:[#allocation8 + $0x8] sm:$0xf] %vm354, %v324
    %358 = vst.msk [vmem:[#allocation8 + $0xc] sm:$0xf] %vm354, %v325
    %359 = vst.msk [vmem:[#allocation8 + $0x10] sm:$0xf] %vm354, %v326
    %360 = vst.msk [vmem:[#allocation8 + $0x14] sm:$0xf] %vm354, %v327
    %361 = vst.msk [vmem:[#allocation8 + $0x18] sm:$0xf] %vm354, %v328
    %362 = vst.msk [vmem:[#allocation8 + $0x1c] sm:$0xf] %vm354, %v329
    %363 = vst.msk [vmem:[#allocation8 + $0x20] sm:$0xf] %vm354, %v330
    %364 = vst.msk [vmem:[#allocation8 + $0x24] sm:$0xf] %vm354, %v331
    %365 = vst.msk [vmem:[#allocation8 + $0x28] sm:$0xf] %vm354, %v332
    %366 = vst.msk [vmem:[#allocation8 + $0x2c] sm:$0xf] %vm354, %v333
    %367 = vst.msk [vmem:[#allocation8 + $0x30] sm:$0xf] %vm354, %v334
    %368 = vst.msk [vmem:[#allocation8 + $0x34] sm:$0xf] %vm354, %v335
    %369 = vst.msk [vmem:[#allocation8 + $0x38] sm:$0xf] %vm354, %v336
    %370 = vst.msk [vmem:[#allocation8 + $0x3c] sm:$0xf] %vm354, %v337
    %v371 = vlaneseq
    %v372 = vshrl.u32 %v371, 7
    %v373 = vadd.s32 %v372, 8
    %v374 = vadd.s32 %v372, 16
    %v375 = vadd.s32 %v372, 24
    %v376 = vadd.s32 %v372, 32
    %v377 = vadd.s32 %v372, 40
    %v378 = vadd.s32 %v372, 48
    %v379 = vadd.s32 %v372, 56
    %v380 = vadd.s32 %v372, 64
    %v381 = vadd.s32 %v372, 72
    %v382 = vadd.s32 %v372, 80
    %v383 = vadd.s32 %v372, 88
    %v384 = vadd.s32 %v372, 96
    %v385 = vadd.s32 %v372, 104
    %v386 = vadd.s32 %v372, 112
    %v387 = vadd.s32 %v372, 120
    %s388 = smul.u32 0, 128
    %v389 = vstv %s388
    %v390 = vadd.s32 %v372, %v389
    %v391 = vadd.s32 %v373, %v389
    %v392 = vadd.s32 %v374, %v389
    %v393 = vadd.s32 %v375, %v389
    %v394 = vadd.s32 %v376, %v389
    %v395 = vadd.s32 %v377, %v389
    %v396 = vadd.s32 %v378, %v389
    %v397 = vadd.s32 %v379, %v389
    %v398 = vadd.s32 %v380, %v389
    %v399 = vadd.s32 %v381, %v389
    %v400 = vadd.s32 %v382, %v389
    %v401 = vadd.s32 %v383, %v389
    %v402 = vadd.s32 %v384, %v389
    %v403 = vadd.s32 %v385, %v389
    %v404 = vadd.s32 %v386, %v389
    %v405 = vadd.s32 %v387, %v389
    %vm406 = vcmp.lt.s32.totalorder %v390, 128
    %vm407 = vcmp.lt.s32.totalorder %v391, 128
    %vm408 = vcmp.lt.s32.totalorder %v392, 128
    %vm409 = vcmp.lt.s32.totalorder %v393, 128
    %vm410 = vcmp.lt.s32.totalorder %v394, 128
    %vm411 = vcmp.lt.s32.totalorder %v395, 128
    %vm412 = vcmp.lt.s32.totalorder %v396, 128
    %vm413 = vcmp.lt.s32.totalorder %v397, 128
    %vm414 = vcmp.lt.s32.totalorder %v398, 128
    %vm415 = vcmp.lt.s32.totalorder %v399, 128
    %vm416 = vcmp.lt.s32.totalorder %v400, 128
    %vm417 = vcmp.lt.s32.totalorder %v401, 128
    %vm418 = vcmp.lt.s32.totalorder %v402, 128
    %vm419 = vcmp.lt.s32.totalorder %v403, 128
    %vm420 = vcmp.lt.s32.totalorder %v404, 128
    %vm421 = vcmp.lt.s32.totalorder %v405, 128
    %v422 = vsel %vm406, 1, 0
    %v423 = vsel %vm407, 1, 0
    %v424 = vsel %vm408, 1, 0
    %v425 = vsel %vm409, 1, 0
    %v426 = vsel %vm410, 1, 0
    %v427 = vsel %vm411, 1, 0
    %v428 = vsel %vm412, 1, 0
    %v429 = vsel %vm413, 1, 0
    %v430 = vsel %vm414, 1, 0
    %v431 = vsel %vm415, 1, 0
    %v432 = vsel %vm416, 1, 0
    %v433 = vsel %vm417, 1, 0
    %v434 = vsel %vm418, 1, 0
    %v435 = vsel %vm419, 1, 0
    %v436 = vsel %vm420, 1, 0
    %v437 = vsel %vm421, 1, 0
    %vm438 = vcmp.eq.s32.totalorder %v422, 1
    %vm439 = vcmp.eq.s32.totalorder %v423, 1
    %vm440 = vcmp.eq.s32.totalorder %v424, 1
    %vm441 = vcmp.eq.s32.totalorder %v425, 1
    %vm442 = vcmp.eq.s32.totalorder %v426, 1
    %vm443 = vcmp.eq.s32.totalorder %v427, 1
    %vm444 = vcmp.eq.s32.totalorder %v428, 1
    %vm445 = vcmp.eq.s32.totalorder %v429, 1
    %vm446 = vcmp.eq.s32.totalorder %v430, 1
    %vm447 = vcmp.eq.s32.totalorder %v431, 1
    %vm448 = vcmp.eq.s32.totalorder %v432, 1
    %vm449 = vcmp.eq.s32.totalorder %v433, 1
    %vm450 = vcmp.eq.s32.totalorder %v434, 1
    %vm451 = vcmp.eq.s32.totalorder %v435, 1
    %vm452 = vcmp.eq.s32.totalorder %v436, 1
    %vm453 = vcmp.eq.s32.totalorder %v437, 1
    %v454 = vsel %vm438, %v228, 0.0
    %v455 = vsel %vm439, %v231, 0.0
    %v456 = vsel %vm440, %v236, 0.0
    %v457 = vsel %vm441, %v239, 0.0
    %v458 = vsel %vm442, %v244, 0.0
    %v459 = vsel %vm443, %v247, 0.0
    %v460 = vsel %vm444, %v252, 0.0
    %v461 = vsel %vm445, %v255, 0.0
    %v462 = vsel %vm446, %v260, 0.0
    %v463 = vsel %vm447, %v263, 0.0
    %v464 = vsel %vm448, %v268, 0.0
    %v465 = vsel %vm449, %v271, 0.0
    %v466 = vsel %vm450, %v276, 0.0
    %v467 = vsel %vm451, %v279, 0.0
    %v468 = vsel %vm452, %v284, 0.0
    %v469 = vsel %vm453, %v287, 0.0
    %vm470 = vcmask 130048
    %v471 = vsel %vm470, %v454, 0.0
    %v472 = vsel %vm470, %v455, 0.0
    %v473 = vadd.f32 %v471, %v472
    %v474 = vsel %vm470, %v456, 0.0
    %v475 = vadd.f32 %v473, %v474
    %v476 = vsel %vm470, %v457, 0.0
    %v477 = vadd.f32 %v475, %v476
    %v478 = vsel %vm470, %v458, 0.0
    %v479 = vadd.f32 %v477, %v478
    %v480 = vsel %vm470, %v459, 0.0
    %v481 = vadd.f32 %v479, %v480
    %v482 = vsel %vm470, %v460, 0.0
    %v483 = vadd.f32 %v481, %v482
    %v484 = vsel %vm470, %v461, 0.0
    %v485 = vadd.f32 %v483, %v484
    %v486 = vsel %vm470, %v462, 0.0
    %v487 = vadd.f32 %v485, %v486
    %v488 = vsel %vm470, %v463, 0.0
    %v489 = vadd.f32 %v487, %v488
    %v490 = vsel %vm470, %v464, 0.0
    %v491 = vadd.f32 %v489, %v490
    %v492 = vsel %vm470, %v465, 0.0
    %v493 = vadd.f32 %v491, %v492
    %v494 = vsel %vm470, %v466, 0.0
    %v495 = vadd.f32 %v493, %v494
    %v496 = vsel %vm470, %v467, 0.0
    %v497 = vadd.f32 %v495, %v496
    %v498 = vsel %vm470, %v468, 0.0
    %v499 = vadd.f32 %v497, %v498
    %v500 = vsel %vm470, %v469, 0.0
    %v501 = vadd.f32 %v499, %v500
    %v502 = vrot.slane %v501, 4
    %v503 = vadd.f32 %v501, %v502
    %v504 = vrot.slane %v503, 2
    %v505 = vadd.f32 %v503, %v504
    %v506 = vrot.slane %v505, 1
    %v507 = vadd.f32 %v505, %v506
    %vm508 = vcmask 122880
    %509 = vst.msk [vmem:[#allocation9] sm:$0x1] %vm508, %v507
    %v510 = vmul.f32 %v454, %v454
    %v511 = vmul.f32 %v455, %v455
    %v512 = vmul.f32 %v456, %v456
    %v513 = vmul.f32 %v457, %v457
    %v514 = vmul.f32 %v458, %v458
    %v515 = vmul.f32 %v459, %v459
    %v516 = vmul.f32 %v460, %v460
    %v517 = vmul.f32 %v461, %v461
    %v518 = vmul.f32 %v462, %v462
    %v519 = vmul.f32 %v463, %v463
    %v520 = vmul.f32 %v464, %v464
    %v521 = vmul.f32 %v465, %v465
    %v522 = vmul.f32 %v466, %v466
    %v523 = vmul.f32 %v467, %v467
    %v524 = vmul.f32 %v468, %v468
    %v525 = vmul.f32 %v469, %v469
    %v526 = vsel %vm470, %v510, 0.0
    %v527 = vsel %vm470, %v511, 0.0
    %v528 = vadd.f32 %v526, %v527
    %v529 = vsel %vm470, %v512, 0.0
    %v530 = vadd.f32 %v528, %v529
    %v531 = vsel %vm470, %v513, 0.0
    %v532 = vadd.f32 %v530, %v531
    %v533 = vsel %vm470, %v514, 0.0
    %v534 = vadd.f32 %v532, %v533
    %v535 = vsel %vm470, %v515, 0.0
    %v536 = vadd.f32 %v534, %v535
    %v537 = vsel %vm470, %v516, 0.0
    %v538 = vadd.f32 %v536, %v537
    %v539 = vsel %vm470, %v517, 0.0
    %v540 = vadd.f32 %v538, %v539
    %v541 = vsel %vm470, %v518, 0.0
    %v542 = vadd.f32 %v540, %v541
    %v543 = vsel %vm470, %v519, 0.0
    %v544 = vadd.f32 %v542, %v543
    %v545 = vsel %vm470, %v520, 0.0
    %v546 = vadd.f32 %v544, %v545
    %v547 = vsel %vm470, %v521, 0.0
    %v548 = vadd.f32 %v546, %v547
    %v549 = vsel %vm470, %v522, 0.0
    %v550 = vadd.f32 %v548, %v549
    %v551 = vsel %vm470, %v523, 0.0
    %v552 = vadd.f32 %v550, %v551
    %v553 = vsel %vm470, %v524, 0.0
    %v554 = vadd.f32 %v552, %v553
    %v555 = vsel %vm470, %v525, 0.0
    %v556 = vadd.f32 %v554, %v555
    %v557 = vrot.slane %v556, 4
    %v558 = vadd.f32 %v556, %v557
    %v559 = vrot.slane %v558, 2
    %v560 = vadd.f32 %v558, %v559
    %v561 = vrot.slane %v560, 1
    %v562 = vadd.f32 %v560, %v561
    %563 = vst.msk [vmem:[#allocation9 + $0x1] sm:$0x1] %vm508, %v562
    // Predicated region
    $region26: #{discriminator_forward.9} parent=1 // pred_check
      _
    $region27: #{discriminator_forward.9} parent=1 // pred_check_branch
      %565 = sbr.rel (0) target = $region29
    $region28: #{discriminator_forward.9} parent=1 // pred_region
      %s567 = ssub.s32 1024, 1024
      %568 = vsyncadd [#allocation4], %s567
      %s569 = sshll.u32 [#allocation8], 4
      %s570 = int_to_ptr.vmem [resolvable:$true] %s569
      %575 = dma.vmem_to_hbm [thread:$0]  %s570, 1024, %s3, [#allocation4], 64, 64, 4
    $region29: #{discriminator_forward.9} parent=1 // pred_fallthru
      _
    // Predicated region
    $region30: #{discriminator_forward.9} parent=1 // pred_check
      _
    $region31: #{discriminator_forward.9} parent=1 // pred_check_branch
      %577 = sbr.rel (0) target = $region33
    $region32: #{discriminator_forward.9} parent=1 // pred_region
      %s579 = ssub.s32 32, 32
      %580 = vsyncadd [#allocation10], %s579
      %s582 = sshll.u32 [#allocation9], 4
      %s583 = int_to_ptr.vmem [resolvable:$true] %s582
      %585 = dma.vmem_to_hbm [thread:$0]  %s583, 32, %s4, [#allocation10]
    $region33: #{discriminator_forward.9} parent=1 // pred_fallthru
      _
    // Predicated region
    $region34: #{discriminator_forward.9} parent=1 // pred_check
      _
    $region35: #{discriminator_forward.9} parent=1 // pred_check_branch
      %587 = sbr.rel (0) target = $region37
    $region36: #{discriminator_forward.9} parent=1 // pred_region
      %588 = dma.done [#allocation4], 1024
    $region37: #{discriminator_forward.9} parent=1 // pred_fallthru
      _
    // Predicated region
    $region38: #{discriminator_forward.9} parent=1 // pred_check
      _
    $region39: #{discriminator_forward.9} parent=1 // pred_check_branch
      %590 = sbr.rel (0) target = $region41
    $region40: #{discriminator_forward.9} parent=1 // pred_region
      %591 = dma.done [#allocation10], 32
    $region41: #{discriminator_forward.9} parent=1 // pred_fallthru
      _
    %592 = vsyncpa [#allocation3], 1
    %593 = vsyncpa [#allocation6], 1
    %594 = vsyncpa [#allocation4], 1
    %595 = vsyncpa [#allocation10], 1

// kernel: discriminator_forward.10
$region0: #{discriminator_forward.10}
  #allocation0 [shape = 'u32[]', space=smem, size = 0x4, offset = 0x4, fixed_abs, tag = 'smem constant byte address 0x4 - core index']
  #allocation1 [shape = 'u32[144,128]{1,0:T(1,128)}', space=vmem, size = 0x12000, scoped, tag = 'internal scratch']
  %s0 = inlined_call_operand.hbm [shape: bf16[128,16], index: 0, kind: input, shape index: {}]
  %s1 = inlined_call_operand.hbm [shape: f32[1,2,16], index: 1, kind: input, shape index: {}]
  %s2 = inlined_call_operand.hbm [shape: f32[1,16], index: 2, kind: input, shape index: {}]
  %s3 = inlined_call_operand.hbm [shape: f32[1,16], index: 3, kind: input, shape index: {}]
  %s4 = inlined_call_operand.hbm [shape: bf16[128,16], index: 4, kind: output, shape index: {}]
  %s5 = sld [smem:[#allocation0]]
  $region42: #{discriminator_forward.10} parent=0
    _
  %s7 = ssub.s32 1, %s5
  %s8 = scalar_select 0, %s7, %s5
  $region1: #{discriminator_forward.10} parent=0
    #allocation2 [shape = 'u8[32768]{0}', space=vmem, size = 0x8000, scoped, tag = 'input window, operand 0, single buffered']
    #allocation3 [shape = 's32[1]{0}', space=sflag, size = 0x4, scoped, tag = 'scoped memory for discriminator_forward.10']
    #allocation4 [shape = 's32[1]{0}', space=sflag, size = 0x4, scoped, tag = 'scoped memory for discriminator_forward.10']
    #allocation5 [shape = 'u8[1024]{0}', space=vmem, size = 0x400, scoped, tag = 'input window, operand 1, single buffered']
    #allocation6 [shape = 's32[1]{0}', space=sflag, size = 0x4, scoped, tag = 'scoped memory for discriminator_forward.10']
    #allocation7 [shape = 'u8[512]{0}', space=vmem, size = 0x400, scoped, tag = 'input window, operand 2, single buffered']
    #allocation8 [shape = 'u8[512]{0}', space=vmem, size = 0x400, scoped, tag = 'input window, operand 3, single buffered']
    #allocation9 [shape = 's32[1]{0}', space=sflag, size = 0x4, scoped, tag = 'scoped memory for discriminator_forward.10']
    #allocation10 [shape = 'u8[32768]{0}', space=vmem, size = 0x8000, scoped, tag = 'output window, operand 0, single buffered']
    %9 = vsyncpa [#allocation3], 0
    %10 = vsyncpa [#allocation6], 0
    %11 = vsyncpa [#allocation9], 0
    %12 = vsyncpa [#allocation4], 0
    // Predicated region
    $region2: #{discriminator_forward.10} parent=1 // pred_check
      _
    $region3: #{discriminator_forward.10} parent=1 // pred_check_branch
      %14 = sbr.rel (0) target = $region5
    $region4: #{discriminator_forward.10} parent=1 // pred_region
      %s16 = ssub.s32 1024, 1024
      %17 = vsyncadd [#allocation3], %s16
      %s18 = sshll.u32 [#allocation2], 4
      %s19 = int_to_ptr.vmem [resolvable:$true] %s18
      %24 = dma.hbm_to_vmem [thread:$0]  %s0, 1024, %s19, [#allocation3], 64, 64, 4
    $region5: #{discriminator_forward.10} parent=1 // pred_fallthru
      _
    // Predicated region
    $region6: #{discriminator_forward.10} parent=1 // pred_check
      _
    $region7: #{discriminator_forward.10} parent=1 // pred_check_branch
      %26 = sbr.rel (0) target = $region9
    $region8: #{discriminator_forward.10} parent=1 // pred_region
      %s28 = ssub.s32 32, 32
      %29 = vsyncadd [#allocation6], %s28
      %s31 = sshll.u32 [#allocation5], 4
      %s32 = int_to_ptr.vmem [resolvable:$true] %s31
      %34 = dma.hbm_to_vmem [thread:$0]  %s1, 32, %s32, [#allocation6]
    $region9: #{discriminator_forward.10} parent=1 // pred_fallthru
      _
    // Predicated region
    $region10: #{discriminator_forward.10} parent=1 // pred_check
      _
    $region11: #{discriminator_forward.10} parent=1 // pred_check_branch
      %36 = sbr.rel (0) target = $region13
    $region12: #{discriminator_forward.10} parent=1 // pred_region
      %s38 = ssub.s32 16, 16
      %39 = vsyncadd [#allocation6], %s38
      %s41 = sshll.u32 [#allocation7], 4
      %s42 = int_to_ptr.vmem [resolvable:$true] %s41
      %44 = dma.hbm_to_vmem [thread:$0]  %s2, 16, %s42, [#allocation6]
    $region13: #{discriminator_forward.10} parent=1 // pred_fallthru
      _
    // Predicated region
    $region14: #{discriminator_forward.10} parent=1 // pred_check
      _
    $region15: #{discriminator_forward.10} parent=1 // pred_check_branch
      %46 = sbr.rel (0) target = $region17
    $region16: #{discriminator_forward.10} parent=1 // pred_region
      %s48 = ssub.s32 16, 16
      %49 = vsyncadd [#allocation9], %s48
      %s51 = sshll.u32 [#allocation8], 4
      %s52 = int_to_ptr.vmem [resolvable:$true] %s51
      %54 = dma.hbm_to_vmem [thread:$0]  %s3, 16, %s52, [#allocation9]
    $region17: #{discriminator_forward.10} parent=1 // pred_fallthru
      _
    // Predicated region
    $region18: #{discriminator_forward.10} parent=1 // pred_check
      _
    $region19: #{discriminator_forward.10} parent=1 // pred_check_branch
      %56 = sbr.rel (0) target = $region21
    $region20: #{discriminator_forward.10} parent=1 // pred_region
      %57 = dma.done [#allocation3], 1024
    $region21: #{discriminator_forward.10} parent=1 // pred_fallthru
      _
    // Predicated region
    $region22: #{discriminator_forward.10} parent=1 // pred_check
      _
    $region23: #{discriminator_forward.10} parent=1 // pred_check_branch
      %59 = sbr.rel (0) target = $region25
    $region24: #{discriminator_forward.10} parent=1 // pred_region
      %60 = dma.done [#allocation6], 32
    $region25: #{discriminator_forward.10} parent=1 // pred_fallthru
      _
    // Predicated region
    $region26: #{discriminator_forward.10} parent=1 // pred_check
      _
    $region27: #{discriminator_forward.10} parent=1 // pred_check_branch
      %62 = sbr.rel (0) target = $region29
    $region28: #{discriminator_forward.10} parent=1 // pred_region
      %63 = dma.done [#allocation6], 16
    $region29: #{discriminator_forward.10} parent=1 // pred_fallthru
      _
    // Predicated region
    $region30: #{discriminator_forward.10} parent=1 // pred_check
      _
    $region31: #{discriminator_forward.10} parent=1 // pred_check_branch
      %65 = sbr.rel (0) target = $region33
    $region32: #{discriminator_forward.10} parent=1 // pred_region
      %66 = dma.done [#allocation9], 16
    $region33: #{discriminator_forward.10} parent=1 // pred_fallthru
      _
    %v67 = vld [vmem:[#allocation5] sm:$0x3]
    %v68 = vadd.f32 %v67, 0.0
    %v69 = vmul.f32 %v68, 0.0078125
    %v70 = vmul.f32 %v69, %v69
    %v72 = vrot.slane %v70, 7
    %v74 = vsub.f32 %v69, %v72
    %v75 = vmax.f32 %v74, 0.0
    %v76 = vld [vmem:[#allocation2] sm:$0xf]
    %v77 = vld [vmem:[#allocation2 + $0x4] sm:$0xf]
    %v78 = vld [vmem:[#allocation2 + $0x8] sm:$0xf]
    %v79 = vld [vmem:[#allocation2 + $0xc] sm:$0xf]
    %v80 = vld [vmem:[#allocation2 + $0x10] sm:$0xf]
    %v81 = vld [vmem:[#allocation2 + $0x14] sm:$0xf]
    %v82 = vld [vmem:[#allocation2 + $0x18] sm:$0xf]
    %v83 = vld [vmem:[#allocation2 + $0x1c] sm:$0xf]
    %v84 = vld [vmem:[#allocation2 + $0x20] sm:$0xf]
    %v85 = vld [vmem:[#allocation2 + $0x24] sm:$0xf]
    %v86 = vld [vmem:[#allocation2 + $0x28] sm:$0xf]
    %v87 = vld [vmem:[#allocation2 + $0x2c] sm:$0xf]
    %v88 = vld [vmem:[#allocation2 + $0x30] sm:$0xf]
    %v89 = vld [vmem:[#allocation2 + $0x34] sm:$0xf]
    %v90 = vld [vmem:[#allocation2 + $0x38] sm:$0xf]
    %v91 = vld [vmem:[#allocation2 + $0x3c] sm:$0xf]
    %v92 = vunpack.c.l.bf16 %v76
    %v93 = vunpack.c.l.bf16 %v77
    %v94 = vunpack.c.l.bf16 %v78
    %v95 = vunpack.c.l.bf16 %v79
    %v96 = vunpack.c.l.bf16 %v80
    %v97 = vunpack.c.l.bf16 %v81
    %v98 = vunpack.c.l.bf16 %v82
    %v99 = vunpack.c.l.bf16 %v83
    %v100 = vunpack.c.l.bf16 %v84
    %v101 = vunpack.c.l.bf16 %v85
    %v102 = vunpack.c.l.bf16 %v86
    %v103 = vunpack.c.l.bf16 %v87
    %v104 = vunpack.c.l.bf16 %v88
    %v105 = vunpack.c.l.bf16 %v89
    %v106 = vunpack.c.l.bf16 %v90
    %v107 = vunpack.c.l.bf16 %v91
    %v108 = vlaneseq
    %v109 = vshrl.u32 %v108, 7
    %v110 = vsub.s32 0, %v109
    %v111 = vrot.slane %v69, %v110
    %v112 = vsub.f32 %v92, %v111
    %v113 = vsub.f32 %v93, %v111
    %v114 = vsub.f32 %v94, %v111
    %v115 = vsub.f32 %v95, %v111
    %v116 = vsub.f32 %v96, %v111
    %v117 = vsub.f32 %v97, %v111
    %v118 = vsub.f32 %v98, %v111
    %v119 = vsub.f32 %v99, %v111
    %v120 = vsub.f32 %v100, %v111
    %v121 = vsub.f32 %v101, %v111
    %v122 = vsub.f32 %v102, %v111
    %v123 = vsub.f32 %v103, %v111
    %v124 = vsub.f32 %v104, %v111
    %v125 = vsub.f32 %v105, %v111
    %v126 = vsub.f32 %v106, %v111
    %v127 = vsub.f32 %v107, %v111
    %v128 = vadd.f32 %v75, 1e-05
    %v129 = vrsqrt.pop %v128
    %v130 = vlaneseq
    %v131 = vshrl.u32 %v130, 7
    %v132 = vsub.s32 1, %v131
    %v133 = vrot.slane %v129, %v132
    %v134 = vmul.f32 %v112, %v133
    %v135 = vmul.f32 %v113, %v133
    %v136 = vmul.f32 %v114, %v133
    %v137 = vmul.f32 %v115, %v133
    %v138 = vmul.f32 %v116, %v133
    %v139 = vmul.f32 %v117, %v133
    %v140 = vmul.f32 %v118, %v133
    %v141 = vmul.f32 %v119, %v133
    %v142 = vmul.f32 %v120, %v133
    %v143 = vmul.f32 %v121, %v133
    %v144 = vmul.f32 %v122, %v133
    %v145 = vmul.f32 %v123, %v133
    %v146 = vmul.f32 %v124, %v133
    %v147 = vmul.f32 %v125, %v133
    %v148 = vmul.f32 %v126, %v133
    %v149 = vmul.f32 %v127, %v133
    %v150 = vld [vmem:[#allocation7] sm:$0x1]
    %v152 = vlaneseq
    %v153 = vshrl.u32 %v152, 7
    %v154 = vsub.s32 0, %v153
    %v155 = vrot.slane %v150, %v154
    %v157 = vmul.f32 %v134, %v155
    %v158 = vmul.f32 %v135, %v155
    %v159 = vmul.f32 %v136, %v155
    %v160 = vmul.f32 %v137, %v155
    %v161 = vmul.f32 %v138, %v155
    %v162 = vmul.f32 %v139, %v155
    %v163 = vmul.f32 %v140, %v155
    %v164 = vmul.f32 %v141, %v155
    %v165 = vmul.f32 %v142, %v155
    %v166 = vmul.f32 %v143, %v155
    %v167 = vmul.f32 %v144, %v155
    %v168 = vmul.f32 %v145, %v155
    %v169 = vmul.f32 %v146, %v155
    %v170 = vmul.f32 %v147, %v155
    %v171 = vmul.f32 %v148, %v155
    %v172 = vmul.f32 %v149, %v155
    %v173 = vld [vmem:[#allocation8] sm:$0x1]
    %v175 = vlaneseq
    %v176 = vshrl.u32 %v175, 7
    %v177 = vsub.s32 0, %v176
    %v178 = vrot.slane %v173, %v177
    %v180 = vadd.f32 %v157, %v178
    %v181 = vadd.f32 %v158, %v178
    %v182 = vadd.f32 %v159, %v178
    %v183 = vadd.f32 %v160, %v178
    %v184 = vadd.f32 %v161, %v178
    %v185 = vadd.f32 %v162, %v178
    %v186 = vadd.f32 %v163, %v178
    %v187 = vadd.f32 %v164, %v178
    %v188 = vadd.f32 %v165, %v178
    %v189 = vadd.f32 %v166, %v178
    %v190 = vadd.f32 %v167, %v178
    %v191 = vadd.f32 %v168, %v178
    %v192 = vadd.f32 %v169, %v178
    %v193 = vadd.f32 %v170, %v178
    %v194 = vadd.f32 %v171, %v178
    %v195 = vadd.f32 %v172, %v178
    %vm196 = vcmp.ge.f32.partialorder %v180, 0.0
    %vm197 = vcmp.ge.f32.partialorder %v181, 0.0
    %vm198 = vcmp.ge.f32.partialorder %v182, 0.0
    %vm199 = vcmp.ge.f32.partialorder %v183, 0.0
    %vm200 = vcmp.ge.f32.partialorder %v184, 0.0
    %vm201 = vcmp.ge.f32.partialorder %v185, 0.0
    %vm202 = vcmp.ge.f32.partialorder %v186, 0.0
    %vm203 = vcmp.ge.f32.partialorder %v187, 0.0
    %vm204 = vcmp.ge.f32.partialorder %v188, 0.0
    %vm205 = vcmp.ge.f32.partialorder %v189, 0.0
    %vm206 = vcmp.ge.f32.partialorder %v190, 0.0
    %vm207 = vcmp.ge.f32.partialorder %v191, 0.0
    %vm208 = vcmp.ge.f32.partialorder %v192, 0.0
    %vm209 = vcmp.ge.f32.partialorder %v193, 0.0
    %vm210 = vcmp.ge.f32.partialorder %v194, 0.0
    %vm211 = vcmp.ge.f32.partialorder %v195, 0.0
    %v212 = vmul.f32 %v180, 0.2
    %v213 = vmul.f32 %v181, 0.2
    %v214 = vmul.f32 %v182, 0.2
    %v215 = vmul.f32 %v183, 0.2
    %v216 = vmul.f32 %v184, 0.2
    %v217 = vmul.f32 %v185, 0.2
    %v218 = vmul.f32 %v186, 0.2
    %v219 = vmul.f32 %v187, 0.2
    %v220 = vmul.f32 %v188, 0.2
    %v221 = vmul.f32 %v189, 0.2
    %v222 = vmul.f32 %v190, 0.2
    %v223 = vmul.f32 %v191, 0.2
    %v224 = vmul.f32 %v192, 0.2
    %v225 = vmul.f32 %v193, 0.2
    %v226 = vmul.f32 %v194, 0.2
    %v227 = vmul.f32 %v195, 0.2
    %v228 = vsel %vm196, %v180, %v212
    %v229 = vsel %vm197, %v181, %v213
    %v230 = vsel %vm198, %v182, %v214
    %v231 = vsel %vm199, %v183, %v215
    %v232 = vsel %vm200, %v184, %v216
    %v233 = vsel %vm201, %v185, %v217
    %v234 = vsel %vm202, %v186, %v218
    %v235 = vsel %vm203, %v187, %v219
    %v236 = vsel %vm204, %v188, %v220
    %v237 = vsel %vm205, %v189, %v221
    %v238 = vsel %vm206, %v190, %v222
    %v239 = vsel %vm207, %v191, %v223
    %v240 = vsel %vm208, %v192, %v224
    %v241 = vsel %vm209, %v193, %v225
    %v242 = vsel %vm210, %v194, %v226
    %v243 = vsel %vm211, %v195, %v227
    %v244 = vpack.c.bf16 %v229, %v228
    %v245 = vpack.c.bf16 %v231, %v230
    %v246 = vpack.c.bf16 %v233, %v232
    %v247 = vpack.c.bf16 %v235, %v234
    %v248 = vpack.c.bf16 %v237, %v236
    %v249 = vpack.c.bf16 %v239, %v238
    %v250 = vpack.c.bf16 %v241, %v240
    %v251 = vpack.c.bf16 %v243, %v242
    %v260 = vunpack.c.l.b16 %v244
    %v261 = vunpack.c.h.b16 %v244
    %v262 = vunpack.c.l.b16 %v245
    %v263 = vunpack.c.h.b16 %v245
    %v264 = vunpack.c.l.b16 %v246
    %v265 = vunpack.c.h.b16 %v246
    %v266 = vunpack.c.l.b16 %v247
    %v267 = vunpack.c.h.b16 %v247
    %v268 = vunpack.c.l.b16 %v248
    %v269 = vunpack.c.h.b16 %v248
    %v270 = vunpack.c.l.b16 %v249
    %v271 = vunpack.c.h.b16 %v249
    %v272 = vunpack.c.l.b16 %v250
    %v273 = vunpack.c.h.b16 %v250
    %v274 = vunpack.c.l.b16 %v251
    %v275 = vunpack.c.h.b16 %v251
    %v276 = vpack.c.b16 %v260, %v260
    %v277 = vpack.c.b16 %v261, %v261
    %v278 = vpack.c.b16 %v262, %v262
    %v279 = vpack.c.b16 %v263, %v263
    %v280 = vpack.c.b16 %v264, %v264
    %v281 = vpack.c.b16 %v265, %v265
    %v282 = vpack.c.b16 %v266, %v266
    %v283 = vpack.c.b16 %v267, %v267
    %v284 = vpack.c.b16 %v268, %v268
    %v285 = vpack.c.b16 %v269, %v269
    %v286 = vpack.c.b16 %v270, %v270
    %v287 = vpack.c.b16 %v271, %v271
    %v288 = vpack.c.b16 %v272, %v272
    %v289 = vpack.c.b16 %v273, %v273
    %v290 = vpack.c.b16 %v274, %v274
    %v291 = vpack.c.b16 %v275, %v275
    %vm308 = vcmask 125952
    %309 = vst.msk [vmem:[#allocation10] sm:$0xf] %vm308, %v276
    %310 = vst.msk [vmem:[#allocation10 + $0x4] sm:$0xf] %vm308, %v277
    %311 = vst.msk [vmem:[#allocation10 + $0x8] sm:$0xf] %vm308, %v278
    %312 = vst.msk [vmem:[#allocation10 + $0xc] sm:$0xf] %vm308, %v279
    %313 = vst.msk [vmem:[#allocation10 + $0x10] sm:$0xf] %vm308, %v280
    %314 = vst.msk [vmem:[#allocation10 + $0x14] sm:$0xf] %vm308, %v281
    %315 = vst.msk [vmem:[#allocation10 + $0x18] sm:$0xf] %vm308, %v282
    %316 = vst.msk [vmem:[#allocation10 + $0x1c] sm:$0xf] %vm308, %v283
    %317 = vst.msk [vmem:[#allocation10 + $0x20] sm:$0xf] %vm308, %v284
    %318 = vst.msk [vmem:[#allocation10 + $0x24] sm:$0xf] %vm308, %v285
    %319 = vst.msk [vmem:[#allocation10 + $0x28] sm:$0xf] %vm308, %v286
    %320 = vst.msk [vmem:[#allocation10 + $0x2c] sm:$0xf] %vm308, %v287
    %321 = vst.msk [vmem:[#allocation10 + $0x30] sm:$0xf] %vm308, %v288
    %322 = vst.msk [vmem:[#allocation10 + $0x34] sm:$0xf] %vm308, %v289
    %323 = vst.msk [vmem:[#allocation10 + $0x38] sm:$0xf] %vm308, %v290
    %324 = vst.msk [vmem:[#allocation10 + $0x3c] sm:$0xf] %vm308, %v291
    // Predicated region
    $region34: #{discriminator_forward.10} parent=1 // pred_check
      _
    $region35: #{discriminator_forward.10} parent=1 // pred_check_branch
      %326 = sbr.rel (0) target = $region37
    $region36: #{discriminator_forward.10} parent=1 // pred_region
      %s328 = ssub.s32 1024, 1024
      %329 = vsyncadd [#allocation4], %s328
      %s330 = sshll.u32 [#allocation10], 4
      %s331 = int_to_ptr.vmem [resolvable:$true] %s330
      %336 = dma.vmem_to_hbm [thread:$0]  %s331, 1024, %s4, [#allocation4], 64, 64, 4
    $region37: #{discriminator_forward.10} parent=1 // pred_fallthru
      _
    // Predicated region
    $region38: #{discriminator_forward.10} parent=1 // pred_check
      _
    $region39: #{discriminator_forward.10} parent=1 // pred_check_branch
      %338 = sbr.rel (0) target = $region41
    $region40: #{discriminator_forward.10} parent=1 // pred_region
      %339 = dma.done [#allocation4], 1024
    $region41: #{discriminator_forward.10} parent=1 // pred_fallthru
      _
    %340 = vsyncpa [#allocation3], 1
    %341 = vsyncpa [#allocation6], 1
    %342 = vsyncpa [#allocation9], 1
    %343 = vsyncpa [#allocation4], 1

// kernel: discriminator_forward.11
$region0: #{discriminator_forward.11}
  #allocation0 [shape = 'u32[]', space=smem, size = 0x4, offset = 0x4, fixed_abs, tag = 'smem constant byte address 0x4 - core index']
  #allocation1 [shape = 'u32[144,128]{1,0:T(1,128)}', space=vmem, size = 0x12000, scoped, tag = 'internal scratch']
  %s0 = inlined_call_operand.hbm [shape: bf16[32,256], index: 0, kind: input, shape index: {}]
  %s1 = inlined_call_operand.hbm [shape: bf16[256,32], index: 1, kind: input, shape index: {}]
  %s2 = inlined_call_operand.hbm [shape: f32[1,32], index: 2, kind: input, shape index: {}]
  %s3 = inlined_call_operand.hbm [shape: bf16[32,32], index: 3, kind: output, shape index: {0}]
  %s4 = inlined_call_operand.hbm [shape: f32[1,2,32], index: 4, kind: output, shape index: {1}]
  %5 = xla_tuple %s3, %s4
  %s6 = sld [smem:[#allocation0]]
  $region42: #{discriminator_forward.11} parent=0
    _
  %s8 = ssub.s32 1, %s6
  %s9 = scalar_select 0, %s8, %s6
  $region1: #{discriminator_forward.11} parent=0
    #allocation2 [shape = 'u8[16384]{0}', space=vmem, size = 0x4000, scoped, tag = 'input window, operand 0, single buffered']
    #allocation3 [shape = 's32[1]{0}', space=sflag, size = 0x4, scoped, tag = 'scoped memory for discriminator_forward.11']
    #allocation4 [shape = 's32[1]{0}', space=sflag, size = 0x4, scoped, tag = 'scoped memory for discriminator_forward.11']
    #allocation5 [shape = 'u8[65536]{0}', space=vmem, size = 0x10000, scoped, tag = 'input window, operand 1, single buffered']
    #allocation6 [shape = 's32[1]{0}', space=sflag, size = 0x4, scoped, tag = 'scoped memory for discriminator_forward.11']
    #allocation7 [shape = 'u8[512]{0}', space=vmem, size = 0x400, scoped, tag = 'input window, operand 2, single buffered']
    #allocation8 [shape = 'u8[8192]{0}', space=vmem, size = 0x2000, scoped, tag = 'output window, operand 0, single buffered']
    #allocation9 [shape = 'u8[1024]{0}', space=vmem, size = 0x400, scoped, tag = 'output window, operand 1, single buffered']
    #allocation10 [shape = 's32[1]{0}', space=sflag, size = 0x4, scoped, tag = 'scoped memory for discriminator_forward.11']
    %10 = vsyncpa [#allocation3], 0
    %11 = vsyncpa [#allocation6], 0
    %12 = vsyncpa [#allocation4], 0
    %13 = vsyncpa [#allocation10], 0
    // Predicated region
    $region2: #{discriminator_forward.11} parent=1 // pred_check
      _
    $region3: #{discriminator_forward.11} parent=1 // pred_check_branch
      %15 = sbr.rel (0) target = $region5
    $region4: #{discriminator_forward.11} parent=1 // pred_region
      %s17 = ssub.s32 512, 512
      %18 = vsyncadd [#allocation3], %s17
      %s19 = sshll.u32 [#allocation2], 4
      %s20 = int_to_ptr.vmem [resolvable:$true] %s19
      %25 = dma.hbm_to_vmem [thread:$0]  %s0, 512, %s20, [#allocation3], 128, 128, 8
    $region5: #{discriminator_forward.11} parent=1 // pred_fallthru
      _
    // Predicated region
    $region6: #{discriminator_forward.11} parent=1 // pred_check
      _
    $region7: #{discriminator_forward.11} parent=1 // pred_check_branch
      %27 = sbr.rel (0) target = $region9
    $region8: #{discriminator_forward.11} parent=1 // pred_region
      %s29 = ssub.s32 2048, 2048
      %30 = vsyncadd [#allocation6], %s29
      %s31 = sshll.u32 [#allocation5], 4
      %s32 = int_to_ptr.vmem [resolvable:$true] %s31
      %37 = dma.hbm_to_vmem [thread:$0]  %s1, 2048, %s32, [#allocation6], 64, 64, 4
    $region9: #{discriminator_forward.11} parent=1 // pred_fallthru
      _
    // Predicated region
    $region10: #{discriminator_forward.11} parent=1 // pred_check
      _
    $region11: #{discriminator_forward.11} parent=1 // pred_check_branch
      %39 = sbr.rel (0) target = $region13
    $region12: #{discriminator_forward.11} parent=1 // pred_region
      %s41 = ssub.s32 16, 16
      %42 = vsyncadd [#allocation6], %s41
      %s44 = sshll.u32 [#allocation7], 4
      %s45 = int_to_ptr.vmem [resolvable:$true] %s44
      %47 = dma.hbm_to_vmem [thread:$0]  %s2, 16, %s45, [#allocation6]
    $region13: #{discriminator_forward.11} parent=1 // pred_fallthru
      _
    // Predicated region
    $region14: #{discriminator_forward.11} parent=1 // pred_check
      _
    $region15: #{discriminator_forward.11} parent=1 // pred_check_branch
      %49 = sbr.rel (0) target = $region17
    $region16: #{discriminator_forward.11} parent=1 // pred_region
      %50 = dma.done [#allocation3], 512
    $region17: #{discriminator_forward.11} parent=1 // pred_fallthru
      _
    // Predicated region
    $region18: #{discriminator_forward.11} parent=1 // pred_check
      _
    $region19: #{discriminator_forward.11} parent=1 // pred_check_branch
      %52 = sbr.rel (0) target = $region21
    $region20: #{discriminator_forward.11} parent=1 // pred_region
      %53 = dma.done [#allocation6], 2048
    $region21: #{discriminator_forward.11} parent=1 // pred_fallthru
      _
    // Predicated region
    $region22: #{discriminator_forward.11} parent=1 // pred_check
      _
    $region23: #{discriminator_forward.11} parent=1 // pred_check_branch
      %55 = sbr.rel (0) target = $region25
    $region24: #{discriminator_forward.11} parent=1 // pred_region
      %56 = dma.done [#allocation6], 16
    $region25: #{discriminator_forward.11} parent=1 // pred_fallthru
      _
    %v58 = vld [vmem:[#allocation2] sm:$0xff]
    %v59 = vld [vmem:[#allocation2 + $0x8] sm:$0xff]
    %v60 = vld [vmem:[#allocation2 + $0x10] sm:$0xff]
    %v61 = vld [vmem:[#allocation2 + $0x18] sm:$0xff]
    %v62 = vld [vmem:[#allocation5] sm:$0xf]
    %v63 = vld [vmem:[#allocation5 + $0x4] sm:$0xf]
    %v64 = vld [vmem:[#allocation5 + $0x8] sm:$0xf]
    %v65 = vld [vmem:[#allocation5 + $0xc] sm:$0xf]
    %v66 = vld [vmem:[#allocation5 + $0x10] sm:$0xf]
    %v67 = vld [vmem:[#allocation5 + $0x14] sm:$0xf]
    %v68 = vld [vmem:[#allocation5 + $0x18] sm:$0xf]
    %v69 = vld [vmem:[#allocation5 + $0x1c] sm:$0xf]
    %v70 = vld [vmem:[#allocation5 + $0x20] sm:$0xf]
    %v71 = vld [vmem:[#allocation5 + $0x24] sm:$0xf]
    %v72 = vld [vmem:[#allocation5 + $0x28] sm:$0xf]
    %v73 = vld [vmem:[#allocation5 + $0x2c] sm:$0xf]
    %v74 = vld [vmem:[#allocation5 + $0x30] sm:$0xf]
    %v75 = vld [vmem:[#allocation5 + $0x34] sm:$0xf]
    %v76 = vld [vmem:[#allocation5 + $0x38] sm:$0xf]
    %v77 = vld [vmem:[#allocation5 + $0x3c] sm:$0xf]
    %v78 = vld [vmem:[#allocation5 + $0x40] sm:$0xf]
    %v79 = vld [vmem:[#allocation5 + $0x44] sm:$0xf]
    %v80 = vld [vmem:[#allocation5 + $0x48] sm:$0xf]
    %v81 = vld [vmem:[#allocation5 + $0x4c] sm:$0xf]
    %v82 = vld [vmem:[#allocation5 + $0x50] sm:$0xf]
    %v83 = vld [vmem:[#allocation5 + $0x54] sm:$0xf]
    %v84 = vld [vmem:[#allocation5 + $0x58] sm:$0xf]
    %v85 = vld [vmem:[#allocation5 + $0x5c] sm:$0xf]
    %v86 = vld [vmem:[#allocation5 + $0x60] sm:$0xf]
    %v87 = vld [vmem:[#allocation5 + $0x64] sm:$0xf]
    %v88 = vld [vmem:[#allocation5 + $0x68] sm:$0xf]
    %v89 = vld [vmem:[#allocation5 + $0x6c] sm:$0xf]
    %v90 = vld [vmem:[#allocation5 + $0x70] sm:$0xf]
    %v91 = vld [vmem:[#allocation5 + $0x74] sm:$0xf]
    %v92 = vld [vmem:[#allocation5 + $0x78] sm:$0xf]
    %v93 = vld [vmem:[#allocation5 + $0x7c] sm:$0xf]
    %v94 = vld [vmem:[#allocation7] sm:$0x1]
    %v96 = vlaneseq
    %v97 = vshrl.u32 %v96, 7
    %v98 = vsub.s32 0, %v97
    %v99 = vrot.slane %v94, %v98
    %v105 = vunpack.c.l.b16 %v58
    %v106 = vunpack.c.h.b16 %v58
    %v107 = vunpack.c.l.b16 %v59
    %v108 = vunpack.c.h.b16 %v59
    %v109 = vunpack.c.l.b16 %v60
    %v110 = vunpack.c.h.b16 %v60
    %v111 = vunpack.c.l.b16 %v61
    %v112 = vunpack.c.h.b16 %v61
    %v113 = vpack.c.b16 %v107, %v105
    %v114 = vpack.c.b16 %v108, %v106
    %v115 = vpack.c.b16 %v111, %v109
    %v116 = vpack.c.b16 %v112, %v110
    %v153 = vunpack.c.l.b16 %v62
    %v154 = vunpack.c.l.b16 %v63
    %v155 = vunpack.c.l.b16 %v64
    %v156 = vunpack.c.l.b16 %v65
    %v157 = vunpack.c.l.b16 %v66
    %v158 = vunpack.c.l.b16 %v67
    %v159 = vunpack.c.l.b16 %v68
    %v160 = vunpack.c.l.b16 %v69
    %v161 = vunpack.c.l.b16 %v70
    %v162 = vunpack.c.l.b16 %v71
    %v163 = vunpack.c.l.b16 %v72
    %v164 = vunpack.c.l.b16 %v73
    %v165 = vunpack.c.l.b16 %v74
    %v166 = vunpack.c.l.b16 %v75
    %v167 = vunpack.c.l.b16 %v76
    %v168 = vunpack.c.l.b16 %v77
    %v169 = vunpack.c.l.b16 %v78
    %v170 = vunpack.c.l.b16 %v79
    %v171 = vunpack.c.l.b16 %v80
    %v172 = vunpack.c.l.b16 %v81
    %v173 = vunpack.c.l.b16 %v82
    %v174 = vunpack.c.l.b16 %v83
    %v175 = vunpack.c.l.b16 %v84
    %v176 = vunpack.c.l.b16 %v85
    %v177 = vunpack.c.l.b16 %v86
    %v178 = vunpack.c.l.b16 %v87
    %v179 = vunpack.c.l.b16 %v88
    %v180 = vunpack.c.l.b16 %v89
    %v181 = vunpack.c.l.b16 %v90
    %v182 = vunpack.c.l.b16 %v91
    %v183 = vunpack.c.l.b16 %v92
    %v184 = vunpack.c.l.b16 %v93
    %v185 = vpack.c.b16 %v154, %v153
    %v186 = vpack.c.b16 %v156, %v155
    %v187 = vpack.c.b16 %v158, %v157
    %v188 = vpack.c.b16 %v160, %v159
    %v189 = vpack.c.b16 %v162, %v161
    %v190 = vpack.c.b16 %v164, %v163
    %v191 = vpack.c.b16 %v166, %v165
    %v192 = vpack.c.b16 %v168, %v167
    %v193 = vpack.c.b16 %v170, %v169
    %v194 = vpack.c.b16 %v172, %v171
    %v195 = vpack.c.b16 %v174, %v173
    %v196 = vpack.c.b16 %v176, %v175
    %v197 = vpack.c.b16 %v178, %v177
    %v198 = vpack.c.b16 %v180, %v179
    %v199 = vpack.c.b16 %v182, %v181
    %v200 = vpack.c.b16 %v184, %v183
    %217 = vmatprep.subr.bf16.mxu0 0
    %218 = vmatpush1.bf16.msra.mxu0 %v185
    %219 = vmatprep.subr.bf16.mxu0 0
    %220 = vmatpush1.bf16.msra.mxu0 %v186
    %221 = vmatprep.subr.bf16.mxu0 0
    %222 = vmatpush1.bf16.msra.mxu0 %v187
    %223 = vmatprep.subr.bf16.mxu0 0
    %224 = vmatpush1.bf16.msra.mxu0 %v188
    %225 = vmatprep.subr.bf16.mxu0 0
    %226 = vmatpush1.bf16.msra.mxu0 %v189
    %227 = vmatprep.subr.bf16.mxu0 0
    %228 = vmatpush1.bf16.msra.mxu0 %v190
    %229 = vmatprep.subr.bf16.mxu0 0
    %230 = vmatpush1.bf16.msra.mxu0 %v191
    %231 = vmatprep.subr.bf16.mxu0 0
    %232 = vmatpush1.bf16.msra.mxu0 %v192
    %233 = vmatprep.subr.bf16.mxu0 0
    %234 = vmatpush1.bf16.msra.mxu0 %v193
    %235 = vmatprep.subr.bf16.mxu0 0
    %236 = vmatpush1.bf16.msra.mxu0 %v194
    %237 = vmatprep.subr.bf16.mxu0 0
    %238 = vmatpush1.bf16.msra.mxu0 %v195
    %239 = vmatprep.subr.bf16.mxu0 0
    %240 = vmatpush1.bf16.msra.mxu0 %v196
    %241 = vmatprep.subr.bf16.mxu0 0
    %242 = vmatpush1.bf16.msra.mxu0 %v197
    %243 = vmatprep.subr.bf16.mxu0 0
    %244 = vmatpush1.bf16.msra.mxu0 %v198
    %245 = vmatprep.subr.bf16.mxu0 0
    %246 = vmatpush1.bf16.msra.mxu0 %v199
    %247 = vmatprep.subr.bf16.mxu0 0
    %248 = vmatpush1.bf16.msra.mxu0 %v200
    %249 = vmatprep.mubr.bf16.mxu0 %v114
    %250 = vmatmul.mubr.bf16.gmra.mrb[0].mxu0 %v113
    %v251 = vpop.f32.mrb[0].mxu0
    %v252 = vadd.f32 %v99, %v251
    %v253 = vpop.f32.mrb[0].mxu0
    %v254 = vpop.f32.mrb[0].mxu0
    %v255 = vadd.f32 %v99, %v254
    %v256 = vpop.f32.mrb[0].mxu0
    %257 = vmatprep.mubr.bf16.mxu0 %v116
    %258 = vmatmul.mubr.bf16.gmra.mrb[0].mxu0 %v115
    %v259 = vpop.f32.mrb[0].mxu0
    %v260 = vadd.f32 %v99, %v259
    %v261 = vpop.f32.mrb[0].mxu0
    %v262 = vpop.f32.mrb[0].mxu0
    %v263 = vadd.f32 %v99, %v262
    %v264 = vpop.f32.mrb[0].mxu0
    %265 = vdwg.mxu0
    %v266 = vpack.c.bf16 %v255, %v252
    %v267 = vpack.c.bf16 %v263, %v260
    %v270 = vunpack.c.l.b16 %v266
    %v271 = vunpack.c.h.b16 %v266
    %v272 = vunpack.c.l.b16 %v267
    %v273 = vunpack.c.h.b16 %v267
    %v274 = vpack.c.b16 %v270, %v270
    %v275 = vpack.c.b16 %v271, %v271
    %v276 = vpack.c.b16 %v272, %v272
    %v277 = vpack.c.b16 %v273, %v273
    %vm282 = vcmask 257024
    %283 = vst.msk [vmem:[#allocation8] sm:$0xf] %vm282, %v274
    %284 = vst.msk [vmem:[#allocation8 + $0x4] sm:$0xf] %vm282, %v275
    %285 = vst.msk [vmem:[#allocation8 + $0x8] sm:$0xf] %vm282, %v276
    %286 = vst.msk [vmem:[#allocation8 + $0xc] sm:$0xf] %vm282, %v277
    %v287 = vlaneseq
    %v288 = vshrl.u32 %v287, 7
    %v289 = vadd.s32 %v288, 8
    %v290 = vadd.s32 %v288, 16
    %v291 = vadd.s32 %v288, 24
    %s292 = smul.u32 0, 32
    %v293 = vstv %s292
    %v294 = vadd.s32 %v288, %v293
    %v295 = vadd.s32 %v289, %v293
    %v296 = vadd.s32 %v290, %v293
    %v297 = vadd.s32 %v291, %v293
    %vm298 = vcmp.lt.s32.totalorder %v294, 32
    %vm299 = vcmp.lt.s32.totalorder %v295, 32
    %vm300 = vcmp.lt.s32.totalorder %v296, 32
    %vm301 = vcmp.lt.s32.totalorder %v297, 32
    %v302 = vsel %vm298, 1, 0
    %v303 = vsel %vm299, 1, 0
    %v304 = vsel %vm300, 1, 0
    %v305 = vsel %vm301, 1, 0
    %vm306 = vcmp.eq.s32.totalorder %v302, 1
    %vm307 = vcmp.eq.s32.totalorder %v303, 1
    %vm308 = vcmp.eq.s32.totalorder %v304, 1
    %vm309 = vcmp.eq.s32.totalorder %v305, 1
    %v310 = vsel %vm306, %v252, 0.0
    %v311 = vsel %vm307, %v255, 0.0
    %v312 = vsel %vm308, %v260, 0.0
    %v313 = vsel %vm309, %v263, 0.0
    %vm314 = vcmask 261120
    %v315 = vsel %vm314, %v310, 0.0
    %v316 = vsel %vm314, %v311, 0.0
    %v317 = vadd.f32 %v315, %v316
    %v318 = vsel %vm314, %v312, 0.0
    %v319 = vadd.f32 %v317, %v318
    %v320 = vsel %vm314, %v313, 0.0
    %v321 = vadd.f32 %v319, %v320
    %v322 = vrot.slane %v321, 4
    %v323 = vadd.f32 %v321, %v322
    %v324 = vrot.slane %v323, 2
    %v325 = vadd.f32 %v323, %v324
    %v326 = vrot.slane %v325, 1
    %v327 = vadd.f32 %v325, %v326
    %vm328 = vcmask 253952
    %329 = vst.msk [vmem:[#allocation9] sm:$0x1] %vm328, %v327
    %v330 = vmul.f32 %v310, %v310
    %v331 = vmul.f32 %v311, %v311
    %v332 = vmul.f32 %v312, %v312
    %v333 = vmul.f32 %v313, %v313
    %v334 = vsel %vm314, %v330, 0.0
    %v335 = vsel %vm314, %v331, 0.0
    %v336 = vadd.f32 %v334, %v335
    %v337 = vsel %vm314, %v332, 0.0
    %v338 = vadd.f32 %v336, %v337
    %v339 = vsel %vm314, %v333, 0.0
    %v340 = vadd.f32 %v338, %v339
    %v341 = vrot.slane %v340, 4
    %v342 = vadd.f32 %v340, %v341
    %v343 = vrot.slane %v342, 2
    %v344 = vadd.f32 %v342, %v343
    %v345 = vrot.slane %v344, 1
    %v346 = vadd.f32 %v344, %v345
    %347 = vst.msk [vmem:[#allocation9 + $0x1] sm:$0x1] %vm328, %v346
    // Predicated region
    $region26: #{discriminator_forward.11} parent=1 // pred_check
      _
    $region27: #{discriminator_forward.11} parent=1 // pred_check_branch
      %349 = sbr.rel (0) target = $region29
    $region28: #{discriminator_forward.11} parent=1 // pred_region
      %s351 = ssub.s32 256, 256
      %352 = vsyncadd [#allocation4], %s351
      %s353 = sshll.u32 [#allocation8], 4
      %s354 = int_to_ptr.vmem [resolvable:$true] %s353
      %359 = dma.vmem_to_hbm [thread:$0]  %s354, 256, %s3, [#allocation4], 64, 64, 4
    $region29: #{discriminator_forward.11} parent=1 // pred_fallthru
      _
    // Predicated region
    $region30: #{discriminator_forward.11} parent=1 // pred_check
      _
    $region31: #{discriminator_forward.11} parent=1 // pred_check_branch
      %361 = sbr.rel (0) target = $region33
    $region32: #{discriminator_forward.11} parent=1 // pred_region
      %s363 = ssub.s32 32, 32
      %364 = vsyncadd [#allocation10], %s363
      %s366 = sshll.u32 [#allocation9], 4
      %s367 = int_to_ptr.vmem [resolvable:$true] %s366
      %369 = dma.vmem_to_hbm [thread:$0]  %s367, 32, %s4, [#allocation10]
    $region33: #{discriminator_forward.11} parent=1 // pred_fallthru
      _
    // Predicated region
    $region34: #{discriminator_forward.11} parent=1 // pred_check
      _
    $region35: #{discriminator_forward.11} parent=1 // pred_check_branch
      %371 = sbr.rel (0) target = $region37
    $region36: #{discriminator_forward.11} parent=1 // pred_region
      %372 = dma.done [#allocation4], 256
    $region37: #{discriminator_forward.11} parent=1 // pred_fallthru
      _
    // Predicated region
    $region38: #{discriminator_forward.11} parent=1 // pred_check
      _
    $region39: #{discriminator_forward.11} parent=1 // pred_check_branch
      %374 = sbr.rel (0) target = $region41
    $region40: #{discriminator_forward.11} parent=1 // pred_region
      %375 = dma.done [#allocation10], 32
    $region41: #{discriminator_forward.11} parent=1 // pred_fallthru
      _
    %376 = vsyncpa [#allocation3], 1
    %377 = vsyncpa [#allocation6], 1
    %378 = vsyncpa [#allocation4], 1
    %379 = vsyncpa [#allocation10], 1

// kernel: discriminator_forward.12
$region0: #{discriminator_forward.12}
  #allocation0 [shape = 'u32[]', space=smem, size = 0x4, offset = 0x4, fixed_abs, tag = 'smem constant byte address 0x4 - core index']
  #allocation1 [shape = 'u32[144,128]{1,0:T(1,128)}', space=vmem, size = 0x12000, scoped, tag = 'internal scratch']
  %s0 = inlined_call_operand.hbm [shape: bf16[32,32], index: 0, kind: input, shape index: {}]
  %s1 = inlined_call_operand.hbm [shape: f32[1,2,32], index: 1, kind: input, shape index: {}]
  %s2 = inlined_call_operand.hbm [shape: f32[1,32], index: 2, kind: input, shape index: {}]
  %s3 = inlined_call_operand.hbm [shape: f32[1,32], index: 3, kind: input, shape index: {}]
  %s4 = inlined_call_operand.hbm [shape: bf16[32,32], index: 4, kind: output, shape index: {}]
  %s5 = sld [smem:[#allocation0]]
  $region42: #{discriminator_forward.12} parent=0
    _
  %s7 = ssub.s32 1, %s5
  %s8 = scalar_select 0, %s7, %s5
  $region1: #{discriminator_forward.12} parent=0
    #allocation2 [shape = 'u8[8192]{0}', space=vmem, size = 0x2000, scoped, tag = 'input window, operand 0, single buffered']
    #allocation3 [shape = 's32[1]{0}', space=sflag, size = 0x4, scoped, tag = 'scoped memory for discriminator_forward.12']
    #allocation4 [shape = 's32[1]{0}', space=sflag, size = 0x4, scoped, tag = 'scoped memory for discriminator_forward.12']
    #allocation5 [shape = 'u8[1024]{0}', space=vmem, size = 0x400, scoped, tag = 'input window, operand 1, single buffered']
    #allocation6 [shape = 's32[1]{0}', space=sflag, size = 0x4, scoped, tag = 'scoped memory for discriminator_forward.12']
    #allocation7 [shape = 'u8[512]{0}', space=vmem, size = 0x400, scoped, tag = 'input window, operand 2, single buffered']
    #allocation8 [shape = 'u8[512]{0}', space=vmem, size = 0x400, scoped, tag = 'input window, operand 3, single buffered']
    #allocation9 [shape = 's32[1]{0}', space=sflag, size = 0x4, scoped, tag = 'scoped memory for discriminator_forward.12']
    #allocation10 [shape = 'u8[8192]{0}', space=vmem, size = 0x2000, scoped, tag = 'output window, operand 0, single buffered']
    %9 = vsyncpa [#allocation3], 0
    %10 = vsyncpa [#allocation6], 0
    %11 = vsyncpa [#allocation9], 0
    %12 = vsyncpa [#allocation4], 0
    // Predicated region
    $region2: #{discriminator_forward.12} parent=1 // pred_check
      _
    $region3: #{discriminator_forward.12} parent=1 // pred_check_branch
      %14 = sbr.rel (0) target = $region5
    $region4: #{discriminator_forward.12} parent=1 // pred_region
      %s16 = ssub.s32 256, 256
      %17 = vsyncadd [#allocation3], %s16
      %s18 = sshll.u32 [#allocation2], 4
      %s19 = int_to_ptr.vmem [resolvable:$true] %s18
      %24 = dma.hbm_to_vmem [thread:$0]  %s0, 256, %s19, [#allocation3], 64, 64, 4
    $region5: #{discriminator_forward.12} parent=1 // pred_fallthru
      _
    // Predicated region
    $region6: #{discriminator_forward.12} parent=1 // pred_check
      _
    $region7: #{discriminator_forward.12} parent=1 // pred_check_branch
      %26 = sbr.rel (0) target = $region9
    $region8: #{discriminator_forward.12} parent=1 // pred_region
      %s28 = ssub.s32 32, 32
      %29 = vsyncadd [#allocation6], %s28
      %s31 = sshll.u32 [#allocation5], 4
      %s32 = int_to_ptr.vmem [resolvable:$true] %s31
      %34 = dma.hbm_to_vmem [thread:$0]  %s1, 32, %s32, [#allocation6]
    $region9: #{discriminator_forward.12} parent=1 // pred_fallthru
      _
    // Predicated region
    $region10: #{discriminator_forward.12} parent=1 // pred_check
      _
    $region11: #{discriminator_forward.12} parent=1 // pred_check_branch
      %36 = sbr.rel (0) target = $region13
    $region12: #{discriminator_forward.12} parent=1 // pred_region
      %s38 = ssub.s32 16, 16
      %39 = vsyncadd [#allocation6], %s38
      %s41 = sshll.u32 [#allocation7], 4
      %s42 = int_to_ptr.vmem [resolvable:$true] %s41
      %44 = dma.hbm_to_vmem [thread:$0]  %s2, 16, %s42, [#allocation6]
    $region13: #{discriminator_forward.12} parent=1 // pred_fallthru
      _
    // Predicated region
    $region14: #{discriminator_forward.12} parent=1 // pred_check
      _
    $region15: #{discriminator_forward.12} parent=1 // pred_check_branch
      %46 = sbr.rel (0) target = $region17
    $region16: #{discriminator_forward.12} parent=1 // pred_region
      %s48 = ssub.s32 16, 16
      %49 = vsyncadd [#allocation9], %s48
      %s51 = sshll.u32 [#allocation8], 4
      %s52 = int_to_ptr.vmem [resolvable:$true] %s51
      %54 = dma.hbm_to_vmem [thread:$0]  %s3, 16, %s52, [#allocation9]
    $region17: #{discriminator_forward.12} parent=1 // pred_fallthru
      _
    // Predicated region
    $region18: #{discriminator_forward.12} parent=1 // pred_check
      _
    $region19: #{discriminator_forward.12} parent=1 // pred_check_branch
      %56 = sbr.rel (0) target = $region21
    $region20: #{discriminator_forward.12} parent=1 // pred_region
      %57 = dma.done [#allocation3], 256
    $region21: #{discriminator_forward.12} parent=1 // pred_fallthru
      _
    // Predicated region
    $region22: #{discriminator_forward.12} parent=1 // pred_check
      _
    $region23: #{discriminator_forward.12} parent=1 // pred_check_branch
      %59 = sbr.rel (0) target = $region25
    $region24: #{discriminator_forward.12} parent=1 // pred_region
      %60 = dma.done [#allocation6], 32
    $region25: #{discriminator_forward.12} parent=1 // pred_fallthru
      _
    // Predicated region
    $region26: #{discriminator_forward.12} parent=1 // pred_check
      _
    $region27: #{discriminator_forward.12} parent=1 // pred_check_branch
      %62 = sbr.rel (0) target = $region29
    $region28: #{discriminator_forward.12} parent=1 // pred_region
      %63 = dma.done [#allocation6], 16
    $region29: #{discriminator_forward.12} parent=1 // pred_fallthru
      _
    // Predicated region
    $region30: #{discriminator_forward.12} parent=1 // pred_check
      _
    $region31: #{discriminator_forward.12} parent=1 // pred_check_branch
      %65 = sbr.rel (0) target = $region33
    $region32: #{discriminator_forward.12} parent=1 // pred_region
      %66 = dma.done [#allocation9], 16
    $region33: #{discriminator_forward.12} parent=1 // pred_fallthru
      _
    %v67 = vld [vmem:[#allocation5] sm:$0x3]
    %v68 = vadd.f32 %v67, 0.0
    %v69 = vmul.f32 %v68, 0.03125
    %v70 = vmul.f32 %v69, %v69
    %v72 = vrot.slane %v70, 7
    %v74 = vsub.f32 %v69, %v72
    %v75 = vmax.f32 %v74, 0.0
    %v76 = vld [vmem:[#allocation2] sm:$0xf]
    %v77 = vld [vmem:[#allocation2 + $0x4] sm:$0xf]
    %v78 = vld [vmem:[#allocation2 + $0x8] sm:$0xf]
    %v79 = vld [vmem:[#allocation2 + $0xc] sm:$0xf]
    %v80 = vunpack.c.l.bf16 %v76
    %v81 = vunpack.c.l.bf16 %v77
    %v82 = vunpack.c.l.bf16 %v78
    %v83 = vunpack.c.l.bf16 %v79
    %v84 = vlaneseq
    %v85 = vshrl.u32 %v84, 7
    %v86 = vsub.s32 0, %v85
    %v87 = vrot.slane %v69, %v86
    %v88 = vsub.f32 %v80, %v87
    %v89 = vsub.f32 %v81, %v87
    %v90 = vsub.f32 %v82, %v87
    %v91 = vsub.f32 %v83, %v87
    %v92 = vadd.f32 %v75, 1e-05
    %v93 = vrsqrt.pop %v92
    %v94 = vlaneseq
    %v95 = vshrl.u32 %v94, 7
    %v96 = vsub.s32 1, %v95
    %v97 = vrot.slane %v93, %v96
    %v98 = vmul.f32 %v88, %v97
    %v99 = vmul.f32 %v89, %v97
    %v100 = vmul.f32 %v90, %v97
    %v101 = vmul.f32 %v91, %v97
    %v102 = vld [vmem:[#allocation7] sm:$0x1]
    %v104 = vlaneseq
    %v105 = vshrl.u32 %v104, 7
    %v106 = vsub.s32 0, %v105
    %v107 = vrot.slane %v102, %v106
    %v109 = vmul.f32 %v98, %v107
    %v110 = vmul.f32 %v99, %v107
    %v111 = vmul.f32 %v100, %v107
    %v112 = vmul.f32 %v101, %v107
    %v113 = vld [vmem:[#allocation8] sm:$0x1]
    %v115 = vlaneseq
    %v116 = vshrl.u32 %v115, 7
    %v117 = vsub.s32 0, %v116
    %v118 = vrot.slane %v113, %v117
    %v120 = vadd.f32 %v109, %v118
    %v121 = vadd.f32 %v110, %v118
    %v122 = vadd.f32 %v111, %v118
    %v123 = vadd.f32 %v112, %v118
    %vm124 = vcmp.ge.f32.partialorder %v120, 0.0
    %vm125 = vcmp.ge.f32.partialorder %v121, 0.0
    %vm126 = vcmp.ge.f32.partialorder %v122, 0.0
    %vm127 = vcmp.ge.f32.partialorder %v123, 0.0
    %v128 = vmul.f32 %v120, 0.2
    %v129 = vmul.f32 %v121, 0.2
    %v130 = vmul.f32 %v122, 0.2
    %v131 = vmul.f32 %v123, 0.2
    %v132 = vsel %vm124, %v120, %v128
    %v133 = vsel %vm125, %v121, %v129
    %v134 = vsel %vm126, %v122, %v130
    %v135 = vsel %vm127, %v123, %v131
    %v136 = vpack.c.bf16 %v133, %v132
    %v137 = vpack.c.bf16 %v135, %v134
    %v140 = vunpack.c.l.b16 %v136
    %v141 = vunpack.c.h.b16 %v136
    %v142 = vunpack.c.l.b16 %v137
    %v143 = vunpack.c.h.b16 %v137
    %v144 = vpack.c.b16 %v140, %v140
    %v145 = vpack.c.b16 %v141, %v141
    %v146 = vpack.c.b16 %v142, %v142
    %v147 = vpack.c.b16 %v143, %v143
    %vm152 = vcmask 257024
    %153 = vst.msk [vmem:[#allocation10] sm:$0xf] %vm152, %v144
    %154 = vst.msk [vmem:[#allocation10 + $0x4] sm:$0xf] %vm152, %v145
    %155 = vst.msk [vmem:[#allocation10 + $0x8] sm:$0xf] %vm152, %v146
    %156 = vst.msk [vmem:[#allocation10 + $0xc] sm:$0xf] %vm152, %v147
    // Predicated region
    $region34: #{discriminator_forward.12} parent=1 // pred_check
      _
    $region35: #{discriminator_forward.12} parent=1 // pred_check_branch
      %158 = sbr.rel (0) target = $region37
    $region36: #{discriminator_forward.12} parent=1 // pred_region
      %s160 = ssub.s32 256, 256
      %161 = vsyncadd [#allocation4], %s160
      %s162 = sshll.u32 [#allocation10], 4
      %s163 = int_to_ptr.vmem [resolvable:$true] %s162
      %168 = dma.vmem_to_hbm [thread:$0]  %s163, 256, %s4, [#allocation4], 64, 64, 4
    $region37: #{discriminator_forward.12} parent=1 // pred_fallthru
      _
    // Predicated region
    $region38: #{discriminator_forward.12} parent=1 // pred_check
      _
    $region39: #{discriminator_forward.12} parent=1 // pred_check_branch
      %170 = sbr.rel (0) target = $region41
    $region40: #{discriminator_forward.12} parent=1 // pred_region
      %171 = dma.done [#allocation4], 256
    $region41: #{discriminator_forward.12} parent=1 // pred_fallthru
      _
    %172 = vsyncpa [#allocation3], 1
    %173 = vsyncpa [#allocation6], 1
    %174 = vsyncpa [#allocation9], 1
    %175 = vsyncpa [#allocation4], 1

// kernel: discriminator_forward.14
$region0: #{discriminator_forward.14}
  #allocation0 [shape = 'u32[]', space=smem, size = 0x4, offset = 0x4, fixed_abs, tag = 'smem constant byte address 0x4 - core index']
  #allocation1 [shape = 'u32[144,128]{1,0:T(1,128)}', space=vmem, size = 0x12000, scoped, tag = 'internal scratch']
  %s0 = inlined_call_operand.hbm [shape: bf16[18,64], index: 0, kind: input, shape index: {}]
  %s1 = inlined_call_operand.hbm [shape: f32[1,2,64], index: 1, kind: input, shape index: {}]
  %s2 = inlined_call_operand.hbm [shape: f32[1,64], index: 2, kind: input, shape index: {}]
  %s3 = inlined_call_operand.hbm [shape: f32[1,64], index: 3, kind: input, shape index: {}]
  %s4 = inlined_call_operand.hbm [shape: bf16[18,64], index: 4, kind: output, shape index: {}]
  %s5 = sld [smem:[#allocation0]]
  $region42: #{discriminator_forward.14} parent=0
    _
  %s7 = ssub.s32 1, %s5
  %s8 = scalar_select 0, %s7, %s5
  $region1: #{discriminator_forward.14} parent=0
    #allocation2 [shape = 'u8[6144]{0}', space=vmem, size = 0x1800, scoped, tag = 'input window, operand 0, single buffered']
    #allocation3 [shape = 's32[1]{0}', space=sflag, size = 0x4, scoped, tag = 'scoped memory for discriminator_forward.14']
    #allocation4 [shape = 's32[1]{0}', space=sflag, size = 0x4, scoped, tag = 'scoped memory for discriminator_forward.14']
    #allocation5 [shape = 'u8[1024]{0}', space=vmem, size = 0x400, scoped, tag = 'input window, operand 1, single buffered']
    #allocation6 [shape = 's32[1]{0}', space=sflag, size = 0x4, scoped, tag = 'scoped memory for discriminator_forward.14']
    #allocation7 [shape = 'u8[512]{0}', space=vmem, size = 0x400, scoped, tag = 'input window, operand 2, single buffered']
    #allocation8 [shape = 'u8[512]{0}', space=vmem, size = 0x400, scoped, tag = 'input window, operand 3, single buffered']
    #allocation9 [shape = 's32[1]{0}', space=sflag, size = 0x4, scoped, tag = 'scoped memory for discriminator_forward.14']
    #allocation10 [shape = 'u8[6144]{0}', space=vmem, size = 0x1800, scoped, tag = 'output window, operand 0, single buffered']
    %9 = vsyncpa [#allocation3], 0
    %10 = vsyncpa [#allocation6], 0
    %11 = vsyncpa [#allocation9], 0
    %12 = vsyncpa [#allocation4], 0
    // Predicated region
    $region2: #{discriminator_forward.14} parent=1 // pred_check
      _
    $region3: #{discriminator_forward.14} parent=1 // pred_check_branch
      %14 = sbr.rel (0) target = $region5
    $region4: #{discriminator_forward.14} parent=1 // pred_region
      %s16 = ssub.s32 192, 192
      %17 = vsyncadd [#allocation3], %s16
      %s18 = sshll.u32 [#allocation2], 4
      %s19 = int_to_ptr.vmem [resolvable:$true] %s18
      %24 = dma.hbm_to_vmem [thread:$0]  %s0, 192, %s19, [#allocation3], 64, 64, 4
    $region5: #{discriminator_forward.14} parent=1 // pred_fallthru
      _
    // Predicated region
    $region6: #{discriminator_forward.14} parent=1 // pred_check
      _
    $region7: #{discriminator_forward.14} parent=1 // pred_check_branch
      %26 = sbr.rel (0) target = $region9
    $region8: #{discriminator_forward.14} parent=1 // pred_region
      %s28 = ssub.s32 32, 32
      %29 = vsyncadd [#allocation6], %s28
      %s31 = sshll.u32 [#allocation5], 4
      %s32 = int_to_ptr.vmem [resolvable:$true] %s31
      %34 = dma.hbm_to_vmem [thread:$0]  %s1, 32, %s32, [#allocation6]
    $region9: #{discriminator_forward.14} parent=1 // pred_fallthru
      _
    // Predicated region
    $region10: #{discriminator_forward.14} parent=1 // pred_check
      _
    $region11: #{discriminator_forward.14} parent=1 // pred_check_branch
      %36 = sbr.rel (0) target = $region13
    $region12: #{discriminator_forward.14} parent=1 // pred_region
      %s38 = ssub.s32 16, 16
      %39 = vsyncadd [#allocation6], %s38
      %s41 = sshll.u32 [#allocation7], 4
      %s42 = int_to_ptr.vmem [resolvable:$true] %s41
      %44 = dma.hbm_to_vmem [thread:$0]  %s2, 16, %s42, [#allocation6]
    $region13: #{discriminator_forward.14} parent=1 // pred_fallthru
      _
    // Predicated region
    $region14: #{discriminator_forward.14} parent=1 // pred_check
      _
    $region15: #{discriminator_forward.14} parent=1 // pred_check_branch
      %46 = sbr.rel (0) target = $region17
    $region16: #{discriminator_forward.14} parent=1 // pred_region
      %s48 = ssub.s32 16, 16
      %49 = vsyncadd [#allocation9], %s48
      %s51 = sshll.u32 [#allocation8], 4
      %s52 = int_to_ptr.vmem [resolvable:$true] %s51
      %54 = dma.hbm_to_vmem [thread:$0]  %s3, 16, %s52, [#allocation9]
    $region17: #{discriminator_forward.14} parent=1 // pred_fallthru
      _
    // Predicated region
    $region18: #{discriminator_forward.14} parent=1 // pred_check
      _
    $region19: #{discriminator_forward.14} parent=1 // pred_check_branch
      %56 = sbr.rel (0) target = $region21
    $region20: #{discriminator_forward.14} parent=1 // pred_region
      %57 = dma.done [#allocation3], 192
    $region21: #{discriminator_forward.14} parent=1 // pred_fallthru
      _
    // Predicated region
    $region22: #{discriminator_forward.14} parent=1 // pred_check
      _
    $region23: #{discriminator_forward.14} parent=1 // pred_check_branch
      %59 = sbr.rel (0) target = $region25
    $region24: #{discriminator_forward.14} parent=1 // pred_region
      %60 = dma.done [#allocation6], 32
    $region25: #{discriminator_forward.14} parent=1 // pred_fallthru
      _
    // Predicated region
    $region26: #{discriminator_forward.14} parent=1 // pred_check
      _
    $region27: #{discriminator_forward.14} parent=1 // pred_check_branch
      %62 = sbr.rel (0) target = $region29
    $region28: #{discriminator_forward.14} parent=1 // pred_region
      %63 = dma.done [#allocation6], 16
    $region29: #{discriminator_forward.14} parent=1 // pred_fallthru
      _
    // Predicated region
    $region30: #{discriminator_forward.14} parent=1 // pred_check
      _
    $region31: #{discriminator_forward.14} parent=1 // pred_check_branch
      %65 = sbr.rel (0) target = $region33
    $region32: #{discriminator_forward.14} parent=1 // pred_region
      %66 = dma.done [#allocation9], 16
    $region33: #{discriminator_forward.14} parent=1 // pred_fallthru
      _
    %v67 = vld [vmem:[#allocation5] sm:$0x3]
    %v68 = vadd.f32 %v67, 0.0
    %v69 = vmul.f32 %v68, 0.055555556
    %v70 = vmul.f32 %v69, %v69
    %v72 = vrot.slane %v70, 7
    %v74 = vsub.f32 %v69, %v72
    %v75 = vmax.f32 %v74, 0.0
    %v76 = vld [vmem:[#allocation2] sm:$0xf]
    %v77 = vld [vmem:[#allocation2 + $0x4] sm:$0xf]
    %v78 = vld [vmem:[#allocation2 + $0x8] sm:$0x1]
    %v79 = vunpack.c.l.bf16 %v76
    %v80 = vunpack.c.l.bf16 %v77
    %v81 = vunpack.c.l.bf16 %v78
    %v82 = vlaneseq
    %v83 = vshrl.u32 %v82, 7
    %v84 = vsub.s32 0, %v83
    %v85 = vrot.slane %v69, %v84
    %v86 = vsub.f32 %v79, %v85
    %v87 = vsub.f32 %v80, %v85
    %v88 = vsub.f32 %v81, %v85
    %v89 = vadd.f32 %v75, 1e-05
    %v90 = vrsqrt.pop %v89
    %v91 = vlaneseq
    %v92 = vshrl.u32 %v91, 7
    %v93 = vsub.s32 1, %v92
    %v94 = vrot.slane %v90, %v93
    %v95 = vmul.f32 %v86, %v94
    %v96 = vmul.f32 %v87, %v94
    %v97 = vmul.f32 %v88, %v94
    %v98 = vld [vmem:[#allocation7] sm:$0x1]
    %v100 = vlaneseq
    %v101 = vshrl.u32 %v100, 7
    %v102 = vsub.s32 0, %v101
    %v103 = vrot.slane %v98, %v102
    %v105 = vmul.f32 %v95, %v103
    %v106 = vmul.f32 %v96, %v103
    %v107 = vmul.f32 %v97, %v103
    %v108 = vld [vmem:[#allocation8] sm:$0x1]
    %v110 = vlaneseq
    %v111 = vshrl.u32 %v110, 7
    %v112 = vsub.s32 0, %v111
    %v113 = vrot.slane %v108, %v112
    %v115 = vadd.f32 %v105, %v113
    %v116 = vadd.f32 %v106, %v113
    %v117 = vadd.f32 %v107, %v113
    %vm118 = vcmp.ge.f32.partialorder %v115, 0.0
    %vm119 = vcmp.ge.f32.partialorder %v116, 0.0
    %vm120 = vcmp.ge.f32.partialorder %v117, 0.0
    %v121 = vmul.f32 %v115, 0.2
    %v122 = vmul.f32 %v116, 0.2
    %v123 = vmul.f32 %v117, 0.2
    %v124 = vsel %vm118, %v115, %v121
    %v125 = vsel %vm119, %v116, %v122
    %v126 = vsel %vm120, %v117, %v123
    %v127 = vpack.c.bf16 %v125, %v124
    %v128 = vpack.c.bf16 %v126, %v126
    %v131 = vunpack.c.l.b16 %v127
    %v132 = vunpack.c.h.b16 %v127
    %v133 = vunpack.c.l.b16 %v128
    %v134 = vpack.c.b16 %v131, %v131
    %v135 = vpack.c.b16 %v132, %v132
    %v136 = vpack.c.b16 %v133, %v133
    %vm140 = vcmask 519168
    %141 = vst.msk [vmem:[#allocation10] sm:$0xf] %vm140, %v134
    %142 = vst.msk [vmem:[#allocation10 + $0x4] sm:$0xf] %vm140, %v135
    %vm143 = vcmask 516096
    %144 = vst.msk [vmem:[#allocation10 + $0x8] sm:$0x1] %vm143, %v136
    // Predicated region
    $region34: #{discriminator_forward.14} parent=1 // pred_check
      _
    $region35: #{discriminator_forward.14} parent=1 // pred_check_branch
      %146 = sbr.rel (0) target = $region37
    $region36: #{discriminator_forward.14} parent=1 // pred_region
      %s148 = ssub.s32 192, 192
      %149 = vsyncadd [#allocation4], %s148
      %s150 = sshll.u32 [#allocation10], 4
      %s151 = int_to_ptr.vmem [resolvable:$true] %s150
      %156 = dma.vmem_to_hbm [thread:$0]  %s151, 192, %s4, [#allocation4], 64, 64, 4
    $region37: #{discriminator_forward.14} parent=1 // pred_fallthru
      _
    // Predicated region
    $region38: #{discriminator_forward.14} parent=1 // pred_check
      _
    $region39: #{discriminator_forward.14} parent=1 // pred_check_branch
      %158 = sbr.rel (0) target = $region41
    $region40: #{discriminator_forward.14} parent=1 // pred_region
      %159 = dma.done [#allocation4], 192
    $region41: #{discriminator_forward.14} parent=1 // pred_fallthru
      _
    %160 = vsyncpa [#allocation3], 1
    %161 = vsyncpa [#allocation6], 1
    %162 = vsyncpa [#allocation9], 1
    %163 = vsyncpa [#allocation4], 1

// kernel: discriminator_forward.13
$region0: #{discriminator_forward.13}
  #allocation0 [shape = 'u32[]', space=smem, size = 0x4, offset = 0x4, fixed_abs, tag = 'smem constant byte address 0x4 - core index']
  #allocation1 [shape = 'u32[144,128]{1,0:T(1,128)}', space=vmem, size = 0x12000, scoped, tag = 'internal scratch']
  %s0 = inlined_call_operand.hbm [shape: bf16[18,512], index: 0, kind: input, shape index: {}]
  %s1 = inlined_call_operand.hbm [shape: bf16[512,64], index: 1, kind: input, shape index: {}]
  %s2 = inlined_call_operand.hbm [shape: f32[1,64], index: 2, kind: input, shape index: {}]
  %s3 = inlined_call_operand.hbm [shape: bf16[18,64], index: 3, kind: output, shape index: {0}]
  %s4 = inlined_call_operand.hbm [shape: f32[1,2,64], index: 4, kind: output, shape index: {1}]
  %5 = xla_tuple %s3, %s4
  %s6 = sld [smem:[#allocation0]]
  $region42: #{discriminator_forward.13} parent=0
    _
  %s8 = ssub.s32 1, %s6
  %s9 = scalar_select 0, %s8, %s6
  $region1: #{discriminator_forward.13} parent=0
    #allocation2 [shape = 'u8[24576]{0}', space=vmem, size = 0x6000, scoped, tag = 'input window, operand 0, single buffered']
    #allocation3 [shape = 's32[1]{0}', space=sflag, size = 0x4, scoped, tag = 'scoped memory for discriminator_forward.13']
    #allocation4 [shape = 's32[1]{0}', space=sflag, size = 0x4, scoped, tag = 'scoped memory for discriminator_forward.13']
    #allocation5 [shape = 'u8[131072]{0}', space=vmem, size = 0x20000, scoped, tag = 'input window, operand 1, single buffered']
    #allocation6 [shape = 's32[1]{0}', space=sflag, size = 0x4, scoped, tag = 'scoped memory for discriminator_forward.13']
    #allocation7 [shape = 'u8[512]{0}', space=vmem, size = 0x400, scoped, tag = 'input window, operand 2, single buffered']
    #allocation8 [shape = 'u8[6144]{0}', space=vmem, size = 0x1800, scoped, tag = 'output window, operand 0, single buffered']
    #allocation9 [shape = 'u8[1024]{0}', space=vmem, size = 0x400, scoped, tag = 'output window, operand 1, single buffered']
    #allocation10 [shape = 's32[1]{0}', space=sflag, size = 0x4, scoped, tag = 'scoped memory for discriminator_forward.13']
    %10 = vsyncpa [#allocation3], 0
    %11 = vsyncpa [#allocation6], 0
    %12 = vsyncpa [#allocation4], 0
    %13 = vsyncpa [#allocation10], 0
    // Predicated region
    $region2: #{discriminator_forward.13} parent=1 // pred_check
      _
    $region3: #{discriminator_forward.13} parent=1 // pred_check_branch
      %15 = sbr.rel (0) target = $region5
    $region4: #{discriminator_forward.13} parent=1 // pred_region
      %s17 = ssub.s32 768, 768
      %18 = vsyncadd [#allocation3], %s17
      %s19 = sshll.u32 [#allocation2], 4
      %s20 = int_to_ptr.vmem [resolvable:$true] %s19
      %25 = dma.hbm_to_vmem [thread:$0]  %s0, 768, %s20, [#allocation3], 256, 256, 16
    $region5: #{discriminator_forward.13} parent=1 // pred_fallthru
      _
    // Predicated region
    $region6: #{discriminator_forward.13} parent=1 // pred_check
      _
    $region7: #{discriminator_forward.13} parent=1 // pred_check_branch
      %27 = sbr.rel (0) target = $region9
    $region8: #{discriminator_forward.13} parent=1 // pred_region
      %s29 = ssub.s32 4096, 4096
      %30 = vsyncadd [#allocation6], %s29
      %s31 = sshll.u32 [#allocation5], 4
      %s32 = int_to_ptr.vmem [resolvable:$true] %s31
      %37 = dma.hbm_to_vmem [thread:$0]  %s1, 4096, %s32, [#allocation6], 64, 64, 4
    $region9: #{discriminator_forward.13} parent=1 // pred_fallthru
      _
    // Predicated region
    $region10: #{discriminator_forward.13} parent=1 // pred_check
      _
    $region11: #{discriminator_forward.13} parent=1 // pred_check_branch
      %39 = sbr.rel (0) target = $region13
    $region12: #{discriminator_forward.13} parent=1 // pred_region
      %s41 = ssub.s32 16, 16
      %42 = vsyncadd [#allocation6], %s41
      %s44 = sshll.u32 [#allocation7], 4
      %s45 = int_to_ptr.vmem [resolvable:$true] %s44
      %47 = dma.hbm_to_vmem [thread:$0]  %s2, 16, %s45, [#allocation6]
    $region13: #{discriminator_forward.13} parent=1 // pred_fallthru
      _
    // Predicated region
    $region14: #{discriminator_forward.13} parent=1 // pred_check
      _
    $region15: #{discriminator_forward.13} parent=1 // pred_check_branch
      %49 = sbr.rel (0) target = $region17
    $region16: #{discriminator_forward.13} parent=1 // pred_region
      %50 = dma.done [#allocation3], 768
    $region17: #{discriminator_forward.13} parent=1 // pred_fallthru
      _
    // Predicated region
    $region18: #{discriminator_forward.13} parent=1 // pred_check
      _
    $region19: #{discriminator_forward.13} parent=1 // pred_check_branch
      %52 = sbr.rel (0) target = $region21
    $region20: #{discriminator_forward.13} parent=1 // pred_region
      %53 = dma.done [#allocation6], 4096
    $region21: #{discriminator_forward.13} parent=1 // pred_fallthru
      _
    // Predicated region
    $region22: #{discriminator_forward.13} parent=1 // pred_check
      _
    $region23: #{discriminator_forward.13} parent=1 // pred_check_branch
      %55 = sbr.rel (0) target = $region25
    $region24: #{discriminator_forward.13} parent=1 // pred_region
      %56 = dma.done [#allocation6], 16
    $region25: #{discriminator_forward.13} parent=1 // pred_fallthru
      _
    %v58 = vld [vmem:[#allocation2] sm:$0xff]
    %v59 = vld [vmem:[#allocation2 + $0x8] sm:$0xff]
    %v60 = vld [vmem:[#allocation2 + $0x10] sm:$0xff]
    %v61 = vld [vmem:[#allocation2 + $0x18] sm:$0xff]
    %v62 = vld [vmem:[#allocation2 + $0x20] sm:$0x11]
    %v63 = vld [vmem:[#allocation2 + $0x28] sm:$0x11]
    %v64 = vld [vmem:[#allocation5] sm:$0xf]
    %v65 = vld [vmem:[#allocation5 + $0x4] sm:$0xf]
    %v66 = vld [vmem:[#allocation5 + $0x8] sm:$0xf]
    %v67 = vld [vmem:[#allocation5 + $0xc] sm:$0xf]
    %v68 = vld [vmem:[#allocation5 + $0x10] sm:$0xf]
    %v69 = vld [vmem:[#allocation5 + $0x14] sm:$0xf]
    %v70 = vld [vmem:[#allocation5 + $0x18] sm:$0xf]
    %v71 = vld [vmem:[#allocation5 + $0x1c] sm:$0xf]
    %v72 = vld [vmem:[#allocation5 + $0x20] sm:$0xf]
    %v73 = vld [vmem:[#allocation5 + $0x24] sm:$0xf]
    %v74 = vld [vmem:[#allocation5 + $0x28] sm:$0xf]
    %v75 = vld [vmem:[#allocation5 + $0x2c] sm:$0xf]
    %v76 = vld [vmem:[#allocation5 + $0x30] sm:$0xf]
    %v77 = vld [vmem:[#allocation5 + $0x34] sm:$0xf]
    %v78 = vld [vmem:[#allocation5 + $0x38] sm:$0xf]
    %v79 = vld [vmem:[#allocation5 + $0x3c] sm:$0xf]
    %v80 = vld [vmem:[#allocation5 + $0x40] sm:$0xf]
    %v81 = vld [vmem:[#allocation5 + $0x44] sm:$0xf]
    %v82 = vld [vmem:[#allocation5 + $0x48] sm:$0xf]
    %v83 = vld [vmem:[#allocation5 + $0x4c] sm:$0xf]
    %v84 = vld [vmem:[#allocation5 + $0x50] sm:$0xf]
    %v85 = vld [vmem:[#allocation5 + $0x54] sm:$0xf]
    %v86 = vld [vmem:[#allocation5 + $0x58] sm:$0xf]
    %v87 = vld [vmem:[#allocation5 + $0x5c] sm:$0xf]
    %v88 = vld [vmem:[#allocation5 + $0x60] sm:$0xf]
    %v89 = vld [vmem:[#allocation5 + $0x64] sm:$0xf]
    %v90 = vld [vmem:[#allocation5 + $0x68] sm:$0xf]
    %v91 = vld [vmem:[#allocation5 + $0x6c] sm:$0xf]
    %v92 = vld [vmem:[#allocation5 + $0x70] sm:$0xf]
    %v93 = vld [vmem:[#allocation5 + $0x74] sm:$0xf]
    %v94 = vld [vmem:[#allocation5 + $0x78] sm:$0xf]
    %v95 = vld [vmem:[#allocation5 + $0x7c] sm:$0xf]
    %v96 = vld [vmem:[#allocation5 + $0x80] sm:$0xf]
    %v97 = vld [vmem:[#allocation5 + $0x84] sm:$0xf]
    %v98 = vld [vmem:[#allocation5 + $0x88] sm:$0xf]
    %v99 = vld [vmem:[#allocation5 + $0x8c] sm:$0xf]
    %v100 = vld [vmem:[#allocation5 + $0x90] sm:$0xf]
    %v101 = vld [vmem:[#allocation5 + $0x94] sm:$0xf]
    %v102 = vld [vmem:[#allocation5 + $0x98] sm:$0xf]
    %v103 = vld [vmem:[#allocation5 + $0x9c] sm:$0xf]
    %v104 = vld [vmem:[#allocation5 + $0xa0] sm:$0xf]
    %v105 = vld [vmem:[#allocation5 + $0xa4] sm:$0xf]
    %v106 = vld [vmem:[#allocation5 + $0xa8] sm:$0xf]
    %v107 = vld [vmem:[#allocation5 + $0xac] sm:$0xf]
    %v108 = vld [vmem:[#allocation5 + $0xb0] sm:$0xf]
    %v109 = vld [vmem:[#allocation5 + $0xb4] sm:$0xf]
    %v110 = vld [vmem:[#allocation5 + $0xb8] sm:$0xf]
    %v111 = vld [vmem:[#allocation5 + $0xbc] sm:$0xf]
    %v112 = vld [vmem:[#allocation5 + $0xc0] sm:$0xf]
    %v113 = vld [vmem:[#allocation5 + $0xc4] sm:$0xf]
    %v114 = vld [vmem:[#allocation5 + $0xc8] sm:$0xf]
    %v115 = vld [vmem:[#allocation5 + $0xcc] sm:$0xf]
    %v116 = vld [vmem:[#allocation5 + $0xd0] sm:$0xf]
    %v117 = vld [vmem:[#allocation5 + $0xd4] sm:$0xf]
    %v118 = vld [vmem:[#allocation5 + $0xd8] sm:$0xf]
    %v119 = vld [vmem:[#allocation5 + $0xdc] sm:$0xf]
    %v120 = vld [vmem:[#allocation5 + $0xe0] sm:$0xf]
    %v121 = vld [vmem:[#allocation5 + $0xe4] sm:$0xf]
    %v122 = vld [vmem:[#allocation5 + $0xe8] sm:$0xf]
    %v123 = vld [vmem:[#allocation5 + $0xec] sm:$0xf]
    %v124 = vld [vmem:[#allocation5 + $0xf0] sm:$0xf]
    %v125 = vld [vmem:[#allocation5 + $0xf4] sm:$0xf]
    %v126 = vld [vmem:[#allocation5 + $0xf8] sm:$0xf]
    %v127 = vld [vmem:[#allocation5 + $0xfc] sm:$0xf]
    %v128 = vld [vmem:[#allocation7] sm:$0x1]
    %v130 = vlaneseq
    %v131 = vshrl.u32 %v130, 7
    %v132 = vsub.s32 0, %v131
    %v133 = vrot.slane %v128, %v132
    %v141 = vunpack.c.l.b16 %v58
    %v142 = vunpack.c.h.b16 %v58
    %v143 = vunpack.c.l.b16 %v59
    %v144 = vunpack.c.h.b16 %v59
    %v145 = vunpack.c.l.b16 %v60
    %v146 = vunpack.c.h.b16 %v60
    %v147 = vunpack.c.l.b16 %v61
    %v148 = vunpack.c.h.b16 %v61
    %v149 = vunpack.c.l.b16 %v62
    %v150 = vunpack.c.h.b16 %v62
    %v151 = vunpack.c.l.b16 %v63
    %v152 = vunpack.c.h.b16 %v63
    %v153 = vpack.c.b16 %v145, %v141
    %v154 = vpack.c.b16 %v146, %v142
    %v155 = vpack.c.b16 %v147, %v143
    %v156 = vpack.c.b16 %v148, %v144
    %v157 = vpack.c.b16 %v149, %v149
    %v158 = vpack.c.b16 %v150, %v150
    %v159 = vpack.c.b16 %v151, %v151
    %v160 = vpack.c.b16 %v152, %v152
    %v233 = vunpack.c.l.b16 %v64
    %v234 = vunpack.c.l.b16 %v65
    %v235 = vunpack.c.l.b16 %v66
    %v236 = vunpack.c.l.b16 %v67
    %v237 = vunpack.c.l.b16 %v68
    %v238 = vunpack.c.l.b16 %v69
    %v239 = vunpack.c.l.b16 %v70
    %v240 = vunpack.c.l.b16 %v71
    %v241 = vunpack.c.l.b16 %v72
    %v242 = vunpack.c.l.b16 %v73
    %v243 = vunpack.c.l.b16 %v74
    %v244 = vunpack.c.l.b16 %v75
    %v245 = vunpack.c.l.b16 %v76
    %v246 = vunpack.c.l.b16 %v77
    %v247 = vunpack.c.l.b16 %v78
    %v248 = vunpack.c.l.b16 %v79
    %v249 = vunpack.c.l.b16 %v80
    %v250 = vunpack.c.l.b16 %v81
    %v251 = vunpack.c.l.b16 %v82
    %v252 = vunpack.c.l.b16 %v83
    %v253 = vunpack.c.l.b16 %v84
    %v254 = vunpack.c.l.b16 %v85
    %v255 = vunpack.c.l.b16 %v86
    %v256 = vunpack.c.l.b16 %v87
    %v257 = vunpack.c.l.b16 %v88
    %v258 = vunpack.c.l.b16 %v89
    %v259 = vunpack.c.l.b16 %v90
    %v260 = vunpack.c.l.b16 %v91
    %v261 = vunpack.c.l.b16 %v92
    %v262 = vunpack.c.l.b16 %v93
    %v263 = vunpack.c.l.b16 %v94
    %v264 = vunpack.c.l.b16 %v95
    %v265 = vunpack.c.l.b16 %v96
    %v266 = vunpack.c.l.b16 %v97
    %v267 = vunpack.c.l.b16 %v98
    %v268 = vunpack.c.l.b16 %v99
    %v269 = vunpack.c.l.b16 %v100
    %v270 = vunpack.c.l.b16 %v101
    %v271 = vunpack.c.l.b16 %v102
    %v272 = vunpack.c.l.b16 %v103
    %v273 = vunpack.c.l.b16 %v104
    %v274 = vunpack.c.l.b16 %v105
    %v275 = vunpack.c.l.b16 %v106
    %v276 = vunpack.c.l.b16 %v107
    %v277 = vunpack.c.l.b16 %v108
    %v278 = vunpack.c.l.b16 %v109
    %v279 = vunpack.c.l.b16 %v110
    %v280 = vunpack.c.l.b16 %v111
    %v281 = vunpack.c.l.b16 %v112
    %v282 = vunpack.c.l.b16 %v113
    %v283 = vunpack.c.l.b16 %v114
    %v284 = vunpack.c.l.b16 %v115
    %v285 = vunpack.c.l.b16 %v116
    %v286 = vunpack.c.l.b16 %v117
    %v287 = vunpack.c.l.b16 %v118
    %v288 = vunpack.c.l.b16 %v119
    %v289 = vunpack.c.l.b16 %v120
    %v290 = vunpack.c.l.b16 %v121
    %v291 = vunpack.c.l.b16 %v122
    %v292 = vunpack.c.l.b16 %v123
    %v293 = vunpack.c.l.b16 %v124
    %v294 = vunpack.c.l.b16 %v125
    %v295 = vunpack.c.l.b16 %v126
    %v296 = vunpack.c.l.b16 %v127
    %v297 = vpack.c.b16 %v234, %v233
    %v298 = vpack.c.b16 %v236, %v235
    %v299 = vpack.c.b16 %v238, %v237
    %v300 = vpack.c.b16 %v240, %v239
    %v301 = vpack.c.b16 %v242, %v241
    %v302 = vpack.c.b16 %v244, %v243
    %v303 = vpack.c.b16 %v246, %v245
    %v304 = vpack.c.b16 %v248, %v247
    %v305 = vpack.c.b16 %v250, %v249
    %v306 = vpack.c.b16 %v252, %v251
    %v307 = vpack.c.b16 %v254, %v253
    %v308 = vpack.c.b16 %v256, %v255
    %v309 = vpack.c.b16 %v258, %v257
    %v310 = vpack.c.b16 %v260, %v259
    %v311 = vpack.c.b16 %v262, %v261
    %v312 = vpack.c.b16 %v264, %v263
    %v313 = vpack.c.b16 %v266, %v265
    %v314 = vpack.c.b16 %v268, %v267
    %v315 = vpack.c.b16 %v270, %v269
    %v316 = vpack.c.b16 %v272, %v271
    %v317 = vpack.c.b16 %v274, %v273
    %v318 = vpack.c.b16 %v276, %v275
    %v319 = vpack.c.b16 %v278, %v277
    %v320 = vpack.c.b16 %v280, %v279
    %v321 = vpack.c.b16 %v282, %v281
    %v322 = vpack.c.b16 %v284, %v283
    %v323 = vpack.c.b16 %v286, %v285
    %v324 = vpack.c.b16 %v288, %v287
    %v325 = vpack.c.b16 %v290, %v289
    %v326 = vpack.c.b16 %v292, %v291
    %v327 = vpack.c.b16 %v294, %v293
    %v328 = vpack.c.b16 %v296, %v295
    %361 = vmatprep.subr.bf16.mxu0 0
    %362 = vmatpush1.bf16.msra.mxu0 %v297
    %363 = vmatprep.subr.bf16.mxu0 0
    %364 = vmatpush1.bf16.msra.mxu0 %v298
    %365 = vmatprep.subr.bf16.mxu0 0
    %366 = vmatpush1.bf16.msra.mxu0 %v299
    %367 = vmatprep.subr.bf16.mxu0 0
    %368 = vmatpush1.bf16.msra.mxu0 %v300
    %369 = vmatprep.subr.bf16.mxu0 0
    %370 = vmatpush1.bf16.msra.mxu0 %v301
    %371 = vmatprep.subr.bf16.mxu0 0
    %372 = vmatpush1.bf16.msra.mxu0 %v302
    %373 = vmatprep.subr.bf16.mxu0 0
    %374 = vmatpush1.bf16.msra.mxu0 %v303
    %375 = vmatprep.subr.bf16.mxu0 0
    %376 = vmatpush1.bf16.msra.mxu0 %v304
    %377 = vmatprep.subr.bf16.mxu0 0
    %378 = vmatpush1.bf16.msra.mxu0 %v305
    %379 = vmatprep.subr.bf16.mxu0 0
    %380 = vmatpush1.bf16.msra.mxu0 %v306
    %381 = vmatprep.subr.bf16.mxu0 0
    %382 = vmatpush1.bf16.msra.mxu0 %v307
    %383 = vmatprep.subr.bf16.mxu0 0
    %384 = vmatpush1.bf16.msra.mxu0 %v308
    %385 = vmatprep.subr.bf16.mxu0 0
    %386 = vmatpush1.bf16.msra.mxu0 %v309
    %387 = vmatprep.subr.bf16.mxu0 0
    %388 = vmatpush1.bf16.msra.mxu0 %v310
    %389 = vmatprep.subr.bf16.mxu0 0
    %390 = vmatpush1.bf16.msra.mxu0 %v311
    %391 = vmatprep.subr.bf16.mxu0 0
    %392 = vmatpush1.bf16.msra.mxu0 %v312
    %393 = vmatprep.mubr.bf16.mxu0 %v154
    %394 = vmatmul.mubr.bf16.gmra.mrb[0].mxu0 %v153
    %v395 = vpop.f32.mrb[0].mxu0
    %v396 = vadd.f32 %v133, %v395
    %v397 = vpop.f32.mrb[0].mxu0
    %v398 = vpop.f32.mrb[0].mxu0
    %v399 = vadd.f32 %v133, %v398
    %v400 = vpop.f32.mrb[0].mxu0
    %401 = vmatprep.mubr.bf16.mxu0 %v158
    %402 = vmatmul.mubr.bf16.gmra.mrb[0].mxu0 %v157
    %v403 = vpop.f32.mrb[0].mxu0
    %v404 = vadd.f32 %v133, %v403
    %v405 = vpop.f32.mrb[0].mxu0
    %v406 = vpop.f32.mrb[0].mxu0
    %v407 = vpop.f32.mrb[0].mxu0
    %408 = vdwg.mxu0
    %409 = vmatprep.subr.bf16.mxu0 0
    %410 = vmatpush1.bf16.msra.mxu0 %v313
    %411 = vmatprep.subr.bf16.mxu0 0
    %412 = vmatpush1.bf16.msra.mxu0 %v314
    %413 = vmatprep.subr.bf16.mxu0 0
    %414 = vmatpush1.bf16.msra.mxu0 %v315
    %415 = vmatprep.subr.bf16.mxu0 0
    %416 = vmatpush1.bf16.msra.mxu0 %v316
    %417 = vmatprep.subr.bf16.mxu0 0
    %418 = vmatpush1.bf16.msra.mxu0 %v317
    %419 = vmatprep.subr.bf16.mxu0 0
    %420 = vmatpush1.bf16.msra.mxu0 %v318
    %421 = vmatprep.subr.bf16.mxu0 0
    %422 = vmatpush1.bf16.msra.mxu0 %v319
    %423 = vmatprep.subr.bf16.mxu0 0
    %424 = vmatpush1.bf16.msra.mxu0 %v320
    %425 = vmatprep.subr.bf16.mxu0 0
    %426 = vmatpush1.bf16.msra.mxu0 %v321
    %427 = vmatprep.subr.bf16.mxu0 0
    %428 = vmatpush1.bf16.msra.mxu0 %v322
    %429 = vmatprep.subr.bf16.mxu0 0
    %430 = vmatpush1.bf16.msra.mxu0 %v323
    %431 = vmatprep.subr.bf16.mxu0 0
    %432 = vmatpush1.bf16.msra.mxu0 %v324
    %433 = vmatprep.subr.bf16.mxu0 0
    %434 = vmatpush1.bf16.msra.mxu0 %v325
    %435 = vmatprep.subr.bf16.mxu0 0
    %436 = vmatpush1.bf16.msra.mxu0 %v326
    %437 = vmatprep.subr.bf16.mxu0 0
    %438 = vmatpush1.bf16.msra.mxu0 %v327
    %439 = vmatprep.subr.bf16.mxu0 0
    %440 = vmatpush1.bf16.msra.mxu0 %v328
    %441 = vmatprep.mubr.bf16.mxu0 %v156
    %442 = vmatmul.mubr.bf16.gmra.mrb[0].mxu0 %v155
    %v443 = vpop.f32.mrb[0].mxu0
    %v444 = vadd.f32 %v396, %v443
    %v445 = vpop.f32.mrb[0].mxu0
    %v446 = vpop.f32.mrb[0].mxu0
    %v447 = vadd.f32 %v399, %v446
    %v448 = vpop.f32.mrb[0].mxu0
    %449 = vmatprep.mubr.bf16.mxu0 %v160
    %450 = vmatmul.mubr.bf16.gmra.mrb[0].mxu0 %v159
    %v451 = vpop.f32.mrb[0].mxu0
    %v452 = vadd.f32 %v404, %v451
    %v453 = vpop.f32.mrb[0].mxu0
    %v454 = vpop.f32.mrb[0].mxu0
    %v455 = vpop.f32.mrb[0].mxu0
    %456 = vdwg.mxu0
    %v457 = vpack.c.bf16 %v447, %v444
    %v458 = vpack.c.bf16 %v452, %v452
    %v461 = vunpack.c.l.b16 %v457
    %v462 = vunpack.c.h.b16 %v457
    %v463 = vunpack.c.l.b16 %v458
    %v464 = vpack.c.b16 %v461, %v461
    %v465 = vpack.c.b16 %v462, %v462
    %v466 = vpack.c.b16 %v463, %v463
    %vm470 = vcmask 519168
    %471 = vst.msk [vmem:[#allocation8] sm:$0xf] %vm470, %v464
    %472 = vst.msk [vmem:[#allocation8 + $0x4] sm:$0xf] %vm470, %v465
    %vm473 = vcmask 516096
    %474 = vst.msk [vmem:[#allocation8 + $0x8] sm:$0x1] %vm473, %v466
    %v475 = vlaneseq
    %v476 = vshrl.u32 %v475, 7
    %v477 = vadd.s32 %v476, 8
    %v478 = vadd.s32 %v476, 16
    %s479 = smul.u32 0, 18
    %v480 = vstv %s479
    %v481 = vadd.s32 %v476, %v480
    %v482 = vadd.s32 %v477, %v480
    %v483 = vadd.s32 %v478, %v480
    %vm484 = vcmp.lt.s32.totalorder %v481, 18
    %vm485 = vcmp.lt.s32.totalorder %v482, 18
    %vm486 = vcmp.lt.s32.totalorder %v483, 18
    %v487 = vsel %vm484, 1, 0
    %v488 = vsel %vm485, 1, 0
    %v489 = vsel %vm486, 1, 0
    %vm490 = vcmp.eq.s32.totalorder %v487, 1
    %vm491 = vcmp.eq.s32.totalorder %v488, 1
    %vm492 = vcmp.eq.s32.totalorder %v489, 1
    %v493 = vsel %vm490, %v444, 0.0
    %v494 = vsel %vm491, %v447, 0.0
    %v495 = vsel %vm492, %v452, 0.0
    %vm496 = vcmask 523264
    %v497 = vsel %vm496, %v493, 0.0
    %v498 = vsel %vm496, %v494, 0.0
    %v499 = vadd.f32 %v497, %v498
    %vm500 = vcmask 517120
    %v501 = vsel %vm500, %v495, 0.0
    %v502 = vadd.f32 %v499, %v501
    %v503 = vrot.slane %v502, 4
    %v504 = vadd.f32 %v502, %v503
    %v505 = vrot.slane %v504, 2
    %v506 = vadd.f32 %v504, %v505
    %v507 = vrot.slane %v506, 1
    %v508 = vadd.f32 %v506, %v507
    %509 = vst.msk [vmem:[#allocation9] sm:$0x1] %vm473, %v508
    %v510 = vmul.f32 %v493, %v493
    %v511 = vmul.f32 %v494, %v494
    %v512 = vmul.f32 %v495, %v495
    %v513 = vsel %vm496, %v510, 0.0
    %v514 = vsel %vm496, %v511, 0.0
    %v515 = vadd.f32 %v513, %v514
    %v516 = vsel %vm500, %v512, 0.0
    %v517 = vadd.f32 %v515, %v516
    %v518 = vrot.slane %v517, 4
    %v519 = vadd.f32 %v517, %v518
    %v520 = vrot.slane %v519, 2
    %v521 = vadd.f32 %v519, %v520
    %v522 = vrot.slane %v521, 1
    %v523 = vadd.f32 %v521, %v522
    %524 = vst.msk [vmem:[#allocation9 + $0x1] sm:$0x1] %vm473, %v523
    // Predicated region
    $region26: #{discriminator_forward.13} parent=1 // pred_check
      _
    $region27: #{discriminator_forward.13} parent=1 // pred_check_branch
      %526 = sbr.rel (0) target = $region29
    $region28: #{discriminator_forward.13} parent=1 // pred_region
      %s528 = ssub.s32 192, 192
      %529 = vsyncadd [#allocation4], %s528
      %s530 = sshll.u32 [#allocation8], 4
      %s531 = int_to_ptr.vmem [resolvable:$true] %s530
      %536 = dma.vmem_to_hbm [thread:$0]  %s531, 192, %s3, [#allocation4], 64, 64, 4
    $region29: #{discriminator_forward.13} parent=1 // pred_fallthru
      _
    // Predicated region
    $region30: #{discriminator_forward.13} parent=1 // pred_check
      _
    $region31: #{discriminator_forward.13} parent=1 // pred_check_branch
      %538 = sbr.rel (0) target = $region33
    $region32: #{discriminator_forward.13} parent=1 // pred_region
      %s540 = ssub.s32 32, 32
      %541 = vsyncadd [#allocation10], %s540
      %s543 = sshll.u32 [#allocation9], 4
      %s544 = int_to_ptr.vmem [resolvable:$true] %s543
      %546 = dma.vmem_to_hbm [thread:$0]  %s544, 32, %s4, [#allocation10]
    $region33: #{discriminator_forward.13} parent=1 // pred_fallthru
      _
    // Predicated region
    $region34: #{discriminator_forward.13} parent=1 // pred_check
      _
    $region35: #{discriminator_forward.13} parent=1 // pred_check_branch
      %548 = sbr.rel (0) target = $region37
    $region36: #{discriminator_forward.13} parent=1 // pred_region
      %549 = dma.done [#allocation4], 192
    $region37: #{discriminator_forward.13} parent=1 // pred_fallthru
      _
    // Predicated region
    $region38: #{discriminator_forward.13} parent=1 // pred_check
      _
    $region39: #{discriminator_forward.13} parent=1 // pred_check_branch
      %551 = sbr.rel (0) target = $region41
    $region40: #{discriminator_forward.13} parent=1 // pred_region
      %552 = dma.done [#allocation10], 32
    $region41: #{discriminator_forward.13} parent=1 // pred_fallthru
      _
    %553 = vsyncpa [#allocation3], 1
    %554 = vsyncpa [#allocation6], 1
    %555 = vsyncpa [#allocation4], 1
    %556 = vsyncpa [#allocation10], 1

// kernel: discriminator_forward.15
$region0: #{discriminator_forward.15}
  #allocation0 [shape = 'u32[]', space=smem, size = 0x4, offset = 0x4, fixed_abs, tag = 'smem constant byte address 0x4 - core index']
  #allocation1 [shape = 'u32[144,128]{1,0:T(1,128)}', space=vmem, size = 0x12000, scoped, tag = 'internal scratch']
  %s0 = inlined_call_operand.hbm [shape: bf16[8,1024], index: 0, kind: input, shape index: {}]
  %s1 = inlined_call_operand.hbm [shape: bf16[1024,128], index: 1, kind: input, shape index: {}]
  %s2 = inlined_call_operand.hbm [shape: f32[1,128], index: 2, kind: input, shape index: {}]
  %s3 = inlined_call_operand.hbm [shape: f32[8,128], index: 3, kind: output, shape index: {}]
  %s4 = sld [smem:[#allocation0]]
  $region34: #{discriminator_forward.15} parent=0
    _
  %s6 = ssub.s32 1, %s4
  %s7 = scalar_select 0, %s6, %s4
  $region1: #{discriminator_forward.15} parent=0
    #allocation2 [shape = 'u8[16384]{0}', space=vmem, size = 0x4000, scoped, tag = 'input window, operand 0, single buffered']
    #allocation3 [shape = 's32[1]{0}', space=sflag, size = 0x4, scoped, tag = 'scoped memory for discriminator_forward.15']
    #allocation4 [shape = 's32[1]{0}', space=sflag, size = 0x4, scoped, tag = 'scoped memory for discriminator_forward.15']
    #allocation5 [shape = 'u8[262144]{0}', space=vmem, size = 0x40000, scoped, tag = 'input window, operand 1, single buffered']
    #allocation6 [shape = 's32[1]{0}', space=sflag, size = 0x4, scoped, tag = 'scoped memory for discriminator_forward.15']
    #allocation7 [shape = 'u8[512]{0}', space=vmem, size = 0x400, scoped, tag = 'input window, operand 2, single buffered']
    #allocation8 [shape = 'u8[4096]{0}', space=vmem, size = 0x1000, scoped, tag = 'output window, operand 0, single buffered']
    %8 = vsyncpa [#allocation3], 0
    %9 = vsyncpa [#allocation6], 0
    %10 = vsyncpa [#allocation4], 0
    // Predicated region
    $region2: #{discriminator_forward.15} parent=1 // pred_check
      _
    $region3: #{discriminator_forward.15} parent=1 // pred_check_branch
      %12 = sbr.rel (0) target = $region5
    $region4: #{discriminator_forward.15} parent=1 // pred_region
      %s14 = ssub.s32 512, 512
      %15 = vsyncadd [#allocation3], %s14
      %s17 = sshll.u32 [#allocation2], 4
      %s18 = int_to_ptr.vmem [resolvable:$true] %s17
      %20 = dma.hbm_to_vmem [thread:$0]  %s0, 512, %s18, [#allocation3]
    $region5: #{discriminator_forward.15} parent=1 // pred_fallthru
      _
    // Predicated region
    $region6: #{discriminator_forward.15} parent=1 // pred_check
      _
    $region7: #{discriminator_forward.15} parent=1 // pred_check_branch
      %22 = sbr.rel (0) target = $region9
    $region8: #{discriminator_forward.15} parent=1 // pred_region
      %s24 = ssub.s32 8192, 8192
      %25 = vsyncadd [#allocation6], %s24
      %s26 = sshll.u32 [#allocation5], 4
      %s27 = int_to_ptr.vmem [resolvable:$true] %s26
      %32 = dma.hbm_to_vmem [thread:$0]  %s1, 8192, %s27, [#allocation6], 64, 64, 4
    $region9: #{discriminator_forward.15} parent=1 // pred_fallthru
      _
    // Predicated region
    $region10: #{discriminator_forward.15} parent=1 // pred_check
      _
    $region11: #{discriminator_forward.15} parent=1 // pred_check_branch
      %34 = sbr.rel (0) target = $region13
    $region12: #{discriminator_forward.15} parent=1 // pred_region
      %s36 = ssub.s32 16, 16
      %37 = vsyncadd [#allocation6], %s36
      %s39 = sshll.u32 [#allocation7], 4
      %s40 = int_to_ptr.vmem [resolvable:$true] %s39
      %42 = dma.hbm_to_vmem [thread:$0]  %s2, 16, %s40, [#allocation6]
    $region13: #{discriminator_forward.15} parent=1 // pred_fallthru
      _
    // Predicated region
    $region14: #{discriminator_forward.15} parent=1 // pred_check
      _
    $region15: #{discriminator_forward.15} parent=1 // pred_check_branch
      %44 = sbr.rel (0) target = $region17
    $region16: #{discriminator_forward.15} parent=1 // pred_region
      %45 = dma.done [#allocation3], 512
    $region17: #{discriminator_forward.15} parent=1 // pred_fallthru
      _
    // Predicated region
    $region18: #{discriminator_forward.15} parent=1 // pred_check
      _
    $region19: #{discriminator_forward.15} parent=1 // pred_check_branch
      %47 = sbr.rel (0) target = $region21
    $region20: #{discriminator_forward.15} parent=1 // pred_region
      %48 = dma.done [#allocation6], 8192
    $region21: #{discriminator_forward.15} parent=1 // pred_fallthru
      _
    // Predicated region
    $region22: #{discriminator_forward.15} parent=1 // pred_check
      _
    $region23: #{discriminator_forward.15} parent=1 // pred_check_branch
      %50 = sbr.rel (0) target = $region25
    $region24: #{discriminator_forward.15} parent=1 // pred_region
      %51 = dma.done [#allocation6], 16
    $region25: #{discriminator_forward.15} parent=1 // pred_fallthru
      _
    %v53 = vld [vmem:[#allocation2] sm:$0xff]
    %v54 = vld [vmem:[#allocation2 + $0x8] sm:$0xff]
    %v55 = vld [vmem:[#allocation2 + $0x10] sm:$0xff]
    %v56 = vld [vmem:[#allocation2 + $0x18] sm:$0xff]
    %v57 = vld [vmem:[#allocation5] sm:$0xf]
    %v58 = vld [vmem:[#allocation5 + $0x4] sm:$0xf]
    %v59 = vld [vmem:[#allocation5 + $0x8] sm:$0xf]
    %v60 = vld [vmem:[#allocation5 + $0xc] sm:$0xf]
    %v61 = vld [vmem:[#allocation5 + $0x10] sm:$0xf]
    %v62 = vld [vmem:[#allocation5 + $0x14] sm:$0xf]
    %v63 = vld [vmem:[#allocation5 + $0x18] sm:$0xf]
    %v64 = vld [vmem:[#allocation5 + $0x1c] sm:$0xf]
    %v65 = vld [vmem:[#allocation5 + $0x20] sm:$0xf]
    %v66 = vld [vmem:[#allocation5 + $0x24] sm:$0xf]
    %v67 = vld [vmem:[#allocation5 + $0x28] sm:$0xf]
    %v68 = vld [vmem:[#allocation5 + $0x2c] sm:$0xf]
    %v69 = vld [vmem:[#allocation5 + $0x30] sm:$0xf]
    %v70 = vld [vmem:[#allocation5 + $0x34] sm:$0xf]
    %v71 = vld [vmem:[#allocation5 + $0x38] sm:$0xf]
    %v72 = vld [vmem:[#allocation5 + $0x3c] sm:$0xf]
    %v73 = vld [vmem:[#allocation5 + $0x40] sm:$0xf]
    %v74 = vld [vmem:[#allocation5 + $0x44] sm:$0xf]
    %v75 = vld [vmem:[#allocation5 + $0x48] sm:$0xf]
    %v76 = vld [vmem:[#allocation5 + $0x4c] sm:$0xf]
    %v77 = vld [vmem:[#allocation5 + $0x50] sm:$0xf]
    %v78 = vld [vmem:[#allocation5 + $0x54] sm:$0xf]
    %v79 = vld [vmem:[#allocation5 + $0x58] sm:$0xf]
    %v80 = vld [vmem:[#allocation5 + $0x5c] sm:$0xf]
    %v81 = vld [vmem:[#allocation5 + $0x60] sm:$0xf]
    %v82 = vld [vmem:[#allocation5 + $0x64] sm:$0xf]
    %v83 = vld [vmem:[#allocation5 + $0x68] sm:$0xf]
    %v84 = vld [vmem:[#allocation5 + $0x6c] sm:$0xf]
    %v85 = vld [vmem:[#allocation5 + $0x70] sm:$0xf]
    %v86 = vld [vmem:[#allocation5 + $0x74] sm:$0xf]
    %v87 = vld [vmem:[#allocation5 + $0x78] sm:$0xf]
    %v88 = vld [vmem:[#allocation5 + $0x7c] sm:$0xf]
    %v89 = vld [vmem:[#allocation5 + $0x80] sm:$0xf]
    %v90 = vld [vmem:[#allocation5 + $0x84] sm:$0xf]
    %v91 = vld [vmem:[#allocation5 + $0x88] sm:$0xf]
    %v92 = vld [vmem:[#allocation5 + $0x8c] sm:$0xf]
    %v93 = vld [vmem:[#allocation5 + $0x90] sm:$0xf]
    %v94 = vld [vmem:[#allocation5 + $0x94] sm:$0xf]
    %v95 = vld [vmem:[#allocation5 + $0x98] sm:$0xf]
    %v96 = vld [vmem:[#allocation5 + $0x9c] sm:$0xf]
    %v97 = vld [vmem:[#allocation5 + $0xa0] sm:$0xf]
    %v98 = vld [vmem:[#allocation5 + $0xa4] sm:$0xf]
    %v99 = vld [vmem:[#allocation5 + $0xa8] sm:$0xf]
    %v100 = vld [vmem:[#allocation5 + $0xac] sm:$0xf]
    %v101 = vld [vmem:[#allocation5 + $0xb0] sm:$0xf]
    %v102 = vld [vmem:[#allocation5 + $0xb4] sm:$0xf]
    %v103 = vld [vmem:[#allocation5 + $0xb8] sm:$0xf]
    %v104 = vld [vmem:[#allocation5 + $0xbc] sm:$0xf]
    %v105 = vld [vmem:[#allocation5 + $0xc0] sm:$0xf]
    %v106 = vld [vmem:[#allocation5 + $0xc4] sm:$0xf]
    %v107 = vld [vmem:[#allocation5 + $0xc8] sm:$0xf]
    %v108 = vld [vmem:[#allocation5 + $0xcc] sm:$0xf]
    %v109 = vld [vmem:[#allocation5 + $0xd0] sm:$0xf]
    %v110 = vld [vmem:[#allocation5 + $0xd4] sm:$0xf]
    %v111 = vld [vmem:[#allocation5 + $0xd8] sm:$0xf]
    %v112 = vld [vmem:[#allocation5 + $0xdc] sm:$0xf]
    %v113 = vld [vmem:[#allocation5 + $0xe0] sm:$0xf]
    %v114 = vld [vmem:[#allocation5 + $0xe4] sm:$0xf]
    %v115 = vld [vmem:[#allocation5 + $0xe8] sm:$0xf]
    %v116 = vld [vmem:[#allocation5 + $0xec] sm:$0xf]
    %v117 = vld [vmem:[#allocation5 + $0xf0] sm:$0xf]
    %v118 = vld [vmem:[#allocation5 + $0xf4] sm:$0xf]
    %v119 = vld [vmem:[#allocation5 + $0xf8] sm:$0xf]
    %v120 = vld [vmem:[#allocation5 + $0xfc] sm:$0xf]
    %v121 = vld [vmem:[#allocation5 + $0x100] sm:$0xf]
    %v122 = vld [vmem:[#allocation5 + $0x104] sm:$0xf]
    %v123 = vld [vmem:[#allocation5 + $0x108] sm:$0xf]
    %v124 = vld [vmem:[#allocation5 + $0x10c] sm:$0xf]
    %v125 = vld [vmem:[#allocation5 + $0x110] sm:$0xf]
    %v126 = vld [vmem:[#allocation5 + $0x114] sm:$0xf]
    %v127 = vld [vmem:[#allocation5 + $0x118] sm:$0xf]
    %v128 = vld [vmem:[#allocation5 + $0x11c] sm:$0xf]
    %v129 = vld [vmem:[#allocation5 + $0x120] sm:$0xf]
    %v130 = vld [vmem:[#allocation5 + $0x124] sm:$0xf]
    %v131 = vld [vmem:[#allocation5 + $0x128] sm:$0xf]
    %v132 = vld [vmem:[#allocation5 + $0x12c] sm:$0xf]
    %v133 = vld [vmem:[#allocation5 + $0x130] sm:$0xf]
    %v134 = vld [vmem:[#allocation5 + $0x134] sm:$0xf]
    %v135 = vld [vmem:[#allocation5 + $0x138] sm:$0xf]
    %v136 = vld [vmem:[#allocation5 + $0x13c] sm:$0xf]
    %v137 = vld [vmem:[#allocation5 + $0x140] sm:$0xf]
    %v138 = vld [vmem:[#allocation5 + $0x144] sm:$0xf]
    %v139 = vld [vmem:[#allocation5 + $0x148] sm:$0xf]
    %v140 = vld [vmem:[#allocation5 + $0x14c] sm:$0xf]
    %v141 = vld [vmem:[#allocation5 + $0x150] sm:$0xf]
    %v142 = vld [vmem:[#allocation5 + $0x154] sm:$0xf]
    %v143 = vld [vmem:[#allocation5 + $0x158] sm:$0xf]
    %v144 = vld [vmem:[#allocation5 + $0x15c] sm:$0xf]
    %v145 = vld [vmem:[#allocation5 + $0x160] sm:$0xf]
    %v146 = vld [vmem:[#allocation5 + $0x164] sm:$0xf]
    %v147 = vld [vmem:[#allocation5 + $0x168] sm:$0xf]
    %v148 = vld [vmem:[#allocation5 + $0x16c] sm:$0xf]
    %v149 = vld [vmem:[#allocation5 + $0x170] sm:$0xf]
    %v150 = vld [vmem:[#allocation5 + $0x174] sm:$0xf]
    %v151 = vld [vmem:[#allocation5 + $0x178] sm:$0xf]
    %v152 = vld [vmem:[#allocation5 + $0x17c] sm:$0xf]
    %v153 = vld [vmem:[#allocation5 + $0x180] sm:$0xf]
    %v154 = vld [vmem:[#allocation5 + $0x184] sm:$0xf]
    %v155 = vld [vmem:[#allocation5 + $0x188] sm:$0xf]
    %v156 = vld [vmem:[#allocation5 + $0x18c] sm:$0xf]
    %v157 = vld [vmem:[#allocation5 + $0x190] sm:$0xf]
    %v158 = vld [vmem:[#allocation5 + $0x194] sm:$0xf]
    %v159 = vld [vmem:[#allocation5 + $0x198] sm:$0xf]
    %v160 = vld [vmem:[#allocation5 + $0x19c] sm:$0xf]
    %v161 = vld [vmem:[#allocation5 + $0x1a0] sm:$0xf]
    %v162 = vld [vmem:[#allocation5 + $0x1a4] sm:$0xf]
    %v163 = vld [vmem:[#allocation5 + $0x1a8] sm:$0xf]
    %v164 = vld [vmem:[#allocation5 + $0x1ac] sm:$0xf]
    %v165 = vld [vmem:[#allocation5 + $0x1b0] sm:$0xf]
    %v166 = vld [vmem:[#allocation5 + $0x1b4] sm:$0xf]
    %v167 = vld [vmem:[#allocation5 + $0x1b8] sm:$0xf]
    %v168 = vld [vmem:[#allocation5 + $0x1bc] sm:$0xf]
    %v169 = vld [vmem:[#allocation5 + $0x1c0] sm:$0xf]
    %v170 = vld [vmem:[#allocation5 + $0x1c4] sm:$0xf]
    %v171 = vld [vmem:[#allocation5 + $0x1c8] sm:$0xf]
    %v172 = vld [vmem:[#allocation5 + $0x1cc] sm:$0xf]
    %v173 = vld [vmem:[#allocation5 + $0x1d0] sm:$0xf]
    %v174 = vld [vmem:[#allocation5 + $0x1d4] sm:$0xf]
    %v175 = vld [vmem:[#allocation5 + $0x1d8] sm:$0xf]
    %v176 = vld [vmem:[#allocation5 + $0x1dc] sm:$0xf]
    %v177 = vld [vmem:[#allocation5 + $0x1e0] sm:$0xf]
    %v178 = vld [vmem:[#allocation5 + $0x1e4] sm:$0xf]
    %v179 = vld [vmem:[#allocation5 + $0x1e8] sm:$0xf]
    %v180 = vld [vmem:[#allocation5 + $0x1ec] sm:$0xf]
    %v181 = vld [vmem:[#allocation5 + $0x1f0] sm:$0xf]
    %v182 = vld [vmem:[#allocation5 + $0x1f4] sm:$0xf]
    %v183 = vld [vmem:[#allocation5 + $0x1f8] sm:$0xf]
    %v184 = vld [vmem:[#allocation5 + $0x1fc] sm:$0xf]
    %v185 = vld [vmem:[#allocation7] sm:$0x1]
    %v187 = vlaneseq
    %v188 = vshrl.u32 %v187, 7
    %v189 = vsub.s32 0, %v188
    %v190 = vrot.slane %v185, %v189
    %v196 = vunpack.c.l.b16 %v53
    %v197 = vunpack.c.h.b16 %v53
    %v198 = vunpack.c.l.b16 %v54
    %v199 = vunpack.c.h.b16 %v54
    %v200 = vunpack.c.l.b16 %v55
    %v201 = vunpack.c.h.b16 %v55
    %v202 = vunpack.c.l.b16 %v56
    %v203 = vunpack.c.h.b16 %v56
    %v204 = vpack.c.b16 %v196, %v196
    %v205 = vpack.c.b16 %v197, %v197
    %v206 = vpack.c.b16 %v198, %v198
    %v207 = vpack.c.b16 %v199, %v199
    %v208 = vpack.c.b16 %v200, %v200
    %v209 = vpack.c.b16 %v201, %v201
    %v210 = vpack.c.b16 %v202, %v202
    %v211 = vpack.c.b16 %v203, %v203
    %v348 = vunpack.c.l.b16 %v57
    %v349 = vunpack.c.l.b16 %v58
    %v350 = vunpack.c.l.b16 %v59
    %v351 = vunpack.c.l.b16 %v60
    %v352 = vunpack.c.l.b16 %v61
    %v353 = vunpack.c.l.b16 %v62
    %v354 = vunpack.c.l.b16 %v63
    %v355 = vunpack.c.l.b16 %v64
    %v356 = vunpack.c.l.b16 %v65
    %v357 = vunpack.c.l.b16 %v66
    %v358 = vunpack.c.l.b16 %v67
    %v359 = vunpack.c.l.b16 %v68
    %v360 = vunpack.c.l.b16 %v69
    %v361 = vunpack.c.l.b16 %v70
    %v362 = vunpack.c.l.b16 %v71
    %v363 = vunpack.c.l.b16 %v72
    %v364 = vunpack.c.l.b16 %v73
    %v365 = vunpack.c.l.b16 %v74
    %v366 = vunpack.c.l.b16 %v75
    %v367 = vunpack.c.l.b16 %v76
    %v368 = vunpack.c.l.b16 %v77
    %v369 = vunpack.c.l.b16 %v78
    %v370 = vunpack.c.l.b16 %v79
    %v371 = vunpack.c.l.b16 %v80
    %v372 = vunpack.c.l.b16 %v81
    %v373 = vunpack.c.l.b16 %v82
    %v374 = vunpack.c.l.b16 %v83
    %v375 = vunpack.c.l.b16 %v84
    %v376 = vunpack.c.l.b16 %v85
    %v377 = vunpack.c.l.b16 %v86
    %v378 = vunpack.c.l.b16 %v87
    %v379 = vunpack.c.l.b16 %v88
    %v380 = vunpack.c.l.b16 %v89
    %v381 = vunpack.c.l.b16 %v90
    %v382 = vunpack.c.l.b16 %v91
    %v383 = vunpack.c.l.b16 %v92
    %v384 = vunpack.c.l.b16 %v93
    %v385 = vunpack.c.l.b16 %v94
    %v386 = vunpack.c.l.b16 %v95
    %v387 = vunpack.c.l.b16 %v96
    %v388 = vunpack.c.l.b16 %v97
    %v389 = vunpack.c.l.b16 %v98
    %v390 = vunpack.c.l.b16 %v99
    %v391 = vunpack.c.l.b16 %v100
    %v392 = vunpack.c.l.b16 %v101
    %v393 = vunpack.c.l.b16 %v102
    %v394 = vunpack.c.l.b16 %v103
    %v395 = vunpack.c.l.b16 %v104
    %v396 = vunpack.c.l.b16 %v105
    %v397 = vunpack.c.l.b16 %v106
    %v398 = vunpack.c.l.b16 %v107
    %v399 = vunpack.c.l.b16 %v108
    %v400 = vunpack.c.l.b16 %v109
    %v401 = vunpack.c.l.b16 %v110
    %v402 = vunpack.c.l.b16 %v111
    %v403 = vunpack.c.l.b16 %v112
    %v404 = vunpack.c.l.b16 %v113
    %v405 = vunpack.c.l.b16 %v114
    %v406 = vunpack.c.l.b16 %v115
    %v407 = vunpack.c.l.b16 %v116
    %v408 = vunpack.c.l.b16 %v117
    %v409 = vunpack.c.l.b16 %v118
    %v410 = vunpack.c.l.b16 %v119
    %v411 = vunpack.c.l.b16 %v120
    %v412 = vunpack.c.l.b16 %v121
    %v413 = vunpack.c.l.b16 %v122
    %v414 = vunpack.c.l.b16 %v123
    %v415 = vunpack.c.l.b16 %v124
    %v416 = vunpack.c.l.b16 %v125
    %v417 = vunpack.c.l.b16 %v126
    %v418 = vunpack.c.l.b16 %v127
    %v419 = vunpack.c.l.b16 %v128
    %v420 = vunpack.c.l.b16 %v129
    %v421 = vunpack.c.l.b16 %v130
    %v422 = vunpack.c.l.b16 %v131
    %v423 = vunpack.c.l.b16 %v132
    %v424 = vunpack.c.l.b16 %v133
    %v425 = vunpack.c.l.b16 %v134
    %v426 = vunpack.c.l.b16 %v135
    %v427 = vunpack.c.l.b16 %v136
    %v428 = vunpack.c.l.b16 %v137
    %v429 = vunpack.c.l.b16 %v138
    %v430 = vunpack.c.l.b16 %v139
    %v431 = vunpack.c.l.b16 %v140
    %v432 = vunpack.c.l.b16 %v141
    %v433 = vunpack.c.l.b16 %v142
    %v434 = vunpack.c.l.b16 %v143
    %v435 = vunpack.c.l.b16 %v144
    %v436 = vunpack.c.l.b16 %v145
    %v437 = vunpack.c.l.b16 %v146
    %v438 = vunpack.c.l.b16 %v147
    %v439 = vunpack.c.l.b16 %v148
    %v440 = vunpack.c.l.b16 %v149
    %v441 = vunpack.c.l.b16 %v150
    %v442 = vunpack.c.l.b16 %v151
    %v443 = vunpack.c.l.b16 %v152
    %v444 = vunpack.c.l.b16 %v153
    %v445 = vunpack.c.l.b16 %v154
    %v446 = vunpack.c.l.b16 %v155
    %v447 = vunpack.c.l.b16 %v156
    %v448 = vunpack.c.l.b16 %v157
    %v449 = vunpack.c.l.b16 %v158
    %v450 = vunpack.c.l.b16 %v159
    %v451 = vunpack.c.l.b16 %v160
    %v452 = vunpack.c.l.b16 %v161
    %v453 = vunpack.c.l.b16 %v162
    %v454 = vunpack.c.l.b16 %v163
    %v455 = vunpack.c.l.b16 %v164
    %v456 = vunpack.c.l.b16 %v165
    %v457 = vunpack.c.l.b16 %v166
    %v458 = vunpack.c.l.b16 %v167
    %v459 = vunpack.c.l.b16 %v168
    %v460 = vunpack.c.l.b16 %v169
    %v461 = vunpack.c.l.b16 %v170
    %v462 = vunpack.c.l.b16 %v171
    %v463 = vunpack.c.l.b16 %v172
    %v464 = vunpack.c.l.b16 %v173
    %v465 = vunpack.c.l.b16 %v174
    %v466 = vunpack.c.l.b16 %v175
    %v467 = vunpack.c.l.b16 %v176
    %v468 = vunpack.c.l.b16 %v177
    %v469 = vunpack.c.l.b16 %v178
    %v470 = vunpack.c.l.b16 %v179
    %v471 = vunpack.c.l.b16 %v180
    %v472 = vunpack.c.l.b16 %v181
    %v473 = vunpack.c.l.b16 %v182
    %v474 = vunpack.c.l.b16 %v183
    %v475 = vunpack.c.l.b16 %v184
    %v476 = vpack.c.b16 %v349, %v348
    %v477 = vpack.c.b16 %v351, %v350
    %v478 = vpack.c.b16 %v353, %v352
    %v479 = vpack.c.b16 %v355, %v354
    %v480 = vpack.c.b16 %v357, %v356
    %v481 = vpack.c.b16 %v359, %v358
    %v482 = vpack.c.b16 %v361, %v360
    %v483 = vpack.c.b16 %v363, %v362
    %v484 = vpack.c.b16 %v365, %v364
    %v485 = vpack.c.b16 %v367, %v366
    %v486 = vpack.c.b16 %v369, %v368
    %v487 = vpack.c.b16 %v371, %v370
    %v488 = vpack.c.b16 %v373, %v372
    %v489 = vpack.c.b16 %v375, %v374
    %v490 = vpack.c.b16 %v377, %v376
    %v491 = vpack.c.b16 %v379, %v378
    %v492 = vpack.c.b16 %v381, %v380
    %v493 = vpack.c.b16 %v383, %v382
    %v494 = vpack.c.b16 %v385, %v384
    %v495 = vpack.c.b16 %v387, %v386
    %v496 = vpack.c.b16 %v389, %v388
    %v497 = vpack.c.b16 %v391, %v390
    %v498 = vpack.c.b16 %v393, %v392
    %v499 = vpack.c.b16 %v395, %v394
    %v500 = vpack.c.b16 %v397, %v396
    %v501 = vpack.c.b16 %v399, %v398
    %v502 = vpack.c.b16 %v401, %v400
    %v503 = vpack.c.b16 %v403, %v402
    %v504 = vpack.c.b16 %v405, %v404
    %v505 = vpack.c.b16 %v407, %v406
    %v506 = vpack.c.b16 %v409, %v408
    %v507 = vpack.c.b16 %v411, %v410
    %v508 = vpack.c.b16 %v413, %v412
    %v509 = vpack.c.b16 %v415, %v414
    %v510 = vpack.c.b16 %v417, %v416
    %v511 = vpack.c.b16 %v419, %v418
    %v512 = vpack.c.b16 %v421, %v420
    %v513 = vpack.c.b16 %v423, %v422
    %v514 = vpack.c.b16 %v425, %v424
    %v515 = vpack.c.b16 %v427, %v426
    %v516 = vpack.c.b16 %v429, %v428
    %v517 = vpack.c.b16 %v431, %v430
    %v518 = vpack.c.b16 %v433, %v432
    %v519 = vpack.c.b16 %v435, %v434
    %v520 = vpack.c.b16 %v437, %v436
    %v521 = vpack.c.b16 %v439, %v438
    %v522 = vpack.c.b16 %v441, %v440
    %v523 = vpack.c.b16 %v443, %v442
    %v524 = vpack.c.b16 %v445, %v444
    %v525 = vpack.c.b16 %v447, %v446
    %v526 = vpack.c.b16 %v449, %v448
    %v527 = vpack.c.b16 %v451, %v450
    %v528 = vpack.c.b16 %v453, %v452
    %v529 = vpack.c.b16 %v455, %v454
    %v530 = vpack.c.b16 %v457, %v456
    %v531 = vpack.c.b16 %v459, %v458
    %v532 = vpack.c.b16 %v461, %v460
    %v533 = vpack.c.b16 %v463, %v462
    %v534 = vpack.c.b16 %v465, %v464
    %v535 = vpack.c.b16 %v467, %v466
    %v536 = vpack.c.b16 %v469, %v468
    %v537 = vpack.c.b16 %v471, %v470
    %v538 = vpack.c.b16 %v473, %v472
    %v539 = vpack.c.b16 %v475, %v474
    %604 = vmatprep.subr.bf16.mxu0 0
    %605 = vmatpush1.bf16.msra.mxu0 %v476
    %606 = vmatprep.subr.bf16.mxu0 0
    %607 = vmatpush1.bf16.msra.mxu0 %v477
    %608 = vmatprep.subr.bf16.mxu0 0
    %609 = vmatpush1.bf16.msra.mxu0 %v478
    %610 = vmatprep.subr.bf16.mxu0 0
    %611 = vmatpush1.bf16.msra.mxu0 %v479
    %612 = vmatprep.subr.bf16.mxu0 0
    %613 = vmatpush1.bf16.msra.mxu0 %v480
    %614 = vmatprep.subr.bf16.mxu0 0
    %615 = vmatpush1.bf16.msra.mxu0 %v481
    %616 = vmatprep.subr.bf16.mxu0 0
    %617 = vmatpush1.bf16.msra.mxu0 %v482
    %618 = vmatprep.subr.bf16.mxu0 0
    %619 = vmatpush1.bf16.msra.mxu0 %v483
    %620 = vmatprep.subr.bf16.mxu0 0
    %621 = vmatpush1.bf16.msra.mxu0 %v484
    %622 = vmatprep.subr.bf16.mxu0 0
    %623 = vmatpush1.bf16.msra.mxu0 %v485
    %624 = vmatprep.subr.bf16.mxu0 0
    %625 = vmatpush1.bf16.msra.mxu0 %v486
    %626 = vmatprep.subr.bf16.mxu0 0
    %627 = vmatpush1.bf16.msra.mxu0 %v487
    %628 = vmatprep.subr.bf16.mxu0 0
    %629 = vmatpush1.bf16.msra.mxu0 %v488
    %630 = vmatprep.subr.bf16.mxu0 0
    %631 = vmatpush1.bf16.msra.mxu0 %v489
    %632 = vmatprep.subr.bf16.mxu0 0
    %633 = vmatpush1.bf16.msra.mxu0 %v490
    %634 = vmatprep.subr.bf16.mxu0 0
    %635 = vmatpush1.bf16.msra.mxu0 %v491
    %636 = vmatprep.mubr.bf16.mxu0 %v205
    %637 = vmatmul.mubr.bf16.gmra.mrb[0].mxu0 %v204
    %v638 = vpop.f32.mrb[0].mxu0
    %v639 = vadd.f32 %v190, %v638
    %v640 = vpop.f32.mrb[0].mxu0
    %v641 = vpop.f32.mrb[0].mxu0
    %v642 = vpop.f32.mrb[0].mxu0
    %643 = vdwg.mxu0
    %644 = vmatprep.subr.bf16.mxu0 0
    %645 = vmatpush1.bf16.msra.mxu0 %v492
    %646 = vmatprep.subr.bf16.mxu0 0
    %647 = vmatpush1.bf16.msra.mxu0 %v493
    %648 = vmatprep.subr.bf16.mxu0 0
    %649 = vmatpush1.bf16.msra.mxu0 %v494
    %650 = vmatprep.subr.bf16.mxu0 0
    %651 = vmatpush1.bf16.msra.mxu0 %v495
    %652 = vmatprep.subr.bf16.mxu0 0
    %653 = vmatpush1.bf16.msra.mxu0 %v496
    %654 = vmatprep.subr.bf16.mxu0 0
    %655 = vmatpush1.bf16.msra.mxu0 %v497
    %656 = vmatprep.subr.bf16.mxu0 0
    %657 = vmatpush1.bf16.msra.mxu0 %v498
    %658 = vmatprep.subr.bf16.mxu0 0
    %659 = vmatpush1.bf16.msra.mxu0 %v499
    %660 = vmatprep.subr.bf16.mxu0 0
    %661 = vmatpush1.bf16.msra.mxu0 %v500
    %662 = vmatprep.subr.bf16.mxu0 0
    %663 = vmatpush1.bf16.msra.mxu0 %v501
    %664 = vmatprep.subr.bf16.mxu0 0
    %665 = vmatpush1.bf16.msra.mxu0 %v502
    %666 = vmatprep.subr.bf16.mxu0 0
    %667 = vmatpush1.bf16.msra.mxu0 %v503
    %668 = vmatprep.subr.bf16.mxu0 0
    %669 = vmatpush1.bf16.msra.mxu0 %v504
    %670 = vmatprep.subr.bf16.mxu0 0
    %671 = vmatpush1.bf16.msra.mxu0 %v505
    %672 = vmatprep.subr.bf16.mxu0 0
    %673 = vmatpush1.bf16.msra.mxu0 %v506
    %674 = vmatprep.subr.bf16.mxu0 0
    %675 = vmatpush1.bf16.msra.mxu0 %v507
    %676 = vmatprep.mubr.bf16.mxu0 %v207
    %677 = vmatmul.mubr.bf16.gmra.mrb[0].mxu0 %v206
    %v678 = vpop.f32.mrb[0].mxu0
    %v679 = vadd.f32 %v639, %v678
    %v680 = vpop.f32.mrb[0].mxu0
    %v681 = vpop.f32.mrb[0].mxu0
    %v682 = vpop.f32.mrb[0].mxu0
    %683 = vdwg.mxu0
    %684 = vmatprep.subr.bf16.mxu0 0
    %685 = vmatpush1.bf16.msra.mxu0 %v508
    %686 = vmatprep.subr.bf16.mxu0 0
    %687 = vmatpush1.bf16.msra.mxu0 %v509
    %688 = vmatprep.subr.bf16.mxu0 0
    %689 = vmatpush1.bf16.msra.mxu0 %v510
    %690 = vmatprep.subr.bf16.mxu0 0
    %691 = vmatpush1.bf16.msra.mxu0 %v511
    %692 = vmatprep.subr.bf16.mxu0 0
    %693 = vmatpush1.bf16.msra.mxu0 %v512
    %694 = vmatprep.subr.bf16.mxu0 0
    %695 = vmatpush1.bf16.msra.mxu0 %v513
    %696 = vmatprep.subr.bf16.mxu0 0
    %697 = vmatpush1.bf16.msra.mxu0 %v514
    %698 = vmatprep.subr.bf16.mxu0 0
    %699 = vmatpush1.bf16.msra.mxu0 %v515
    %700 = vmatprep.subr.bf16.mxu0 0
    %701 = vmatpush1.bf16.msra.mxu0 %v516
    %702 = vmatprep.subr.bf16.mxu0 0
    %703 = vmatpush1.bf16.msra.mxu0 %v517
    %704 = vmatprep.subr.bf16.mxu0 0
    %705 = vmatpush1.bf16.msra.mxu0 %v518
    %706 = vmatprep.subr.bf16.mxu0 0
    %707 = vmatpush1.bf16.msra.mxu0 %v519
    %708 = vmatprep.subr.bf16.mxu0 0
    %709 = vmatpush1.bf16.msra.mxu0 %v520
    %710 = vmatprep.subr.bf16.mxu0 0
    %711 = vmatpush1.bf16.msra.mxu0 %v521
    %712 = vmatprep.subr.bf16.mxu0 0
    %713 = vmatpush1.bf16.msra.mxu0 %v522
    %714 = vmatprep.subr.bf16.mxu0 0
    %715 = vmatpush1.bf16.msra.mxu0 %v523
    %716 = vmatprep.mubr.bf16.mxu0 %v209
    %717 = vmatmul.mubr.bf16.gmra.mrb[0].mxu0 %v208
    %v718 = vpop.f32.mrb[0].mxu0
    %v719 = vadd.f32 %v679, %v718
    %v720 = vpop.f32.mrb[0].mxu0
    %v721 = vpop.f32.mrb[0].mxu0
    %v722 = vpop.f32.mrb[0].mxu0
    %723 = vdwg.mxu0
    %724 = vmatprep.subr.bf16.mxu0 0
    %725 = vmatpush1.bf16.msra.mxu0 %v524
    %726 = vmatprep.subr.bf16.mxu0 0
    %727 = vmatpush1.bf16.msra.mxu0 %v525
    %728 = vmatprep.subr.bf16.mxu0 0
    %729 = vmatpush1.bf16.msra.mxu0 %v526
    %730 = vmatprep.subr.bf16.mxu0 0
    %731 = vmatpush1.bf16.msra.mxu0 %v527
    %732 = vmatprep.subr.bf16.mxu0 0
    %733 = vmatpush1.bf16.msra.mxu0 %v528
    %734 = vmatprep.subr.bf16.mxu0 0
    %735 = vmatpush1.bf16.msra.mxu0 %v529
    %736 = vmatprep.subr.bf16.mxu0 0
    %737 = vmatpush1.bf16.msra.mxu0 %v530
    %738 = vmatprep.subr.bf16.mxu0 0
    %739 = vmatpush1.bf16.msra.mxu0 %v531
    %740 = vmatprep.subr.bf16.mxu0 0
    %741 = vmatpush1.bf16.msra.mxu0 %v532
    %742 = vmatprep.subr.bf16.mxu0 0
    %743 = vmatpush1.bf16.msra.mxu0 %v533
    %744 = vmatprep.subr.bf16.mxu0 0
    %745 = vmatpush1.bf16.msra.mxu0 %v534
    %746 = vmatprep.subr.bf16.mxu0 0
    %747 = vmatpush1.bf16.msra.mxu0 %v535
    %748 = vmatprep.subr.bf16.mxu0 0
    %749 = vmatpush1.bf16.msra.mxu0 %v536
    %750 = vmatprep.subr.bf16.mxu0 0
    %751 = vmatpush1.bf16.msra.mxu0 %v537
    %752 = vmatprep.subr.bf16.mxu0 0
    %753 = vmatpush1.bf16.msra.mxu0 %v538
    %754 = vmatprep.subr.bf16.mxu0 0
    %755 = vmatpush1.bf16.msra.mxu0 %v539
    %756 = vmatprep.mubr.bf16.mxu0 %v211
    %757 = vmatmul.mubr.bf16.gmra.mrb[0].mxu0 %v210
    %v758 = vpop.f32.mrb[0].mxu0
    %v759 = vadd.f32 %v719, %v758
    %v760 = vpop.f32.mrb[0].mxu0
    %v761 = vpop.f32.mrb[0].mxu0
    %v762 = vpop.f32.mrb[0].mxu0
    %763 = vdwg.mxu0
    %v764 = vsub.f32 0.0, %v759
    %v765 = vmul.f32 %v764, 1.442695
    %v766 = vpow.pop %v765
    %v767 = vadd.f32 %v766, 1.0
    %v768 = vrcp.pop %v767
    %v769 = vmul.f32 1.0, %v768
    %770 = vst [vmem:[#allocation8] sm:$0xff] %v769
    // Predicated region
    $region26: #{discriminator_forward.15} parent=1 // pred_check
      _
    $region27: #{discriminator_forward.15} parent=1 // pred_check_branch
      %772 = sbr.rel (0) target = $region29
    $region28: #{discriminator_forward.15} parent=1 // pred_region
      %s774 = ssub.s32 128, 128
      %775 = vsyncadd [#allocation4], %s774
      %s777 = sshll.u32 [#allocation8], 4
      %s778 = int_to_ptr.vmem [resolvable:$true] %s777
      %780 = dma.vmem_to_hbm [thread:$0]  %s778, 128, %s3, [#allocation4]
    $region29: #{discriminator_forward.15} parent=1 // pred_fallthru
      _
    // Predicated region
    $region30: #{discriminator_forward.15} parent=1 // pred_check
      _
    $region31: #{discriminator_forward.15} parent=1 // pred_check_branch
      %782 = sbr.rel (0) target = $region33
    $region32: #{discriminator_forward.15} parent=1 // pred_region
      %783 = dma.done [#allocation4], 128
    $region33: #{discriminator_forward.15} parent=1 // pred_fallthru
      _
    %784 = vsyncpa [#allocation3], 1
    %785 = vsyncpa [#allocation6], 1
    %786 = vsyncpa [#allocation4], 1

</llo_original>
